<compile_context>
chip_gen: v6e
topology: v6e:2x2x1
jax: 0.10.0
libtpu: 0.0.40
codegen_flags: <defaults>
</compile_context>

<pallas_src>
import math
import jax
import jax.numpy as jnp
from jax.experimental import pallas as pl
from jax.experimental.pallas import tpu as pltpu


def _layernorm(x, w, b, eps=1e-5):
    mu = jnp.mean(x, axis=-1, keepdims=True)
    var = jnp.mean((x - mu) ** 2, axis=-1, keepdims=True)
    return (x - mu) * jax.lax.rsqrt(var + eps) * w + b


def _make_kernel(n0, n1, n_heads, head_dim, hidden):
    scale = 1.0 / math.sqrt(head_dim)
    m_rows = n0 * n1

    def kernel(src_ref,                    # (N0*N1, D_in)
               w_in_ref, b_in_ref,         # (D_in, H), (1, H)
               w_qkv_ref, b_qkv_ref,       # (H, 3H),  (1, 3H)
               wo_ref, bo_ref,             # (H, H),   (1, H)
               ln_ref,                     # (4, H): ln1_w, ln1_b, ln2_w, ln2_b
               w1_ref, b1_ref,             # (H, FF),  (1, FF)
               w2_ref, b2_ref,             # (FF, H),  (1, H)
               wro_ref, bro_ref,           # (H, O),   (1, O)
               out_ref):                   # (N1, O)
        x = src_ref[...]                                                  # (M, D_in)

        # input_reshape: Linear(D_in -> H), M = N0*N1 rows in one matmul.
        h = jnp.dot(x, w_in_ref[...],
                    preferred_element_type=jnp.float32) + b_in_ref[...]   # (M, H)

        # fused Q/K/V projection: one (M, H) x (H, 3H) matmul.
        qkv = jnp.dot(h, w_qkv_ref[...],
                      preferred_element_type=jnp.float32) + b_qkv_ref[...]  # (M, 3H)
        qkv3 = qkv.reshape(n0, n1, 3 * hidden)                            # (N0, N1, 3H)

        # --- multi-head self-attention, batched over N0 per head -------------
        head_outs = []
        for hh in range(n_heads):
            lo = hh * head_dim
            qh = qkv3[:, :, lo:lo + head_dim] * scale                     # (N0, N1, d)
            kh = qkv3[:, :, hidden + lo:hidden + lo + head_dim]
            vh = qkv3[:, :, 2 * hidden + lo:2 * hidden + lo + head_dim]
            s = jnp.einsum('bqd,bkd->bqk', qh, kh,
                           preferred_element_type=jnp.float32)            # (N0, N1, N1)
            s = s - jnp.max(s, axis=-1, keepdims=True)
            p = jnp.exp(s)
            denom = jnp.sum(p, axis=-1, keepdims=True)
            p = p * pl.reciprocal(denom, approx=True)
            head_outs.append(jnp.einsum('bqk,bkd->bqd', p, vh,
                                        preferred_element_type=jnp.float32))
        attn = jnp.concatenate(head_outs, axis=-1)                        # (N0, N1, H)
        attn = attn.reshape(m_rows, hidden)                               # (M, H)
        attn = jnp.dot(attn, wo_ref[...],
                       preferred_element_type=jnp.float32) + bo_ref[...]

        # post-norm encoder layer (norm_first=False); LN params loaded once.
        ln = ln_ref[...]                                                  # (4, H)
        y = _layernorm(h + attn, ln[0:1, :], ln[1:2, :])

        # feed-forward: Linear(H -> 4H) -> ReLU -> Linear(4H -> H)
        f = jnp.dot(y, w1_ref[...],
                    preferred_element_type=jnp.float32) + b1_ref[...]
        f = jnp.maximum(f, 0.0)
        f = jnp.dot(f, w2_ref[...],
                    preferred_element_type=jnp.float32) + b2_ref[...]
        z = _layernorm(y + f, ln[2:3, :], ln[3:4, :])                     # (M, H)

        # mean over dim 0 (N0): sublane-aligned row-block sum, no reshape.
        acc = z[0:n1, :]
        for b in range(1, n0):
            acc = acc + z[b * n1:(b + 1) * n1, :]
        mean = acc * (1.0 / n0)                                           # (N1, H)

        # readout: Linear(H -> O)
        out = jnp.dot(mean, wro_ref[...],
                      preferred_element_type=jnp.float32) + bro_ref[...]
        out_ref[...] = out                                                # (N1, O)

        # TODO(synk): src_mask / src_key_padding_mask (non-None), training-mode
        # dropout, and the mean_first=True branch are not implemented; this is
        # the eval, unmasked, mean_first=False path.

    return kernel


def transformer_encoder_only(src, tgt, params, *, n_heads):
    """Mirrors TransformerEncoderOnly.forward(src, tgt) (tgt unused on this path)."""
    del tgt  # CLASSIFICATION path only unsqueezes tgt; the decoder is never run.
    n0, n1, d_in = src.shape
    h = params["w_in"].shape[1]
    o = params["w_ro"].shape[1]
    head_dim = h // n_heads

    # wrapper-side packing (tiny one-time concatenates, outside the kernel)
    w_qkv = jnp.concatenate([params["wq"], params["wk"], params["wv"]], axis=1)   # (H, 3H)
    b_qkv = jnp.concatenate([params["bq"], params["bk"], params["bv"]], axis=1)   # (1, 3H)
    ln = jnp.concatenate([params["ln1_w"], params["ln1_b"],
                          params["ln2_w"], params["ln2_b"]], axis=0)              # (4, H)

    src2 = src.reshape(n0 * n1, d_in)   # fold N0 into the matmul rows

    inputs = [src2,
              params["w_in"], params["b_in"],
              w_qkv, b_qkv,
              params["wo"], params["bo"],
              ln,
              params["w1"], params["b1"], params["w2"], params["b2"],
              params["w_ro"], params["b_ro"]]

    out_nl = pl.pallas_call(
        _make_kernel(n0, n1, n_heads, head_dim, h),
        out_shape=jax.ShapeDtypeStruct((n1, o), jnp.float32),
        in_specs=[pl.BlockSpec(memory_space=pltpu.MemorySpace.VMEM)
                  for _ in range(len(inputs))],
        out_specs=pl.BlockSpec(memory_space=pltpu.MemorySpace.VMEM),
    )(*inputs)

    # glue: x.permute(1, 0) -> (output_size, N1)
    return out_nl.T


def init_params(key, d_in, h, ff, o):
    names_shapes = [
        ("w_in", (d_in, h)), ("b_in", (1, h)),
        ("wq", (h, h)), ("bq", (1, h)),
        ("wk", (h, h)), ("bk", (1, h)),
        ("wv", (h, h)), ("bv", (1, h)),
        ("wo", (h, h)), ("bo", (1, h)),
        ("w1", (h, ff)), ("b1", (1, ff)),
        ("w2", (ff, h)), ("b2", (1, h)),
        ("w_ro", (h, o)), ("b_ro", (1, o)),
    ]
    keys = jax.random.split(key, len(names_shapes))
    params = {n: 0.1 * jax.random.normal(k, s, jnp.float32)
              for (n, s), k in zip(names_shapes, keys)}
    params["ln1_w"] = jnp.ones((1, h), jnp.float32)
    params["ln1_b"] = jnp.zeros((1, h), jnp.float32)
    params["ln2_w"] = jnp.ones((1, h), jnp.float32)
    params["ln2_b"] = jnp.zeros((1, h), jnp.float32)
    return params


def reference_forward(src, params, *, n_heads):
    """Pure-JAX reference replicating the same eval-mode forward."""
    h_dim = params["w_in"].shape[1]
    head_dim = h_dim // n_heads
    scale = 1.0 / math.sqrt(head_dim)

    def per_slice(x):                                                    # (N1, D_in)
        hx = x @ params["w_in"] + params["b_in"]
        q = hx @ params["wq"] + params["bq"]
        k = hx @ params["wk"] + params["bk"]
        v = hx @ params["wv"] + params["bv"]
        outs = []
        for hh in range(n_heads):
            sl = slice(hh * head_dim, (hh + 1) * head_dim)
            s = (q[:, sl] * scale) @ k[:, sl].T
            p = jax.nn.softmax(s, axis=-1)
            outs.append(p @ v[:, sl])
        attn = jnp.concatenate(outs, axis=-1) @ params["wo"] + params["bo"]
        y = _layernorm(hx + attn, params["ln1_w"], params["ln1_b"])
        f = jnp.maximum(y @ params["w1"] + params["b1"], 0.0)
        f = f @ params["w2"] + params["b2"]
        return _layernorm(y + f, params["ln2_w"], params["ln2_b"])

    enc = jax.vmap(per_slice)(src)                                       # (N0, N1, H)
    mean = jnp.mean(enc, axis=0)                                         # (N1, H)
    out = mean @ params["w_ro"] + params["b_ro"]                         # (N1, O)
    return out.T                                                         # (O, N1)


if __name__ == "__main__":
    # small shapes consistent with the module: input_size=32, hidden_size=32,
    # n_heads=4 (head_dim=8), output_size=2, src is (N0=4, N1=8, 32).
    N0, N1, D_IN, H, NH, O = 4, 8, 32, 32, 4, 2
    FF = 4 * H

    key = jax.random.PRNGKey(0)
    k_src, k_tgt, k_par = jax.random.split(key, 3)
    src = jax.random.normal(k_src, (N0, N1, D_IN), jnp.float32)
    tgt = jax.random.randint(k_tgt, (N1,), 0, O)  # unused (CLASSIFICATION path)
    params = init_params(k_par, D_IN, H, FF, O)

    out = transformer_encoder_only(src, tgt, params, n_heads=NH)
    out = jax.block_until_ready(out)

    ref = reference_forward(src, params, n_heads=NH)
    assert out.shape == (O, N1), out.shape
    max_err = float(jnp.max(jnp.abs(out - ref)))
    assert jnp.allclose(out, ref, atol=2e-2, rtol=2e-2), f"max_err={max_err}"
    print("KERNEL_OK")
</pallas_src>

<mosaic_0001>
module attributes {stable_mosaic.version = 11 : i64} {
  func.func @kernel(%arg0: memref<32x32xf32, #tpu.memory_space<vmem>>, %arg1: memref<32x32xf32, #tpu.memory_space<vmem>>, %arg2: memref<1x32xf32, #tpu.memory_space<vmem>>, %arg3: memref<32x96xf32, #tpu.memory_space<vmem>>, %arg4: memref<1x96xf32, #tpu.memory_space<vmem>>, %arg5: memref<32x32xf32, #tpu.memory_space<vmem>>, %arg6: memref<1x32xf32, #tpu.memory_space<vmem>>, %arg7: memref<4x32xf32, #tpu.memory_space<vmem>>, %arg8: memref<32x128xf32, #tpu.memory_space<vmem>>, %arg9: memref<1x128xf32, #tpu.memory_space<vmem>>, %arg10: memref<128x32xf32, #tpu.memory_space<vmem>>, %arg11: memref<1x32xf32, #tpu.memory_space<vmem>>, %arg12: memref<32x2xf32, #tpu.memory_space<vmem>>, %arg13: memref<1x2xf32, #tpu.memory_space<vmem>>, %arg14: memref<8x2xf32, #tpu.memory_space<vmem>>) attributes {dimension_semantics = [], scalar_prefetch = 0 : i64, scratch_operands = 0 : i64, tpu.core_type = #tpu.core_type<tc>} {
    %c0 = arith.constant 0 : index
    %c0_0 = arith.constant 0 : index
    %0 = vector.load %arg0[%c0, %c0_0] : memref<32x32xf32, #tpu.memory_space<vmem>>, vector<32x32xf32>
    %c0_1 = arith.constant 0 : index
    %c0_2 = arith.constant 0 : index
    %1 = vector.load %arg1[%c0_1, %c0_2] : memref<32x32xf32, #tpu.memory_space<vmem>>, vector<32x32xf32>
    %cst = arith.constant dense<0.000000e+00> : vector<32x32xf32>
    %2 = tpu.matmul %0, %1, %cst {dimension_numbers = #tpu.dot_dimension_numbers<[1], [0], [0], [1], [0, 0, 1, 1], [], []>} : vector<32x32xf32>, vector<32x32xf32>, vector<32x32xf32> -> vector<32x32xf32>
    %c0_3 = arith.constant 0 : index
    %c0_4 = arith.constant 0 : index
    %3 = vector.load %arg2[%c0_3, %c0_4] : memref<1x32xf32, #tpu.memory_space<vmem>>, vector<1x32xf32>
    %4 = vector.broadcast %3 : vector<1x32xf32> to vector<32x32xf32>
    %5 = arith.addf %2, %4 : vector<32x32xf32>
    %c0_5 = arith.constant 0 : index
    %c0_6 = arith.constant 0 : index
    %6 = vector.load %arg3[%c0_5, %c0_6] : memref<32x96xf32, #tpu.memory_space<vmem>>, vector<32x96xf32>
    %cst_7 = arith.constant dense<0.000000e+00> : vector<32x96xf32>
    %7 = tpu.matmul %5, %6, %cst_7 {dimension_numbers = #tpu.dot_dimension_numbers<[1], [0], [0], [1], [0, 0, 1, 1], [], []>} : vector<32x32xf32>, vector<32x96xf32>, vector<32x96xf32> -> vector<32x96xf32>
    %c0_8 = arith.constant 0 : index
    %c0_9 = arith.constant 0 : index
    %8 = vector.load %arg4[%c0_8, %c0_9] : memref<1x96xf32, #tpu.memory_space<vmem>>, vector<1x96xf32>
    %9 = vector.broadcast %8 : vector<1x96xf32> to vector<32x96xf32>
    %10 = arith.addf %7, %9 : vector<32x96xf32>
    %11 = vector.shape_cast %10 : vector<32x96xf32> to vector<4x8x96xf32>
    %12 = vector.extract_strided_slice %11 {offsets = [0, 0, 0], sizes = [4, 8, 8], strides = [1, 1, 1]} : vector<4x8x96xf32> to vector<4x8x8xf32>
    %cst_10 = arith.constant 0.353553385 : f32
    %13 = vector.broadcast %cst_10 : f32 to vector<4x8x8xf32>
    %14 = arith.mulf %12, %13 : vector<4x8x8xf32>
    %15 = vector.extract_strided_slice %11 {offsets = [0, 0, 32], sizes = [4, 8, 8], strides = [1, 1, 1]} : vector<4x8x96xf32> to vector<4x8x8xf32>
    %16 = vector.extract_strided_slice %11 {offsets = [0, 0, 64], sizes = [4, 8, 8], strides = [1, 1, 1]} : vector<4x8x96xf32> to vector<4x8x8xf32>
    "tpu.trace_start"() <{level = 10 : i32, message = "bqd,bkd->bqk"}> : () -> ()
    %cst_11 = arith.constant dense<0.000000e+00> : vector<4x8x8xf32>
    %17 = tpu.matmul %14, %15, %cst_11 {dimension_numbers = #tpu.dot_dimension_numbers<[2], [2], [1], [1], [0, 0, 0, 1, 1, 1], [0], [0]>} : vector<4x8x8xf32>, vector<4x8x8xf32>, vector<4x8x8xf32> -> vector<4x8x8xf32>
    "tpu.trace_stop"() : () -> ()
    %cst_12 = arith.constant dense<0xFF800000> : vector<4x8xf32>
    %18 = vector.multi_reduction <maximumf>, %17, %cst_12 [2] : vector<4x8x8xf32> to vector<4x8xf32>
    %19 = vector.shape_cast %18 : vector<4x8xf32> to vector<4x8x1xf32>
    %20 = vector.broadcast %19 : vector<4x8x1xf32> to vector<4x8x8xf32>
    %21 = arith.subf %17, %20 : vector<4x8x8xf32>
    %22 = math.exp %21 : vector<4x8x8xf32>
    %cst_13 = arith.constant dense<0.000000e+00> : vector<4x8xf32>
    %23 = vector.multi_reduction <add>, %22, %cst_13 [2] : vector<4x8x8xf32> to vector<4x8xf32>
    %24 = vector.shape_cast %23 : vector<4x8xf32> to vector<4x8x1xf32>
    %25 = tpu.reciprocal %24 {approx = true} : vector<4x8x1xf32> -> vector<4x8x1xf32>
    %26 = vector.broadcast %25 : vector<4x8x1xf32> to vector<4x8x8xf32>
    %27 = arith.mulf %22, %26 : vector<4x8x8xf32>
    "tpu.trace_start"() <{level = 10 : i32, message = "bqk,bkd->bqd"}> : () -> ()
    %cst_14 = arith.constant dense<0.000000e+00> : vector<4x8x8xf32>
    %28 = tpu.matmul %27, %16, %cst_14 {dimension_numbers = #tpu.dot_dimension_numbers<[2], [1], [1], [2], [0, 0, 0, 1, 1, 2], [0], [0]>} : vector<4x8x8xf32>, vector<4x8x8xf32>, vector<4x8x8xf32> -> vector<4x8x8xf32>
    "tpu.trace_stop"() : () -> ()
    %29 = vector.extract_strided_slice %11 {offsets = [0, 0, 8], sizes = [4, 8, 8], strides = [1, 1, 1]} : vector<4x8x96xf32> to vector<4x8x8xf32>
    %cst_15 = arith.constant 0.353553385 : f32
    %30 = vector.broadcast %cst_15 : f32 to vector<4x8x8xf32>
    %31 = arith.mulf %29, %30 : vector<4x8x8xf32>
    %32 = vector.extract_strided_slice %11 {offsets = [0, 0, 40], sizes = [4, 8, 8], strides = [1, 1, 1]} : vector<4x8x96xf32> to vector<4x8x8xf32>
    %33 = vector.extract_strided_slice %11 {offsets = [0, 0, 72], sizes = [4, 8, 8], strides = [1, 1, 1]} : vector<4x8x96xf32> to vector<4x8x8xf32>
    "tpu.trace_start"() <{level = 10 : i32, message = "bqd,bkd->bqk"}> : () -> ()
    %cst_16 = arith.constant dense<0.000000e+00> : vector<4x8x8xf32>
    %34 = tpu.matmul %31, %32, %cst_16 {dimension_numbers = #tpu.dot_dimension_numbers<[2], [2], [1], [1], [0, 0, 0, 1, 1, 1], [0], [0]>} : vector<4x8x8xf32>, vector<4x8x8xf32>, vector<4x8x8xf32> -> vector<4x8x8xf32>
    "tpu.trace_stop"() : () -> ()
    %cst_17 = arith.constant dense<0xFF800000> : vector<4x8xf32>
    %35 = vector.multi_reduction <maximumf>, %34, %cst_17 [2] : vector<4x8x8xf32> to vector<4x8xf32>
    %36 = vector.shape_cast %35 : vector<4x8xf32> to vector<4x8x1xf32>
    %37 = vector.broadcast %36 : vector<4x8x1xf32> to vector<4x8x8xf32>
    %38 = arith.subf %34, %37 : vector<4x8x8xf32>
    %39 = math.exp %38 : vector<4x8x8xf32>
    %cst_18 = arith.constant dense<0.000000e+00> : vector<4x8xf32>
    %40 = vector.multi_reduction <add>, %39, %cst_18 [2] : vector<4x8x8xf32> to vector<4x8xf32>
    %41 = vector.shape_cast %40 : vector<4x8xf32> to vector<4x8x1xf32>
    %42 = tpu.reciprocal %41 {approx = true} : vector<4x8x1xf32> -> vector<4x8x1xf32>
    %43 = vector.broadcast %42 : vector<4x8x1xf32> to vector<4x8x8xf32>
    %44 = arith.mulf %39, %43 : vector<4x8x8xf32>
    "tpu.trace_start"() <{level = 10 : i32, message = "bqk,bkd->bqd"}> : () -> ()
    %cst_19 = arith.constant dense<0.000000e+00> : vector<4x8x8xf32>
    %45 = tpu.matmul %44, %33, %cst_19 {dimension_numbers = #tpu.dot_dimension_numbers<[2], [1], [1], [2], [0, 0, 0, 1, 1, 2], [0], [0]>} : vector<4x8x8xf32>, vector<4x8x8xf32>, vector<4x8x8xf32> -> vector<4x8x8xf32>
    "tpu.trace_stop"() : () -> ()
    %46 = vector.extract_strided_slice %11 {offsets = [0, 0, 16], sizes = [4, 8, 8], strides = [1, 1, 1]} : vector<4x8x96xf32> to vector<4x8x8xf32>
    %cst_20 = arith.constant 0.353553385 : f32
    %47 = vector.broadcast %cst_20 : f32 to vector<4x8x8xf32>
    %48 = arith.mulf %46, %47 : vector<4x8x8xf32>
    %49 = vector.extract_strided_slice %11 {offsets = [0, 0, 48], sizes = [4, 8, 8], strides = [1, 1, 1]} : vector<4x8x96xf32> to vector<4x8x8xf32>
    %50 = vector.extract_strided_slice %11 {offsets = [0, 0, 80], sizes = [4, 8, 8], strides = [1, 1, 1]} : vector<4x8x96xf32> to vector<4x8x8xf32>
    "tpu.trace_start"() <{level = 10 : i32, message = "bqd,bkd->bqk"}> : () -> ()
    %cst_21 = arith.constant dense<0.000000e+00> : vector<4x8x8xf32>
    %51 = tpu.matmul %48, %49, %cst_21 {dimension_numbers = #tpu.dot_dimension_numbers<[2], [2], [1], [1], [0, 0, 0, 1, 1, 1], [0], [0]>} : vector<4x8x8xf32>, vector<4x8x8xf32>, vector<4x8x8xf32> -> vector<4x8x8xf32>
    "tpu.trace_stop"() : () -> ()
    %cst_22 = arith.constant dense<0xFF800000> : vector<4x8xf32>
    %52 = vector.multi_reduction <maximumf>, %51, %cst_22 [2] : vector<4x8x8xf32> to vector<4x8xf32>
    %53 = vector.shape_cast %52 : vector<4x8xf32> to vector<4x8x1xf32>
    %54 = vector.broadcast %53 : vector<4x8x1xf32> to vector<4x8x8xf32>
    %55 = arith.subf %51, %54 : vector<4x8x8xf32>
    %56 = math.exp %55 : vector<4x8x8xf32>
    %cst_23 = arith.constant dense<0.000000e+00> : vector<4x8xf32>
    %57 = vector.multi_reduction <add>, %56, %cst_23 [2] : vector<4x8x8xf32> to vector<4x8xf32>
    %58 = vector.shape_cast %57 : vector<4x8xf32> to vector<4x8x1xf32>
    %59 = tpu.reciprocal %58 {approx = true} : vector<4x8x1xf32> -> vector<4x8x1xf32>
    %60 = vector.broadcast %59 : vector<4x8x1xf32> to vector<4x8x8xf32>
    %61 = arith.mulf %56, %60 : vector<4x8x8xf32>
    "tpu.trace_start"() <{level = 10 : i32, message = "bqk,bkd->bqd"}> : () -> ()
    %cst_24 = arith.constant dense<0.000000e+00> : vector<4x8x8xf32>
    %62 = tpu.matmul %61, %50, %cst_24 {dimension_numbers = #tpu.dot_dimension_numbers<[2], [1], [1], [2], [0, 0, 0, 1, 1, 2], [0], [0]>} : vector<4x8x8xf32>, vector<4x8x8xf32>, vector<4x8x8xf32> -> vector<4x8x8xf32>
    "tpu.trace_stop"() : () -> ()
    %63 = vector.extract_strided_slice %11 {offsets = [0, 0, 24], sizes = [4, 8, 8], strides = [1, 1, 1]} : vector<4x8x96xf32> to vector<4x8x8xf32>
    %cst_25 = arith.constant 0.353553385 : f32
    %64 = vector.broadcast %cst_25 : f32 to vector<4x8x8xf32>
    %65 = arith.mulf %63, %64 : vector<4x8x8xf32>
    %66 = vector.extract_strided_slice %11 {offsets = [0, 0, 56], sizes = [4, 8, 8], strides = [1, 1, 1]} : vector<4x8x96xf32> to vector<4x8x8xf32>
    %67 = vector.extract_strided_slice %11 {offsets = [0, 0, 88], sizes = [4, 8, 8], strides = [1, 1, 1]} : vector<4x8x96xf32> to vector<4x8x8xf32>
    "tpu.trace_start"() <{level = 10 : i32, message = "bqd,bkd->bqk"}> : () -> ()
    %cst_26 = arith.constant dense<0.000000e+00> : vector<4x8x8xf32>
    %68 = tpu.matmul %65, %66, %cst_26 {dimension_numbers = #tpu.dot_dimension_numbers<[2], [2], [1], [1], [0, 0, 0, 1, 1, 1], [0], [0]>} : vector<4x8x8xf32>, vector<4x8x8xf32>, vector<4x8x8xf32> -> vector<4x8x8xf32>
    "tpu.trace_stop"() : () -> ()
    %cst_27 = arith.constant dense<0xFF800000> : vector<4x8xf32>
    %69 = vector.multi_reduction <maximumf>, %68, %cst_27 [2] : vector<4x8x8xf32> to vector<4x8xf32>
    %70 = vector.shape_cast %69 : vector<4x8xf32> to vector<4x8x1xf32>
    %71 = vector.broadcast %70 : vector<4x8x1xf32> to vector<4x8x8xf32>
    %72 = arith.subf %68, %71 : vector<4x8x8xf32>
    %73 = math.exp %72 : vector<4x8x8xf32>
    %cst_28 = arith.constant dense<0.000000e+00> : vector<4x8xf32>
    %74 = vector.multi_reduction <add>, %73, %cst_28 [2] : vector<4x8x8xf32> to vector<4x8xf32>
    %75 = vector.shape_cast %74 : vector<4x8xf32> to vector<4x8x1xf32>
    %76 = tpu.reciprocal %75 {approx = true} : vector<4x8x1xf32> -> vector<4x8x1xf32>
    %77 = vector.broadcast %76 : vector<4x8x1xf32> to vector<4x8x8xf32>
    %78 = arith.mulf %73, %77 : vector<4x8x8xf32>
    "tpu.trace_start"() <{level = 10 : i32, message = "bqk,bkd->bqd"}> : () -> ()
    %cst_29 = arith.constant dense<0.000000e+00> : vector<4x8x8xf32>
    %79 = tpu.matmul %78, %67, %cst_29 {dimension_numbers = #tpu.dot_dimension_numbers<[2], [1], [1], [2], [0, 0, 0, 1, 1, 2], [0], [0]>} : vector<4x8x8xf32>, vector<4x8x8xf32>, vector<4x8x8xf32> -> vector<4x8x8xf32>
    "tpu.trace_stop"() : () -> ()
    %80 = tpu.concatenate %28, %45, %62, %79 in 2 : vector<4x8x8xf32>, vector<4x8x8xf32>, vector<4x8x8xf32>, vector<4x8x8xf32> -> vector<4x8x32xf32>
    %81 = vector.shape_cast %80 : vector<4x8x32xf32> to vector<32x32xf32>
    %c0_30 = arith.constant 0 : index
    %c0_31 = arith.constant 0 : index
    %82 = vector.load %arg5[%c0_30, %c0_31] : memref<32x32xf32, #tpu.memory_space<vmem>>, vector<32x32xf32>
    %cst_32 = arith.constant dense<0.000000e+00> : vector<32x32xf32>
    %83 = tpu.matmul %81, %82, %cst_32 {dimension_numbers = #tpu.dot_dimension_numbers<[1], [0], [0], [1], [0, 0, 1, 1], [], []>} : vector<32x32xf32>, vector<32x32xf32>, vector<32x32xf32> -> vector<32x32xf32>
    %c0_33 = arith.constant 0 : index
    %c0_34 = arith.constant 0 : index
    %84 = vector.load %arg6[%c0_33, %c0_34] : memref<1x32xf32, #tpu.memory_space<vmem>>, vector<1x32xf32>
    %85 = vector.broadcast %84 : vector<1x32xf32> to vector<32x32xf32>
    %86 = arith.addf %83, %85 : vector<32x32xf32>
    %c0_35 = arith.constant 0 : index
    %c0_36 = arith.constant 0 : index
    %87 = vector.load %arg7[%c0_35, %c0_36] : memref<4x32xf32, #tpu.memory_space<vmem>>, vector<4x32xf32>
    %88 = arith.addf %5, %86 : vector<32x32xf32>
    %89 = vector.extract_strided_slice %87 {offsets = [0, 0], sizes = [1, 32], strides = [1, 1]} : vector<4x32xf32> to vector<1x32xf32>
    %90 = vector.extract_strided_slice %87 {offsets = [1, 0], sizes = [1, 32], strides = [1, 1]} : vector<4x32xf32> to vector<1x32xf32>
    %cst_37 = arith.constant dense<0.000000e+00> : vector<32xf32>
    %91 = vector.multi_reduction <add>, %88, %cst_37 [1] : vector<32x32xf32> to vector<32xf32>
    %92 = vector.shape_cast %91 : vector<32xf32> to vector<32x1xf32>
    %cst_38 = arith.constant 3.200000e+01 : f32
    %93 = vector.broadcast %cst_38 : f32 to vector<32x1xf32>
    %94 = arith.divf %92, %93 : vector<32x1xf32>
    %95 = vector.broadcast %94 : vector<32x1xf32> to vector<32x32xf32>
    %96 = arith.subf %88, %95 : vector<32x32xf32>
    %97 = arith.mulf %96, %96 : vector<32x32xf32>
    %cst_39 = arith.constant dense<0.000000e+00> : vector<32xf32>
    %98 = vector.multi_reduction <add>, %97, %cst_39 [1] : vector<32x32xf32> to vector<32xf32>
    %99 = vector.shape_cast %98 : vector<32xf32> to vector<32x1xf32>
    %cst_40 = arith.constant 3.200000e+01 : f32
    %100 = vector.broadcast %cst_40 : f32 to vector<32x1xf32>
    %101 = arith.divf %99, %100 : vector<32x1xf32>
    %102 = vector.broadcast %94 : vector<32x1xf32> to vector<32x32xf32>
    %103 = arith.subf %88, %102 : vector<32x32xf32>
    %cst_41 = arith.constant 9.99999974E-6 : f32
    %104 = vector.broadcast %cst_41 : f32 to vector<32x1xf32>
    %105 = arith.addf %101, %104 : vector<32x1xf32>
    %106 = math.rsqrt %105 : vector<32x1xf32>
    %107 = vector.broadcast %106 : vector<32x1xf32> to vector<32x32xf32>
    %108 = arith.mulf %103, %107 : vector<32x32xf32>
    %109 = vector.broadcast %89 : vector<1x32xf32> to vector<32x32xf32>
    %110 = arith.mulf %108, %109 : vector<32x32xf32>
    %111 = vector.broadcast %90 : vector<1x32xf32> to vector<32x32xf32>
    %112 = arith.addf %110, %111 : vector<32x32xf32>
    %c0_42 = arith.constant 0 : index
    %c0_43 = arith.constant 0 : index
    %113 = vector.load %arg8[%c0_42, %c0_43] : memref<32x128xf32, #tpu.memory_space<vmem>>, vector<32x128xf32>
    %cst_44 = arith.constant dense<0.000000e+00> : vector<32x128xf32>
    %114 = tpu.matmul %112, %113, %cst_44 {dimension_numbers = #tpu.dot_dimension_numbers<[1], [0], [0], [1], [0, 0, 1, 1], [], []>} : vector<32x32xf32>, vector<32x128xf32>, vector<32x128xf32> -> vector<32x128xf32>
    %c0_45 = arith.constant 0 : index
    %c0_46 = arith.constant 0 : index
    %115 = vector.load %arg9[%c0_45, %c0_46] : memref<1x128xf32, #tpu.memory_space<vmem>>, vector<1x128xf32>
    %116 = vector.broadcast %115 : vector<1x128xf32> to vector<32x128xf32>
    %117 = arith.addf %114, %116 : vector<32x128xf32>
    %cst_47 = arith.constant 0.000000e+00 : f32
    %118 = vector.broadcast %cst_47 : f32 to vector<32x128xf32>
    %119 = arith.maximumf %117, %118 : vector<32x128xf32>
    %c0_48 = arith.constant 0 : index
    %c0_49 = arith.constant 0 : index
    %120 = vector.load %arg10[%c0_48, %c0_49] : memref<128x32xf32, #tpu.memory_space<vmem>>, vector<128x32xf32>
    %cst_50 = arith.constant dense<0.000000e+00> : vector<32x32xf32>
    %121 = tpu.matmul %119, %120, %cst_50 {dimension_numbers = #tpu.dot_dimension_numbers<[1], [0], [0], [1], [0, 0, 1, 1], [], []>} : vector<32x128xf32>, vector<128x32xf32>, vector<32x32xf32> -> vector<32x32xf32>
    %c0_51 = arith.constant 0 : index
    %c0_52 = arith.constant 0 : index
    %122 = vector.load %arg11[%c0_51, %c0_52] : memref<1x32xf32, #tpu.memory_space<vmem>>, vector<1x32xf32>
    %123 = vector.broadcast %122 : vector<1x32xf32> to vector<32x32xf32>
    %124 = arith.addf %121, %123 : vector<32x32xf32>
    %125 = arith.addf %112, %124 : vector<32x32xf32>
    %126 = vector.extract_strided_slice %87 {offsets = [2, 0], sizes = [1, 32], strides = [1, 1]} : vector<4x32xf32> to vector<1x32xf32>
    %127 = vector.extract_strided_slice %87 {offsets = [3, 0], sizes = [1, 32], strides = [1, 1]} : vector<4x32xf32> to vector<1x32xf32>
    %cst_53 = arith.constant dense<0.000000e+00> : vector<32xf32>
    %128 = vector.multi_reduction <add>, %125, %cst_53 [1] : vector<32x32xf32> to vector<32xf32>
    %129 = vector.shape_cast %128 : vector<32xf32> to vector<32x1xf32>
    %cst_54 = arith.constant 3.200000e+01 : f32
    %130 = vector.broadcast %cst_54 : f32 to vector<32x1xf32>
    %131 = arith.divf %129, %130 : vector<32x1xf32>
    %132 = vector.broadcast %131 : vector<32x1xf32> to vector<32x32xf32>
    %133 = arith.subf %125, %132 : vector<32x32xf32>
    %134 = arith.mulf %133, %133 : vector<32x32xf32>
    %cst_55 = arith.constant dense<0.000000e+00> : vector<32xf32>
    %135 = vector.multi_reduction <add>, %134, %cst_55 [1] : vector<32x32xf32> to vector<32xf32>
    %136 = vector.shape_cast %135 : vector<32xf32> to vector<32x1xf32>
    %cst_56 = arith.constant 3.200000e+01 : f32
    %137 = vector.broadcast %cst_56 : f32 to vector<32x1xf32>
    %138 = arith.divf %136, %137 : vector<32x1xf32>
    %139 = vector.broadcast %131 : vector<32x1xf32> to vector<32x32xf32>
    %140 = arith.subf %125, %139 : vector<32x32xf32>
    %cst_57 = arith.constant 9.99999974E-6 : f32
    %141 = vector.broadcast %cst_57 : f32 to vector<32x1xf32>
    %142 = arith.addf %138, %141 : vector<32x1xf32>
    %143 = math.rsqrt %142 : vector<32x1xf32>
    %144 = vector.broadcast %143 : vector<32x1xf32> to vector<32x32xf32>
    %145 = arith.mulf %140, %144 : vector<32x32xf32>
    %146 = vector.broadcast %126 : vector<1x32xf32> to vector<32x32xf32>
    %147 = arith.mulf %145, %146 : vector<32x32xf32>
    %148 = vector.broadcast %127 : vector<1x32xf32> to vector<32x32xf32>
    %149 = arith.addf %147, %148 : vector<32x32xf32>
    %150 = vector.extract_strided_slice %149 {offsets = [0, 0], sizes = [8, 32], strides = [1, 1]} : vector<32x32xf32> to vector<8x32xf32>
    %151 = vector.extract_strided_slice %149 {offsets = [8, 0], sizes = [8, 32], strides = [1, 1]} : vector<32x32xf32> to vector<8x32xf32>
    %152 = arith.addf %150, %151 : vector<8x32xf32>
    %153 = vector.extract_strided_slice %149 {offsets = [16, 0], sizes = [8, 32], strides = [1, 1]} : vector<32x32xf32> to vector<8x32xf32>
    %154 = arith.addf %152, %153 : vector<8x32xf32>
    %155 = vector.extract_strided_slice %149 {offsets = [24, 0], sizes = [8, 32], strides = [1, 1]} : vector<32x32xf32> to vector<8x32xf32>
    %156 = arith.addf %154, %155 : vector<8x32xf32>
    %cst_58 = arith.constant 2.500000e-01 : f32
    %157 = vector.broadcast %cst_58 : f32 to vector<8x32xf32>
    %158 = arith.mulf %156, %157 : vector<8x32xf32>
    %c0_59 = arith.constant 0 : index
    %c0_60 = arith.constant 0 : index
    %159 = vector.load %arg12[%c0_59, %c0_60] : memref<32x2xf32, #tpu.memory_space<vmem>>, vector<32x2xf32>
    %cst_61 = arith.constant dense<0.000000e+00> : vector<8x2xf32>
    %160 = tpu.matmul %158, %159, %cst_61 {dimension_numbers = #tpu.dot_dimension_numbers<[1], [0], [0], [1], [0, 0, 1, 1], [], []>} : vector<8x32xf32>, vector<32x2xf32>, vector<8x2xf32> -> vector<8x2xf32>
    %c0_62 = arith.constant 0 : index
    %c0_63 = arith.constant 0 : index
    %161 = vector.load %arg13[%c0_62, %c0_63] : memref<1x2xf32, #tpu.memory_space<vmem>>, vector<1x2xf32>
    %162 = vector.broadcast %161 : vector<1x2xf32> to vector<8x2xf32>
    %163 = arith.addf %160, %162 : vector<8x2xf32>
    %c0_64 = arith.constant 0 : index
    %c0_65 = arith.constant 0 : index
    %164 = vector.load %arg14[%c0_64, %c0_65] : memref<8x2xf32, #tpu.memory_space<vmem>>, vector<8x2xf32>
    tpu.vector_store %arg14[%c0_64, %c0_65], %163 {strides = array<i32>} : memref<8x2xf32, #tpu.memory_space<vmem>>, vector<8x2xf32>,
    return
  }
}

</mosaic_0001>

<llo_original>
// kernel: tpu_custom_call.1
$region0: #{tpu_custom_call.1}
  #allocation0 [shape = 'u32[]', space=smem, size = 0x4, offset = 0x4, fixed_abs, tag = 'smem constant byte address 0x4 - core index']
  #allocation1 [shape = 'u32[144,128]{1,0:T(1,128)}', space=vmem, size = 0x12000, scoped, tag = 'internal scratch']
  %s0 = inlined_call_operand.vmem [shape: f32[32,32], index: 0, kind: input, shape index: {}]
  %s1 = inlined_call_operand.vmem [shape: f32[32,32], index: 1, kind: input, shape index: {}]
  %s2 = inlined_call_operand.vmem [shape: f32[1,32], index: 2, kind: input, shape index: {}]
  %s3 = inlined_call_operand.vmem [shape: f32[32,96], index: 3, kind: input, shape index: {}]
  %s4 = inlined_call_operand.vmem [shape: f32[1,96], index: 4, kind: input, shape index: {}]
  %s5 = inlined_call_operand.vmem [shape: f32[32,32], index: 5, kind: input, shape index: {}]
  %s6 = inlined_call_operand.vmem [shape: f32[1,32], index: 6, kind: input, shape index: {}]
  %s7 = inlined_call_operand.vmem [shape: f32[4,32], index: 7, kind: input, shape index: {}]
  %s8 = inlined_call_operand.vmem [shape: f32[32,128], index: 8, kind: input, shape index: {}]
  %s9 = inlined_call_operand.vmem [shape: f32[1,128], index: 9, kind: input, shape index: {}]
  %s10 = inlined_call_operand.vmem [shape: f32[128,32], index: 10, kind: input, shape index: {}]
  %s11 = inlined_call_operand.vmem [shape: f32[1,32], index: 11, kind: input, shape index: {}]
  %s12 = inlined_call_operand.vmem [shape: f32[32,2], index: 12, kind: input, shape index: {}]
  %s13 = inlined_call_operand.vmem [shape: f32[1,2], index: 13, kind: input, shape index: {}]
  %s14 = inlined_call_operand.vmem [shape: f32[8,2], index: 14, kind: output, shape index: {}]
  %s15 = sld [smem:[#allocation0]]
  $region66: #{tpu_custom_call.1} parent=0
    _
  %s17 = ssub.s32 1, %s15
  %s18 = scalar_select 0, %s17, %s15
  // Predicated region
  $region2: #{tpu_custom_call.1} parent=0 // pred_check
    _
  $region3: #{tpu_custom_call.1} parent=0 // pred_check_branch
    %20 = sbr.rel (0) target = $region5
  $region4: #{tpu_custom_call.1} parent=0 // pred_region
    _
  $region5: #{tpu_custom_call.1} parent=0 // pred_fallthru
    _
  // Predicated region
  $region6: #{tpu_custom_call.1} parent=0 // pred_check
    _
  $region7: #{tpu_custom_call.1} parent=0 // pred_check_branch
    %22 = sbr.rel (0) target = $region9
  $region8: #{tpu_custom_call.1} parent=0 // pred_region
    _
  $region9: #{tpu_custom_call.1} parent=0 // pred_fallthru
    _
  // Predicated region
  $region10: #{tpu_custom_call.1} parent=0 // pred_check
    _
  $region11: #{tpu_custom_call.1} parent=0 // pred_check_branch
    %24 = sbr.rel (0) target = $region13
  $region12: #{tpu_custom_call.1} parent=0 // pred_region
    _
  $region13: #{tpu_custom_call.1} parent=0 // pred_fallthru
    _
  // Predicated region
  $region14: #{tpu_custom_call.1} parent=0 // pred_check
    _
  $region15: #{tpu_custom_call.1} parent=0 // pred_check_branch
    %26 = sbr.rel (0) target = $region17
  $region16: #{tpu_custom_call.1} parent=0 // pred_region
    _
  $region17: #{tpu_custom_call.1} parent=0 // pred_fallthru
    _
  // Predicated region
  $region18: #{tpu_custom_call.1} parent=0 // pred_check
    _
  $region19: #{tpu_custom_call.1} parent=0 // pred_check_branch
    %28 = sbr.rel (0) target = $region21
  $region20: #{tpu_custom_call.1} parent=0 // pred_region
    _
  $region21: #{tpu_custom_call.1} parent=0 // pred_fallthru
    _
  // Predicated region
  $region22: #{tpu_custom_call.1} parent=0 // pred_check
    _
  $region23: #{tpu_custom_call.1} parent=0 // pred_check_branch
    %30 = sbr.rel (0) target = $region25
  $region24: #{tpu_custom_call.1} parent=0 // pred_region
    _
  $region25: #{tpu_custom_call.1} parent=0 // pred_fallthru
    _
  // Predicated region
  $region26: #{tpu_custom_call.1} parent=0 // pred_check
    _
  $region27: #{tpu_custom_call.1} parent=0 // pred_check_branch
    %32 = sbr.rel (0) target = $region29
  $region28: #{tpu_custom_call.1} parent=0 // pred_region
    _
  $region29: #{tpu_custom_call.1} parent=0 // pred_fallthru
    _
  // Predicated region
  $region30: #{tpu_custom_call.1} parent=0 // pred_check
    _
  $region31: #{tpu_custom_call.1} parent=0 // pred_check_branch
    %34 = sbr.rel (0) target = $region33
  $region32: #{tpu_custom_call.1} parent=0 // pred_region
    _
  $region33: #{tpu_custom_call.1} parent=0 // pred_fallthru
    _
  // Predicated region
  $region34: #{tpu_custom_call.1} parent=0 // pred_check
    _
  $region35: #{tpu_custom_call.1} parent=0 // pred_check_branch
    %36 = sbr.rel (0) target = $region37
  $region36: #{tpu_custom_call.1} parent=0 // pred_region
    _
  $region37: #{tpu_custom_call.1} parent=0 // pred_fallthru
    _
  // Predicated region
  $region38: #{tpu_custom_call.1} parent=0 // pred_check
    _
  $region39: #{tpu_custom_call.1} parent=0 // pred_check_branch
    %38 = sbr.rel (0) target = $region41
  $region40: #{tpu_custom_call.1} parent=0 // pred_region
    _
  $region41: #{tpu_custom_call.1} parent=0 // pred_fallthru
    _
  // Predicated region
  $region42: #{tpu_custom_call.1} parent=0 // pred_check
    _
  $region43: #{tpu_custom_call.1} parent=0 // pred_check_branch
    %40 = sbr.rel (0) target = $region45
  $region44: #{tpu_custom_call.1} parent=0 // pred_region
    _
  $region45: #{tpu_custom_call.1} parent=0 // pred_fallthru
    _
  // Predicated region
  $region46: #{tpu_custom_call.1} parent=0 // pred_check
    _
  $region47: #{tpu_custom_call.1} parent=0 // pred_check_branch
    %42 = sbr.rel (0) target = $region49
  $region48: #{tpu_custom_call.1} parent=0 // pred_region
    _
  $region49: #{tpu_custom_call.1} parent=0 // pred_fallthru
    _
  // Predicated region
  $region50: #{tpu_custom_call.1} parent=0 // pred_check
    _
  $region51: #{tpu_custom_call.1} parent=0 // pred_check_branch
    %44 = sbr.rel (0) target = $region53
  $region52: #{tpu_custom_call.1} parent=0 // pred_region
    _
  $region53: #{tpu_custom_call.1} parent=0 // pred_fallthru
    _
  // Predicated region
  $region54: #{tpu_custom_call.1} parent=0 // pred_check
    _
  $region55: #{tpu_custom_call.1} parent=0 // pred_check_branch
    %46 = sbr.rel (0) target = $region57
  $region56: #{tpu_custom_call.1} parent=0 // pred_region
    _
  $region57: #{tpu_custom_call.1} parent=0 // pred_fallthru
    _
  %v47 = vld [vmem:[%s0] sm:$0xff]
  %v48 = vld [vmem:[%s0 + $0x8] sm:$0xff]
  %v49 = vld [vmem:[%s0 + $0x10] sm:$0xff]
  %v50 = vld [vmem:[%s0 + $0x18] sm:$0xff]
  %v51 = vld [vmem:[%s1] sm:$0xff]
  %v52 = vld [vmem:[%s1 + $0x8] sm:$0xff]
  %v53 = vld [vmem:[%s1 + $0x10] sm:$0xff]
  %v54 = vld [vmem:[%s1 + $0x18] sm:$0xff]
  %v55 = vld [vmem:[%s2] sm:$0x1]
  %v57 = vlaneseq
  %v58 = vshrl.u32 %v57, 7
  %v59 = vsub.s32 0, %v58
  %v60 = vrot.slane %v55, %v59
  %vm62 = vcmask 261120
  %v64 = vsel %vm62, %v47, 0
  %v67 = vsel %vm62, %v48, 0
  %v70 = vsel %vm62, %v49, 0
  %v73 = vsel %vm62, %v50, 0
  %75 = vmatprep.subr.mxu0 0.0
  %76 = vmatpush1.msra.mxu0 0.0
  %77 = vmatprep.subr.mxu0 0.0
  %78 = vmatpush1.msra.mxu0 0.0
  %79 = vmatprep.subr.mxu0 0.0
  %80 = vmatpush1.msra.mxu0 0.0
  %81 = vmatprep.subr.mxu0 0.0
  %82 = vmatpush1.msra.mxu0 0.0
  %83 = vmatprep.subr.mxu0 0.0
  %84 = vmatpush1.msra.mxu0 0.0
  %85 = vmatprep.subr.mxu0 0.0
  %86 = vmatpush1.msra.mxu0 0.0
  %87 = vmatprep.subr.mxu0 0.0
  %88 = vmatpush1.msra.mxu0 0.0
  %89 = vmatprep.subr.mxu0 0.0
  %90 = vmatpush1.msra.mxu0 0.0
  %91 = vmatprep.subr.mxu0 0.0
  %92 = vmatpush1.msra.mxu0 0.0
  %93 = vmatprep.subr.mxu0 0.0
  %94 = vmatpush1.msra.mxu0 0.0
  %95 = vmatprep.subr.mxu0 0.0
  %96 = vmatpush1.msra.mxu0 0.0
  %97 = vmatprep.subr.mxu0 0.0
  %98 = vmatpush1.msra.mxu0 0.0
  %99 = vmatprep.subr.mxu0 0.0
  %100 = vmatpush1.msra.mxu0 %v54
  %101 = vmatprep.subr.mxu0 0.0
  %102 = vmatpush1.msra.mxu0 %v53
  %103 = vmatprep.subr.mxu0 0.0
  %104 = vmatpush1.msra.mxu0 %v52
  %105 = vmatprep.subr.mxu0 0.0
  %106 = vmatpush1.msra.mxu0 %v51
  %107 = vmatprep.subr.mxu0 0.0
  %108 = vmatpush2.msra.mxu0 0.0
  %109 = vmatprep.subr.mxu0 0.0
  %110 = vmatpush2.msra.mxu0 0.0
  %111 = vmatprep.subr.mxu0 0.0
  %112 = vmatpush2.msra.mxu0 0.0
  %113 = vmatprep.subr.mxu0 0.0
  %114 = vmatpush2.msra.mxu0 0.0
  %115 = vmatprep.subr.mxu0 0.0
  %116 = vmatpush2.msra.mxu0 0.0
  %117 = vmatprep.subr.mxu0 0.0
  %118 = vmatpush2.msra.mxu0 0.0
  %119 = vmatprep.subr.mxu0 0.0
  %120 = vmatpush2.msra.mxu0 0.0
  %121 = vmatprep.subr.mxu0 0.0
  %122 = vmatpush2.msra.mxu0 0.0
  %123 = vmatprep.subr.mxu0 0.0
  %124 = vmatpush2.msra.mxu0 0.0
  %125 = vmatprep.subr.mxu0 0.0
  %126 = vmatpush2.msra.mxu0 0.0
  %127 = vmatprep.subr.mxu0 0.0
  %128 = vmatpush2.msra.mxu0 0.0
  %129 = vmatprep.subr.mxu0 0.0
  %130 = vmatpush2.msra.mxu0 0.0
  %131 = vmatprep.subr.mxu0 0.0
  %132 = vmatpush2.msra.mxu0 0.0
  %133 = vmatprep.subr.mxu0 0.0
  %134 = vmatpush2.msra.mxu0 0.0
  %135 = vmatprep.subr.mxu0 0.0
  %136 = vmatpush2.msra.mxu0 0.0
  %137 = vmatprep.subr.mxu0 0.0
  %138 = vmatpush2.msra.mxu0 0.0
  %139 = vmatprep.mubr.f32.mxu0 0.0
  %140 = vmatmul.mubr.f32.gmra.mxu0 %v64
  %v141 = vpop.f32.mrf.mxu0
  %v142 = vadd.f32 %v60, %v141
  %v143 = vpop.f32.mrf.mxu0
  %144 = vmatprep.mubr.f32.mxu0 0.0
  %145 = vmatmul.mubr.f32.gmra.mxu0 %v67
  %v146 = vpop.f32.mrf.mxu0
  %v147 = vadd.f32 %v60, %v146
  %v148 = vpop.f32.mrf.mxu0
  %149 = vmatprep.mubr.f32.mxu0 0.0
  %150 = vmatmul.mubr.f32.gmra.mxu0 %v70
  %v151 = vpop.f32.mrf.mxu0
  %v152 = vadd.f32 %v60, %v151
  %v153 = vpop.f32.mrf.mxu0
  %154 = vmatprep.mubr.f32.mxu0 0.0
  %155 = vmatmul.mubr.f32.gmra.mxu0 %v73
  %v156 = vpop.f32.mrf.mxu0
  %v157 = vadd.f32 %v60, %v156
  %v158 = vpop.f32.mrf.mxu0
  %159 = vdwg.mxu0
  %v160 = vld [vmem:[%s3] sm:$0xff]
  %v161 = vld [vmem:[%s3 + $0x8] sm:$0xff]
  %v162 = vld [vmem:[%s3 + $0x10] sm:$0xff]
  %v163 = vld [vmem:[%s3 + $0x18] sm:$0xff]
  %v164 = vld [vmem:[%s4] sm:$0x1]
  %v166 = vlaneseq
  %v167 = vshrl.u32 %v166, 7
  %v168 = vsub.s32 0, %v167
  %v169 = vrot.slane %v164, %v168
  %v172 = vsel %vm62, %v142, 0
  %v175 = vsel %vm62, %v147, 0
  %v178 = vsel %vm62, %v152, 0
  %v181 = vsel %vm62, %v157, 0
  %183 = vmatprep.subr.mxu0 0.0
  %184 = vmatpush1.msra.mxu0 0.0
  %185 = vmatprep.subr.mxu0 0.0
  %186 = vmatpush1.msra.mxu0 0.0
  %187 = vmatprep.subr.mxu0 0.0
  %188 = vmatpush1.msra.mxu0 0.0
  %189 = vmatprep.subr.mxu0 0.0
  %190 = vmatpush1.msra.mxu0 0.0
  %191 = vmatprep.subr.mxu0 0.0
  %192 = vmatpush1.msra.mxu0 0.0
  %193 = vmatprep.subr.mxu0 0.0
  %194 = vmatpush1.msra.mxu0 0.0
  %195 = vmatprep.subr.mxu0 0.0
  %196 = vmatpush1.msra.mxu0 0.0
  %197 = vmatprep.subr.mxu0 0.0
  %198 = vmatpush1.msra.mxu0 0.0
  %199 = vmatprep.subr.mxu0 0.0
  %200 = vmatpush1.msra.mxu0 0.0
  %201 = vmatprep.subr.mxu0 0.0
  %202 = vmatpush1.msra.mxu0 0.0
  %203 = vmatprep.subr.mxu0 0.0
  %204 = vmatpush1.msra.mxu0 0.0
  %205 = vmatprep.subr.mxu0 0.0
  %206 = vmatpush1.msra.mxu0 0.0
  %207 = vmatprep.subr.mxu0 0.0
  %208 = vmatpush1.msra.mxu0 %v163
  %209 = vmatprep.subr.mxu0 0.0
  %210 = vmatpush1.msra.mxu0 %v162
  %211 = vmatprep.subr.mxu0 0.0
  %212 = vmatpush1.msra.mxu0 %v161
  %213 = vmatprep.subr.mxu0 0.0
  %214 = vmatpush1.msra.mxu0 %v160
  %215 = vmatprep.subr.mxu0 0.0
  %216 = vmatpush2.msra.mxu0 0.0
  %217 = vmatprep.subr.mxu0 0.0
  %218 = vmatpush2.msra.mxu0 0.0
  %219 = vmatprep.subr.mxu0 0.0
  %220 = vmatpush2.msra.mxu0 0.0
  %221 = vmatprep.subr.mxu0 0.0
  %222 = vmatpush2.msra.mxu0 0.0
  %223 = vmatprep.subr.mxu0 0.0
  %224 = vmatpush2.msra.mxu0 0.0
  %225 = vmatprep.subr.mxu0 0.0
  %226 = vmatpush2.msra.mxu0 0.0
  %227 = vmatprep.subr.mxu0 0.0
  %228 = vmatpush2.msra.mxu0 0.0
  %229 = vmatprep.subr.mxu0 0.0
  %230 = vmatpush2.msra.mxu0 0.0
  %231 = vmatprep.subr.mxu0 0.0
  %232 = vmatpush2.msra.mxu0 0.0
  %233 = vmatprep.subr.mxu0 0.0
  %234 = vmatpush2.msra.mxu0 0.0
  %235 = vmatprep.subr.mxu0 0.0
  %236 = vmatpush2.msra.mxu0 0.0
  %237 = vmatprep.subr.mxu0 0.0
  %238 = vmatpush2.msra.mxu0 0.0
  %239 = vmatprep.subr.mxu0 0.0
  %240 = vmatpush2.msra.mxu0 0.0
  %241 = vmatprep.subr.mxu0 0.0
  %242 = vmatpush2.msra.mxu0 0.0
  %243 = vmatprep.subr.mxu0 0.0
  %244 = vmatpush2.msra.mxu0 0.0
  %245 = vmatprep.subr.mxu0 0.0
  %246 = vmatpush2.msra.mxu0 0.0
  %247 = vmatprep.mubr.f32.mxu0 0.0
  %248 = vmatmul.mubr.f32.gmra.mxu0 %v172
  %v249 = vpop.f32.mrf.mxu0
  %v250 = vadd.f32 %v169, %v249
  %v251 = vpop.f32.mrf.mxu0
  %252 = vmatprep.mubr.f32.mxu0 0.0
  %253 = vmatmul.mubr.f32.gmra.mxu0 %v175
  %v254 = vpop.f32.mrf.mxu0
  %v255 = vadd.f32 %v169, %v254
  %v256 = vpop.f32.mrf.mxu0
  %257 = vmatprep.mubr.f32.mxu0 0.0
  %258 = vmatmul.mubr.f32.gmra.mxu0 %v178
  %v259 = vpop.f32.mrf.mxu0
  %v260 = vadd.f32 %v169, %v259
  %v261 = vpop.f32.mrf.mxu0
  %262 = vmatprep.mubr.f32.mxu0 0.0
  %263 = vmatmul.mubr.f32.gmra.mxu0 %v181
  %v264 = vpop.f32.mrf.mxu0
  %v265 = vadd.f32 %v169, %v264
  %v266 = vpop.f32.mrf.mxu0
  %267 = vdwg.mxu0
  %v268 = vmul.f32 %v250, 0.35355338
  %v269 = vmul.f32 %v255, 0.35355338
  %v270 = vmul.f32 %v260, 0.35355338
  %v271 = vmul.f32 %v265, 0.35355338
  %273 = vrot.lane.b32.xlu0 %v250, 96
  %v274 = vpop.permute.xlu0 %273
  %vm275 = vcmask 64512
  %v277 = vsel %vm275, %v268, 0
  %v279 = vsel %vm275, %v274, 0
  %281 = vmatprep.subr.mxu0 0.0
  %282 = vmatpush1.xpose.msra.mxu0 0.0
  %283 = vmatprep.subr.mxu0 0.0
  %284 = vmatpush1.xpose.msra.mxu0 0.0
  %285 = vmatprep.subr.mxu0 0.0
  %286 = vmatpush1.xpose.msra.mxu0 0.0
  %287 = vmatprep.subr.mxu0 0.0
  %288 = vmatpush1.xpose.msra.mxu0 0.0
  %289 = vmatprep.subr.mxu0 0.0
  %290 = vmatpush1.xpose.msra.mxu0 0.0
  %291 = vmatprep.subr.mxu0 0.0
  %292 = vmatpush1.xpose.msra.mxu0 0.0
  %293 = vmatprep.subr.mxu0 0.0
  %294 = vmatpush1.xpose.msra.mxu0 0.0
  %295 = vmatprep.subr.mxu0 0.0
  %296 = vmatpush1.xpose.msra.mxu0 0.0
  %297 = vmatprep.subr.mxu0 0.0
  %298 = vmatpush1.xpose.msra.mxu0 0.0
  %299 = vmatprep.subr.mxu0 0.0
  %300 = vmatpush1.xpose.msra.mxu0 0.0
  %301 = vmatprep.subr.mxu0 0.0
  %302 = vmatpush1.xpose.msra.mxu0 0.0
  %303 = vmatprep.subr.mxu0 0.0
  %304 = vmatpush1.xpose.msra.mxu0 0.0
  %305 = vmatprep.subr.mxu0 0.0
  %306 = vmatpush1.xpose.msra.mxu0 0.0
  %307 = vmatprep.subr.mxu0 0.0
  %308 = vmatpush1.xpose.msra.mxu0 0.0
  %309 = vmatprep.subr.mxu0 0.0
  %310 = vmatpush1.xpose.msra.mxu0 0.0
  %311 = vmatprep.subr.mxu0 0.0
  %312 = vmatpush1.xpose.msra.mxu0 %v279
  %313 = vmatprep.subr.mxu0 0.0
  %314 = vmatpush2.xpose.msra.mxu0 0.0
  %315 = vmatprep.subr.mxu0 0.0
  %316 = vmatpush2.xpose.msra.mxu0 0.0
  %317 = vmatprep.subr.mxu0 0.0
  %318 = vmatpush2.xpose.msra.mxu0 0.0
  %319 = vmatprep.subr.mxu0 0.0
  %320 = vmatpush2.xpose.msra.mxu0 0.0
  %321 = vmatprep.subr.mxu0 0.0
  %322 = vmatpush2.xpose.msra.mxu0 0.0
  %323 = vmatprep.subr.mxu0 0.0
  %324 = vmatpush2.xpose.msra.mxu0 0.0
  %325 = vmatprep.subr.mxu0 0.0
  %326 = vmatpush2.xpose.msra.mxu0 0.0
  %327 = vmatprep.subr.mxu0 0.0
  %328 = vmatpush2.xpose.msra.mxu0 0.0
  %329 = vmatprep.subr.mxu0 0.0
  %330 = vmatpush2.xpose.msra.mxu0 0.0
  %331 = vmatprep.subr.mxu0 0.0
  %332 = vmatpush2.xpose.msra.mxu0 0.0
  %333 = vmatprep.subr.mxu0 0.0
  %334 = vmatpush2.xpose.msra.mxu0 0.0
  %335 = vmatprep.subr.mxu0 0.0
  %336 = vmatpush2.xpose.msra.mxu0 0.0
  %337 = vmatprep.subr.mxu0 0.0
  %338 = vmatpush2.xpose.msra.mxu0 0.0
  %339 = vmatprep.subr.mxu0 0.0
  %340 = vmatpush2.xpose.msra.mxu0 0.0
  %341 = vmatprep.subr.mxu0 0.0
  %342 = vmatpush2.xpose.msra.mxu0 0.0
  %343 = vmatprep.subr.mxu0 0.0
  %344 = vmatpush2.xpose.msra.mxu0 0.0
  %345 = vmatprep.mubr.f32.mxu0 0.0
  %346 = vmatmul.mubr.f32.gmra.mxu0 %v277
  %v347 = vpop.f32.mrf.mxu0
  %v348 = vadd.f32 0.0, %v347
  %v349 = vpop.f32.mrf.mxu0
  %350 = vdwg.mxu0
  %352 = vrot.lane.b32.xlu0 %v255, 96
  %v353 = vpop.permute.xlu0 %352
  %v355 = vsel %vm275, %v269, 0
  %v357 = vsel %vm275, %v353, 0
  %359 = vmatprep.subr.mxu0 0.0
  %360 = vmatpush1.xpose.msra.mxu0 0.0
  %361 = vmatprep.subr.mxu0 0.0
  %362 = vmatpush1.xpose.msra.mxu0 0.0
  %363 = vmatprep.subr.mxu0 0.0
  %364 = vmatpush1.xpose.msra.mxu0 0.0
  %365 = vmatprep.subr.mxu0 0.0
  %366 = vmatpush1.xpose.msra.mxu0 0.0
  %367 = vmatprep.subr.mxu0 0.0
  %368 = vmatpush1.xpose.msra.mxu0 0.0
  %369 = vmatprep.subr.mxu0 0.0
  %370 = vmatpush1.xpose.msra.mxu0 0.0
  %371 = vmatprep.subr.mxu0 0.0
  %372 = vmatpush1.xpose.msra.mxu0 0.0
  %373 = vmatprep.subr.mxu0 0.0
  %374 = vmatpush1.xpose.msra.mxu0 0.0
  %375 = vmatprep.subr.mxu0 0.0
  %376 = vmatpush1.xpose.msra.mxu0 0.0
  %377 = vmatprep.subr.mxu0 0.0
  %378 = vmatpush1.xpose.msra.mxu0 0.0
  %379 = vmatprep.subr.mxu0 0.0
  %380 = vmatpush1.xpose.msra.mxu0 0.0
  %381 = vmatprep.subr.mxu0 0.0
  %382 = vmatpush1.xpose.msra.mxu0 0.0
  %383 = vmatprep.subr.mxu0 0.0
  %384 = vmatpush1.xpose.msra.mxu0 0.0
  %385 = vmatprep.subr.mxu0 0.0
  %386 = vmatpush1.xpose.msra.mxu0 0.0
  %387 = vmatprep.subr.mxu0 0.0
  %388 = vmatpush1.xpose.msra.mxu0 0.0
  %389 = vmatprep.subr.mxu0 0.0
  %390 = vmatpush1.xpose.msra.mxu0 %v357
  %391 = vmatprep.subr.mxu0 0.0
  %392 = vmatpush2.xpose.msra.mxu0 0.0
  %393 = vmatprep.subr.mxu0 0.0
  %394 = vmatpush2.xpose.msra.mxu0 0.0
  %395 = vmatprep.subr.mxu0 0.0
  %396 = vmatpush2.xpose.msra.mxu0 0.0
  %397 = vmatprep.subr.mxu0 0.0
  %398 = vmatpush2.xpose.msra.mxu0 0.0
  %399 = vmatprep.subr.mxu0 0.0
  %400 = vmatpush2.xpose.msra.mxu0 0.0
  %401 = vmatprep.subr.mxu0 0.0
  %402 = vmatpush2.xpose.msra.mxu0 0.0
  %403 = vmatprep.subr.mxu0 0.0
  %404 = vmatpush2.xpose.msra.mxu0 0.0
  %405 = vmatprep.subr.mxu0 0.0
  %406 = vmatpush2.xpose.msra.mxu0 0.0
  %407 = vmatprep.subr.mxu0 0.0
  %408 = vmatpush2.xpose.msra.mxu0 0.0
  %409 = vmatprep.subr.mxu0 0.0
  %410 = vmatpush2.xpose.msra.mxu0 0.0
  %411 = vmatprep.subr.mxu0 0.0
  %412 = vmatpush2.xpose.msra.mxu0 0.0
  %413 = vmatprep.subr.mxu0 0.0
  %414 = vmatpush2.xpose.msra.mxu0 0.0
  %415 = vmatprep.subr.mxu0 0.0
  %416 = vmatpush2.xpose.msra.mxu0 0.0
  %417 = vmatprep.subr.mxu0 0.0
  %418 = vmatpush2.xpose.msra.mxu0 0.0
  %419 = vmatprep.subr.mxu0 0.0
  %420 = vmatpush2.xpose.msra.mxu0 0.0
  %421 = vmatprep.subr.mxu0 0.0
  %422 = vmatpush2.xpose.msra.mxu0 0.0
  %423 = vmatprep.mubr.f32.mxu0 0.0
  %424 = vmatmul.mubr.f32.gmra.mxu0 %v355
  %v425 = vpop.f32.mrf.mxu0
  %v426 = vadd.f32 0.0, %v425
  %v427 = vpop.f32.mrf.mxu0
  %428 = vdwg.mxu0
  %430 = vrot.lane.b32.xlu0 %v260, 96
  %v431 = vpop.permute.xlu0 %430
  %v433 = vsel %vm275, %v270, 0
  %v435 = vsel %vm275, %v431, 0
  %437 = vmatprep.subr.mxu0 0.0
  %438 = vmatpush1.xpose.msra.mxu0 0.0
  %439 = vmatprep.subr.mxu0 0.0
  %440 = vmatpush1.xpose.msra.mxu0 0.0
  %441 = vmatprep.subr.mxu0 0.0
  %442 = vmatpush1.xpose.msra.mxu0 0.0
  %443 = vmatprep.subr.mxu0 0.0
  %444 = vmatpush1.xpose.msra.mxu0 0.0
  %445 = vmatprep.subr.mxu0 0.0
  %446 = vmatpush1.xpose.msra.mxu0 0.0
  %447 = vmatprep.subr.mxu0 0.0
  %448 = vmatpush1.xpose.msra.mxu0 0.0
  %449 = vmatprep.subr.mxu0 0.0
  %450 = vmatpush1.xpose.msra.mxu0 0.0
  %451 = vmatprep.subr.mxu0 0.0
  %452 = vmatpush1.xpose.msra.mxu0 0.0
  %453 = vmatprep.subr.mxu0 0.0
  %454 = vmatpush1.xpose.msra.mxu0 0.0
  %455 = vmatprep.subr.mxu0 0.0
  %456 = vmatpush1.xpose.msra.mxu0 0.0
  %457 = vmatprep.subr.mxu0 0.0
  %458 = vmatpush1.xpose.msra.mxu0 0.0
  %459 = vmatprep.subr.mxu0 0.0
  %460 = vmatpush1.xpose.msra.mxu0 0.0
  %461 = vmatprep.subr.mxu0 0.0
  %462 = vmatpush1.xpose.msra.mxu0 0.0
  %463 = vmatprep.subr.mxu0 0.0
  %464 = vmatpush1.xpose.msra.mxu0 0.0
  %465 = vmatprep.subr.mxu0 0.0
  %466 = vmatpush1.xpose.msra.mxu0 0.0
  %467 = vmatprep.subr.mxu0 0.0
  %468 = vmatpush1.xpose.msra.mxu0 %v435
  %469 = vmatprep.subr.mxu0 0.0
  %470 = vmatpush2.xpose.msra.mxu0 0.0
  %471 = vmatprep.subr.mxu0 0.0
  %472 = vmatpush2.xpose.msra.mxu0 0.0
  %473 = vmatprep.subr.mxu0 0.0
  %474 = vmatpush2.xpose.msra.mxu0 0.0
  %475 = vmatprep.subr.mxu0 0.0
  %476 = vmatpush2.xpose.msra.mxu0 0.0
  %477 = vmatprep.subr.mxu0 0.0
  %478 = vmatpush2.xpose.msra.mxu0 0.0
  %479 = vmatprep.subr.mxu0 0.0
  %480 = vmatpush2.xpose.msra.mxu0 0.0
  %481 = vmatprep.subr.mxu0 0.0
  %482 = vmatpush2.xpose.msra.mxu0 0.0
  %483 = vmatprep.subr.mxu0 0.0
  %484 = vmatpush2.xpose.msra.mxu0 0.0
  %485 = vmatprep.subr.mxu0 0.0
  %486 = vmatpush2.xpose.msra.mxu0 0.0
  %487 = vmatprep.subr.mxu0 0.0
  %488 = vmatpush2.xpose.msra.mxu0 0.0
  %489 = vmatprep.subr.mxu0 0.0
  %490 = vmatpush2.xpose.msra.mxu0 0.0
  %491 = vmatprep.subr.mxu0 0.0
  %492 = vmatpush2.xpose.msra.mxu0 0.0
  %493 = vmatprep.subr.mxu0 0.0
  %494 = vmatpush2.xpose.msra.mxu0 0.0
  %495 = vmatprep.subr.mxu0 0.0
  %496 = vmatpush2.xpose.msra.mxu0 0.0
  %497 = vmatprep.subr.mxu0 0.0
  %498 = vmatpush2.xpose.msra.mxu0 0.0
  %499 = vmatprep.subr.mxu0 0.0
  %500 = vmatpush2.xpose.msra.mxu0 0.0
  %501 = vmatprep.mubr.f32.mxu0 0.0
  %502 = vmatmul.mubr.f32.gmra.mxu0 %v433
  %v503 = vpop.f32.mrf.mxu0
  %v504 = vadd.f32 0.0, %v503
  %v505 = vpop.f32.mrf.mxu0
  %506 = vdwg.mxu0
  %508 = vrot.lane.b32.xlu0 %v265, 96
  %v509 = vpop.permute.xlu0 %508
  %v511 = vsel %vm275, %v271, 0
  %v513 = vsel %vm275, %v509, 0
  %515 = vmatprep.subr.mxu0 0.0
  %516 = vmatpush1.xpose.msra.mxu0 0.0
  %517 = vmatprep.subr.mxu0 0.0
  %518 = vmatpush1.xpose.msra.mxu0 0.0
  %519 = vmatprep.subr.mxu0 0.0
  %520 = vmatpush1.xpose.msra.mxu0 0.0
  %521 = vmatprep.subr.mxu0 0.0
  %522 = vmatpush1.xpose.msra.mxu0 0.0
  %523 = vmatprep.subr.mxu0 0.0
  %524 = vmatpush1.xpose.msra.mxu0 0.0
  %525 = vmatprep.subr.mxu0 0.0
  %526 = vmatpush1.xpose.msra.mxu0 0.0
  %527 = vmatprep.subr.mxu0 0.0
  %528 = vmatpush1.xpose.msra.mxu0 0.0
  %529 = vmatprep.subr.mxu0 0.0
  %530 = vmatpush1.xpose.msra.mxu0 0.0
  %531 = vmatprep.subr.mxu0 0.0
  %532 = vmatpush1.xpose.msra.mxu0 0.0
  %533 = vmatprep.subr.mxu0 0.0
  %534 = vmatpush1.xpose.msra.mxu0 0.0
  %535 = vmatprep.subr.mxu0 0.0
  %536 = vmatpush1.xpose.msra.mxu0 0.0
  %537 = vmatprep.subr.mxu0 0.0
  %538 = vmatpush1.xpose.msra.mxu0 0.0
  %539 = vmatprep.subr.mxu0 0.0
  %540 = vmatpush1.xpose.msra.mxu0 0.0
  %541 = vmatprep.subr.mxu0 0.0
  %542 = vmatpush1.xpose.msra.mxu0 0.0
  %543 = vmatprep.subr.mxu0 0.0
  %544 = vmatpush1.xpose.msra.mxu0 0.0
  %545 = vmatprep.subr.mxu0 0.0
  %546 = vmatpush1.xpose.msra.mxu0 %v513
  %547 = vmatprep.subr.mxu0 0.0
  %548 = vmatpush2.xpose.msra.mxu0 0.0
  %549 = vmatprep.subr.mxu0 0.0
  %550 = vmatpush2.xpose.msra.mxu0 0.0
  %551 = vmatprep.subr.mxu0 0.0
  %552 = vmatpush2.xpose.msra.mxu0 0.0
  %553 = vmatprep.subr.mxu0 0.0
  %554 = vmatpush2.xpose.msra.mxu0 0.0
  %555 = vmatprep.subr.mxu0 0.0
  %556 = vmatpush2.xpose.msra.mxu0 0.0
  %557 = vmatprep.subr.mxu0 0.0
  %558 = vmatpush2.xpose.msra.mxu0 0.0
  %559 = vmatprep.subr.mxu0 0.0
  %560 = vmatpush2.xpose.msra.mxu0 0.0
  %561 = vmatprep.subr.mxu0 0.0
  %562 = vmatpush2.xpose.msra.mxu0 0.0
  %563 = vmatprep.subr.mxu0 0.0
  %564 = vmatpush2.xpose.msra.mxu0 0.0
  %565 = vmatprep.subr.mxu0 0.0
  %566 = vmatpush2.xpose.msra.mxu0 0.0
  %567 = vmatprep.subr.mxu0 0.0
  %568 = vmatpush2.xpose.msra.mxu0 0.0
  %569 = vmatprep.subr.mxu0 0.0
  %570 = vmatpush2.xpose.msra.mxu0 0.0
  %571 = vmatprep.subr.mxu0 0.0
  %572 = vmatpush2.xpose.msra.mxu0 0.0
  %573 = vmatprep.subr.mxu0 0.0
  %574 = vmatpush2.xpose.msra.mxu0 0.0
  %575 = vmatprep.subr.mxu0 0.0
  %576 = vmatpush2.xpose.msra.mxu0 0.0
  %577 = vmatprep.subr.mxu0 0.0
  %578 = vmatpush2.xpose.msra.mxu0 0.0
  %579 = vmatprep.mubr.f32.mxu0 0.0
  %580 = vmatmul.mubr.f32.gmra.mxu0 %v511
  %v581 = vpop.f32.mrf.mxu0
  %v582 = vadd.f32 0.0, %v581
  %v583 = vpop.f32.mrf.mxu0
  %584 = vdwg.mxu0
  %v585 = vsel %vm275, %v348, -inf
  %586 = vmax.xlane.f32.xlu0 %v585
  %v587 = vpop.xlane.xlu0 %586
  %v588 = vsel %vm275, %v426, -inf
  %589 = vmax.xlane.f32.xlu0 %v588
  %v590 = vpop.xlane.xlu0 %589
  %v591 = vsel %vm275, %v504, -inf
  %592 = vmax.xlane.f32.xlu0 %v591
  %v593 = vpop.xlane.xlu0 %592
  %v594 = vsel %vm275, %v582, -inf
  %595 = vmax.xlane.f32.xlu0 %v594
  %v596 = vpop.xlane.xlu0 %595
  %v597 = vsub.f32 %v348, %v587
  %v598 = vsub.f32 %v426, %v590
  %v599 = vsub.f32 %v504, %v593
  %v600 = vsub.f32 %v582, %v596
  %v601 = vmul.f32 %v597, 1.442695
  %v602 = vpow.pop %v601
  %v603 = vmul.f32 %v598, 1.442695
  %v604 = vpow.pop %v603
  %v605 = vmul.f32 %v599, 1.442695
  %v606 = vpow.pop %v605
  %v607 = vmul.f32 %v600, 1.442695
  %v608 = vpow.pop %v607
  %v609 = vsel %vm275, %v602, 0.0
  %610 = vadd.xlane.f32.xlu0 %v609
  %v611 = vpop.xlane.xlu0 %610
  %v612 = vsel %vm275, %v604, 0.0
  %613 = vadd.xlane.f32.xlu0 %v612
  %v614 = vpop.xlane.xlu0 %613
  %v615 = vsel %vm275, %v606, 0.0
  %616 = vadd.xlane.f32.xlu0 %v615
  %v617 = vpop.xlane.xlu0 %616
  %v618 = vsel %vm275, %v608, 0.0
  %619 = vadd.xlane.f32.xlu0 %v618
  %v620 = vpop.xlane.xlu0 %619
  %v621 = vrcp.pop %v611
  %v622 = vrcp.pop %v614
  %v623 = vrcp.pop %v617
  %v624 = vrcp.pop %v620
  %v625 = vmul.f32 %v602, %v621
  %v626 = vmul.f32 %v604, %v622
  %v627 = vmul.f32 %v606, %v623
  %v628 = vmul.f32 %v608, %v624
  %629 = vrot.lane.b32.xlu0 %v250, 64
  %v630 = vpop.permute.xlu0 %629
  %v633 = vsel %vm275, %v625, 0
  %635 = vmatprep.subr.mxu0 0.0
  %636 = vmatpush1.msra.mxu0 0.0
  %637 = vmatprep.subr.mxu0 0.0
  %638 = vmatpush1.msra.mxu0 0.0
  %639 = vmatprep.subr.mxu0 0.0
  %640 = vmatpush1.msra.mxu0 0.0
  %641 = vmatprep.subr.mxu0 0.0
  %642 = vmatpush1.msra.mxu0 0.0
  %643 = vmatprep.subr.mxu0 0.0
  %644 = vmatpush1.msra.mxu0 0.0
  %645 = vmatprep.subr.mxu0 0.0
  %646 = vmatpush1.msra.mxu0 0.0
  %647 = vmatprep.subr.mxu0 0.0
  %648 = vmatpush1.msra.mxu0 0.0
  %649 = vmatprep.subr.mxu0 0.0
  %650 = vmatpush1.msra.mxu0 0.0
  %651 = vmatprep.subr.mxu0 0.0
  %652 = vmatpush1.msra.mxu0 0.0
  %653 = vmatprep.subr.mxu0 0.0
  %654 = vmatpush1.msra.mxu0 0.0
  %655 = vmatprep.subr.mxu0 0.0
  %656 = vmatpush1.msra.mxu0 0.0
  %657 = vmatprep.subr.mxu0 0.0
  %658 = vmatpush1.msra.mxu0 0.0
  %659 = vmatprep.subr.mxu0 0.0
  %660 = vmatpush1.msra.mxu0 0.0
  %661 = vmatprep.subr.mxu0 0.0
  %662 = vmatpush1.msra.mxu0 0.0
  %663 = vmatprep.subr.mxu0 0.0
  %664 = vmatpush1.msra.mxu0 0.0
  %665 = vmatprep.subr.mxu0 0.0
  %666 = vmatpush1.msra.mxu0 %v630
  %667 = vmatprep.subr.mxu0 0.0
  %668 = vmatpush2.msra.mxu0 0.0
  %669 = vmatprep.subr.mxu0 0.0
  %670 = vmatpush2.msra.mxu0 0.0
  %671 = vmatprep.subr.mxu0 0.0
  %672 = vmatpush2.msra.mxu0 0.0
  %673 = vmatprep.subr.mxu0 0.0
  %674 = vmatpush2.msra.mxu0 0.0
  %675 = vmatprep.subr.mxu0 0.0
  %676 = vmatpush2.msra.mxu0 0.0
  %677 = vmatprep.subr.mxu0 0.0
  %678 = vmatpush2.msra.mxu0 0.0
  %679 = vmatprep.subr.mxu0 0.0
  %680 = vmatpush2.msra.mxu0 0.0
  %681 = vmatprep.subr.mxu0 0.0
  %682 = vmatpush2.msra.mxu0 0.0
  %683 = vmatprep.subr.mxu0 0.0
  %684 = vmatpush2.msra.mxu0 0.0
  %685 = vmatprep.subr.mxu0 0.0
  %686 = vmatpush2.msra.mxu0 0.0
  %687 = vmatprep.subr.mxu0 0.0
  %688 = vmatpush2.msra.mxu0 0.0
  %689 = vmatprep.subr.mxu0 0.0
  %690 = vmatpush2.msra.mxu0 0.0
  %691 = vmatprep.subr.mxu0 0.0
  %692 = vmatpush2.msra.mxu0 0.0
  %693 = vmatprep.subr.mxu0 0.0
  %694 = vmatpush2.msra.mxu0 0.0
  %695 = vmatprep.subr.mxu0 0.0
  %696 = vmatpush2.msra.mxu0 0.0
  %697 = vmatprep.subr.mxu0 0.0
  %698 = vmatpush2.msra.mxu0 0.0
  %699 = vmatprep.mubr.f32.mxu0 0.0
  %700 = vmatmul.mubr.f32.gmra.mxu0 %v633
  %v701 = vpop.f32.mrf.mxu0
  %v702 = vadd.f32 0.0, %v701
  %v703 = vpop.f32.mrf.mxu0
  %704 = vdwg.mxu0
  %705 = vrot.lane.b32.xlu0 %v255, 64
  %v706 = vpop.permute.xlu0 %705
  %v709 = vsel %vm275, %v626, 0
  %711 = vmatprep.subr.mxu0 0.0
  %712 = vmatpush1.msra.mxu0 0.0
  %713 = vmatprep.subr.mxu0 0.0
  %714 = vmatpush1.msra.mxu0 0.0
  %715 = vmatprep.subr.mxu0 0.0
  %716 = vmatpush1.msra.mxu0 0.0
  %717 = vmatprep.subr.mxu0 0.0
  %718 = vmatpush1.msra.mxu0 0.0
  %719 = vmatprep.subr.mxu0 0.0
  %720 = vmatpush1.msra.mxu0 0.0
  %721 = vmatprep.subr.mxu0 0.0
  %722 = vmatpush1.msra.mxu0 0.0
  %723 = vmatprep.subr.mxu0 0.0
  %724 = vmatpush1.msra.mxu0 0.0
  %725 = vmatprep.subr.mxu0 0.0
  %726 = vmatpush1.msra.mxu0 0.0
  %727 = vmatprep.subr.mxu0 0.0
  %728 = vmatpush1.msra.mxu0 0.0
  %729 = vmatprep.subr.mxu0 0.0
  %730 = vmatpush1.msra.mxu0 0.0
  %731 = vmatprep.subr.mxu0 0.0
  %732 = vmatpush1.msra.mxu0 0.0
  %733 = vmatprep.subr.mxu0 0.0
  %734 = vmatpush1.msra.mxu0 0.0
  %735 = vmatprep.subr.mxu0 0.0
  %736 = vmatpush1.msra.mxu0 0.0
  %737 = vmatprep.subr.mxu0 0.0
  %738 = vmatpush1.msra.mxu0 0.0
  %739 = vmatprep.subr.mxu0 0.0
  %740 = vmatpush1.msra.mxu0 0.0
  %741 = vmatprep.subr.mxu0 0.0
  %742 = vmatpush1.msra.mxu0 %v706
  %743 = vmatprep.subr.mxu0 0.0
  %744 = vmatpush2.msra.mxu0 0.0
  %745 = vmatprep.subr.mxu0 0.0
  %746 = vmatpush2.msra.mxu0 0.0
  %747 = vmatprep.subr.mxu0 0.0
  %748 = vmatpush2.msra.mxu0 0.0
  %749 = vmatprep.subr.mxu0 0.0
  %750 = vmatpush2.msra.mxu0 0.0
  %751 = vmatprep.subr.mxu0 0.0
  %752 = vmatpush2.msra.mxu0 0.0
  %753 = vmatprep.subr.mxu0 0.0
  %754 = vmatpush2.msra.mxu0 0.0
  %755 = vmatprep.subr.mxu0 0.0
  %756 = vmatpush2.msra.mxu0 0.0
  %757 = vmatprep.subr.mxu0 0.0
  %758 = vmatpush2.msra.mxu0 0.0
  %759 = vmatprep.subr.mxu0 0.0
  %760 = vmatpush2.msra.mxu0 0.0
  %761 = vmatprep.subr.mxu0 0.0
  %762 = vmatpush2.msra.mxu0 0.0
  %763 = vmatprep.subr.mxu0 0.0
  %764 = vmatpush2.msra.mxu0 0.0
  %765 = vmatprep.subr.mxu0 0.0
  %766 = vmatpush2.msra.mxu0 0.0
  %767 = vmatprep.subr.mxu0 0.0
  %768 = vmatpush2.msra.mxu0 0.0
  %769 = vmatprep.subr.mxu0 0.0
  %770 = vmatpush2.msra.mxu0 0.0
  %771 = vmatprep.subr.mxu0 0.0
  %772 = vmatpush2.msra.mxu0 0.0
  %773 = vmatprep.subr.mxu0 0.0
  %774 = vmatpush2.msra.mxu0 0.0
  %775 = vmatprep.mubr.f32.mxu0 0.0
  %776 = vmatmul.mubr.f32.gmra.mxu0 %v709
  %v777 = vpop.f32.mrf.mxu0
  %v778 = vadd.f32 0.0, %v777
  %v779 = vpop.f32.mrf.mxu0
  %780 = vdwg.mxu0
  %781 = vrot.lane.b32.xlu0 %v260, 64
  %v782 = vpop.permute.xlu0 %781
  %v785 = vsel %vm275, %v627, 0
  %787 = vmatprep.subr.mxu0 0.0
  %788 = vmatpush1.msra.mxu0 0.0
  %789 = vmatprep.subr.mxu0 0.0
  %790 = vmatpush1.msra.mxu0 0.0
  %791 = vmatprep.subr.mxu0 0.0
  %792 = vmatpush1.msra.mxu0 0.0
  %793 = vmatprep.subr.mxu0 0.0
  %794 = vmatpush1.msra.mxu0 0.0
  %795 = vmatprep.subr.mxu0 0.0
  %796 = vmatpush1.msra.mxu0 0.0
  %797 = vmatprep.subr.mxu0 0.0
  %798 = vmatpush1.msra.mxu0 0.0
  %799 = vmatprep.subr.mxu0 0.0
  %800 = vmatpush1.msra.mxu0 0.0
  %801 = vmatprep.subr.mxu0 0.0
  %802 = vmatpush1.msra.mxu0 0.0
  %803 = vmatprep.subr.mxu0 0.0
  %804 = vmatpush1.msra.mxu0 0.0
  %805 = vmatprep.subr.mxu0 0.0
  %806 = vmatpush1.msra.mxu0 0.0
  %807 = vmatprep.subr.mxu0 0.0
  %808 = vmatpush1.msra.mxu0 0.0
  %809 = vmatprep.subr.mxu0 0.0
  %810 = vmatpush1.msra.mxu0 0.0
  %811 = vmatprep.subr.mxu0 0.0
  %812 = vmatpush1.msra.mxu0 0.0
  %813 = vmatprep.subr.mxu0 0.0
  %814 = vmatpush1.msra.mxu0 0.0
  %815 = vmatprep.subr.mxu0 0.0
  %816 = vmatpush1.msra.mxu0 0.0
  %817 = vmatprep.subr.mxu0 0.0
  %818 = vmatpush1.msra.mxu0 %v782
  %819 = vmatprep.subr.mxu0 0.0
  %820 = vmatpush2.msra.mxu0 0.0
  %821 = vmatprep.subr.mxu0 0.0
  %822 = vmatpush2.msra.mxu0 0.0
  %823 = vmatprep.subr.mxu0 0.0
  %824 = vmatpush2.msra.mxu0 0.0
  %825 = vmatprep.subr.mxu0 0.0
  %826 = vmatpush2.msra.mxu0 0.0
  %827 = vmatprep.subr.mxu0 0.0
  %828 = vmatpush2.msra.mxu0 0.0
  %829 = vmatprep.subr.mxu0 0.0
  %830 = vmatpush2.msra.mxu0 0.0
  %831 = vmatprep.subr.mxu0 0.0
  %832 = vmatpush2.msra.mxu0 0.0
  %833 = vmatprep.subr.mxu0 0.0
  %834 = vmatpush2.msra.mxu0 0.0
  %835 = vmatprep.subr.mxu0 0.0
  %836 = vmatpush2.msra.mxu0 0.0
  %837 = vmatprep.subr.mxu0 0.0
  %838 = vmatpush2.msra.mxu0 0.0
  %839 = vmatprep.subr.mxu0 0.0
  %840 = vmatpush2.msra.mxu0 0.0
  %841 = vmatprep.subr.mxu0 0.0
  %842 = vmatpush2.msra.mxu0 0.0
  %843 = vmatprep.subr.mxu0 0.0
  %844 = vmatpush2.msra.mxu0 0.0
  %845 = vmatprep.subr.mxu0 0.0
  %846 = vmatpush2.msra.mxu0 0.0
  %847 = vmatprep.subr.mxu0 0.0
  %848 = vmatpush2.msra.mxu0 0.0
  %849 = vmatprep.subr.mxu0 0.0
  %850 = vmatpush2.msra.mxu0 0.0
  %851 = vmatprep.mubr.f32.mxu0 0.0
  %852 = vmatmul.mubr.f32.gmra.mxu0 %v785
  %v853 = vpop.f32.mrf.mxu0
  %v854 = vadd.f32 0.0, %v853
  %v855 = vpop.f32.mrf.mxu0
  %856 = vdwg.mxu0
  %857 = vrot.lane.b32.xlu0 %v265, 64
  %v858 = vpop.permute.xlu0 %857
  %v861 = vsel %vm275, %v628, 0
  %863 = vmatprep.subr.mxu0 0.0
  %864 = vmatpush1.msra.mxu0 0.0
  %865 = vmatprep.subr.mxu0 0.0
  %866 = vmatpush1.msra.mxu0 0.0
  %867 = vmatprep.subr.mxu0 0.0
  %868 = vmatpush1.msra.mxu0 0.0
  %869 = vmatprep.subr.mxu0 0.0
  %870 = vmatpush1.msra.mxu0 0.0
  %871 = vmatprep.subr.mxu0 0.0
  %872 = vmatpush1.msra.mxu0 0.0
  %873 = vmatprep.subr.mxu0 0.0
  %874 = vmatpush1.msra.mxu0 0.0
  %875 = vmatprep.subr.mxu0 0.0
  %876 = vmatpush1.msra.mxu0 0.0
  %877 = vmatprep.subr.mxu0 0.0
  %878 = vmatpush1.msra.mxu0 0.0
  %879 = vmatprep.subr.mxu0 0.0
  %880 = vmatpush1.msra.mxu0 0.0
  %881 = vmatprep.subr.mxu0 0.0
  %882 = vmatpush1.msra.mxu0 0.0
  %883 = vmatprep.subr.mxu0 0.0
  %884 = vmatpush1.msra.mxu0 0.0
  %885 = vmatprep.subr.mxu0 0.0
  %886 = vmatpush1.msra.mxu0 0.0
  %887 = vmatprep.subr.mxu0 0.0
  %888 = vmatpush1.msra.mxu0 0.0
  %889 = vmatprep.subr.mxu0 0.0
  %890 = vmatpush1.msra.mxu0 0.0
  %891 = vmatprep.subr.mxu0 0.0
  %892 = vmatpush1.msra.mxu0 0.0
  %893 = vmatprep.subr.mxu0 0.0
  %894 = vmatpush1.msra.mxu0 %v858
  %895 = vmatprep.subr.mxu0 0.0
  %896 = vmatpush2.msra.mxu0 0.0
  %897 = vmatprep.subr.mxu0 0.0
  %898 = vmatpush2.msra.mxu0 0.0
  %899 = vmatprep.subr.mxu0 0.0
  %900 = vmatpush2.msra.mxu0 0.0
  %901 = vmatprep.subr.mxu0 0.0
  %902 = vmatpush2.msra.mxu0 0.0
  %903 = vmatprep.subr.mxu0 0.0
  %904 = vmatpush2.msra.mxu0 0.0
  %905 = vmatprep.subr.mxu0 0.0
  %906 = vmatpush2.msra.mxu0 0.0
  %907 = vmatprep.subr.mxu0 0.0
  %908 = vmatpush2.msra.mxu0 0.0
  %909 = vmatprep.subr.mxu0 0.0
  %910 = vmatpush2.msra.mxu0 0.0
  %911 = vmatprep.subr.mxu0 0.0
  %912 = vmatpush2.msra.mxu0 0.0
  %913 = vmatprep.subr.mxu0 0.0
  %914 = vmatpush2.msra.mxu0 0.0
  %915 = vmatprep.subr.mxu0 0.0
  %916 = vmatpush2.msra.mxu0 0.0
  %917 = vmatprep.subr.mxu0 0.0
  %918 = vmatpush2.msra.mxu0 0.0
  %919 = vmatprep.subr.mxu0 0.0
  %920 = vmatpush2.msra.mxu0 0.0
  %921 = vmatprep.subr.mxu0 0.0
  %922 = vmatpush2.msra.mxu0 0.0
  %923 = vmatprep.subr.mxu0 0.0
  %924 = vmatpush2.msra.mxu0 0.0
  %925 = vmatprep.subr.mxu0 0.0
  %926 = vmatpush2.msra.mxu0 0.0
  %927 = vmatprep.mubr.f32.mxu0 0.0
  %928 = vmatmul.mubr.f32.gmra.mxu0 %v861
  %v929 = vpop.f32.mrf.mxu0
  %v930 = vadd.f32 0.0, %v929
  %v931 = vpop.f32.mrf.mxu0
  %932 = vdwg.mxu0
  %933 = vrot.lane.b32.xlu0 %v268, 120
  %v934 = vpop.permute.xlu0 %933
  %935 = vrot.lane.b32.xlu0 %v250, 88
  %v936 = vpop.permute.xlu0 %935
  %v937 = vsel %vm275, %v934, 0
  %v939 = vsel %vm275, %v936, 0
  %941 = vmatprep.subr.mxu0 0.0
  %942 = vmatpush1.xpose.msra.mxu0 0.0
  %943 = vmatprep.subr.mxu0 0.0
  %944 = vmatpush1.xpose.msra.mxu0 0.0
  %945 = vmatprep.subr.mxu0 0.0
  %946 = vmatpush1.xpose.msra.mxu0 0.0
  %947 = vmatprep.subr.mxu0 0.0
  %948 = vmatpush1.xpose.msra.mxu0 0.0
  %949 = vmatprep.subr.mxu0 0.0
  %950 = vmatpush1.xpose.msra.mxu0 0.0
  %951 = vmatprep.subr.mxu0 0.0
  %952 = vmatpush1.xpose.msra.mxu0 0.0
  %953 = vmatprep.subr.mxu0 0.0
  %954 = vmatpush1.xpose.msra.mxu0 0.0
  %955 = vmatprep.subr.mxu0 0.0
  %956 = vmatpush1.xpose.msra.mxu0 0.0
  %957 = vmatprep.subr.mxu0 0.0
  %958 = vmatpush1.xpose.msra.mxu0 0.0
  %959 = vmatprep.subr.mxu0 0.0
  %960 = vmatpush1.xpose.msra.mxu0 0.0
  %961 = vmatprep.subr.mxu0 0.0
  %962 = vmatpush1.xpose.msra.mxu0 0.0
  %963 = vmatprep.subr.mxu0 0.0
  %964 = vmatpush1.xpose.msra.mxu0 0.0
  %965 = vmatprep.subr.mxu0 0.0
  %966 = vmatpush1.xpose.msra.mxu0 0.0
  %967 = vmatprep.subr.mxu0 0.0
  %968 = vmatpush1.xpose.msra.mxu0 0.0
  %969 = vmatprep.subr.mxu0 0.0
  %970 = vmatpush1.xpose.msra.mxu0 0.0
  %971 = vmatprep.subr.mxu0 0.0
  %972 = vmatpush1.xpose.msra.mxu0 %v939
  %973 = vmatprep.subr.mxu0 0.0
  %974 = vmatpush2.xpose.msra.mxu0 0.0
  %975 = vmatprep.subr.mxu0 0.0
  %976 = vmatpush2.xpose.msra.mxu0 0.0
  %977 = vmatprep.subr.mxu0 0.0
  %978 = vmatpush2.xpose.msra.mxu0 0.0
  %979 = vmatprep.subr.mxu0 0.0
  %980 = vmatpush2.xpose.msra.mxu0 0.0
  %981 = vmatprep.subr.mxu0 0.0
  %982 = vmatpush2.xpose.msra.mxu0 0.0
  %983 = vmatprep.subr.mxu0 0.0
  %984 = vmatpush2.xpose.msra.mxu0 0.0
  %985 = vmatprep.subr.mxu0 0.0
  %986 = vmatpush2.xpose.msra.mxu0 0.0
  %987 = vmatprep.subr.mxu0 0.0
  %988 = vmatpush2.xpose.msra.mxu0 0.0
  %989 = vmatprep.subr.mxu0 0.0
  %990 = vmatpush2.xpose.msra.mxu0 0.0
  %991 = vmatprep.subr.mxu0 0.0
  %992 = vmatpush2.xpose.msra.mxu0 0.0
  %993 = vmatprep.subr.mxu0 0.0
  %994 = vmatpush2.xpose.msra.mxu0 0.0
  %995 = vmatprep.subr.mxu0 0.0
  %996 = vmatpush2.xpose.msra.mxu0 0.0
  %997 = vmatprep.subr.mxu0 0.0
  %998 = vmatpush2.xpose.msra.mxu0 0.0
  %999 = vmatprep.subr.mxu0 0.0
  %1000 = vmatpush2.xpose.msra.mxu0 0.0
  %1001 = vmatprep.subr.mxu0 0.0
  %1002 = vmatpush2.xpose.msra.mxu0 0.0
  %1003 = vmatprep.subr.mxu0 0.0
  %1004 = vmatpush2.xpose.msra.mxu0 0.0
  %1005 = vmatprep.mubr.f32.mxu0 0.0
  %1006 = vmatmul.mubr.f32.gmra.mxu0 %v937
  %v1007 = vpop.f32.mrf.mxu0
  %v1008 = vadd.f32 0.0, %v1007
  %v1009 = vpop.f32.mrf.mxu0
  %1010 = vdwg.mxu0
  %1011 = vrot.lane.b32.xlu0 %v269, 120
  %v1012 = vpop.permute.xlu0 %1011
  %1013 = vrot.lane.b32.xlu0 %v255, 88
  %v1014 = vpop.permute.xlu0 %1013
  %v1015 = vsel %vm275, %v1012, 0
  %v1017 = vsel %vm275, %v1014, 0
  %1019 = vmatprep.subr.mxu0 0.0
  %1020 = vmatpush1.xpose.msra.mxu0 0.0
  %1021 = vmatprep.subr.mxu0 0.0
  %1022 = vmatpush1.xpose.msra.mxu0 0.0
  %1023 = vmatprep.subr.mxu0 0.0
  %1024 = vmatpush1.xpose.msra.mxu0 0.0
  %1025 = vmatprep.subr.mxu0 0.0
  %1026 = vmatpush1.xpose.msra.mxu0 0.0
  %1027 = vmatprep.subr.mxu0 0.0
  %1028 = vmatpush1.xpose.msra.mxu0 0.0
  %1029 = vmatprep.subr.mxu0 0.0
  %1030 = vmatpush1.xpose.msra.mxu0 0.0
  %1031 = vmatprep.subr.mxu0 0.0
  %1032 = vmatpush1.xpose.msra.mxu0 0.0
  %1033 = vmatprep.subr.mxu0 0.0
  %1034 = vmatpush1.xpose.msra.mxu0 0.0
  %1035 = vmatprep.subr.mxu0 0.0
  %1036 = vmatpush1.xpose.msra.mxu0 0.0
  %1037 = vmatprep.subr.mxu0 0.0
  %1038 = vmatpush1.xpose.msra.mxu0 0.0
  %1039 = vmatprep.subr.mxu0 0.0
  %1040 = vmatpush1.xpose.msra.mxu0 0.0
  %1041 = vmatprep.subr.mxu0 0.0
  %1042 = vmatpush1.xpose.msra.mxu0 0.0
  %1043 = vmatprep.subr.mxu0 0.0
  %1044 = vmatpush1.xpose.msra.mxu0 0.0
  %1045 = vmatprep.subr.mxu0 0.0
  %1046 = vmatpush1.xpose.msra.mxu0 0.0
  %1047 = vmatprep.subr.mxu0 0.0
  %1048 = vmatpush1.xpose.msra.mxu0 0.0
  %1049 = vmatprep.subr.mxu0 0.0
  %1050 = vmatpush1.xpose.msra.mxu0 %v1017
  %1051 = vmatprep.subr.mxu0 0.0
  %1052 = vmatpush2.xpose.msra.mxu0 0.0
  %1053 = vmatprep.subr.mxu0 0.0
  %1054 = vmatpush2.xpose.msra.mxu0 0.0
  %1055 = vmatprep.subr.mxu0 0.0
  %1056 = vmatpush2.xpose.msra.mxu0 0.0
  %1057 = vmatprep.subr.mxu0 0.0
  %1058 = vmatpush2.xpose.msra.mxu0 0.0
  %1059 = vmatprep.subr.mxu0 0.0
  %1060 = vmatpush2.xpose.msra.mxu0 0.0
  %1061 = vmatprep.subr.mxu0 0.0
  %1062 = vmatpush2.xpose.msra.mxu0 0.0
  %1063 = vmatprep.subr.mxu0 0.0
  %1064 = vmatpush2.xpose.msra.mxu0 0.0
  %1065 = vmatprep.subr.mxu0 0.0
  %1066 = vmatpush2.xpose.msra.mxu0 0.0
  %1067 = vmatprep.subr.mxu0 0.0
  %1068 = vmatpush2.xpose.msra.mxu0 0.0
  %1069 = vmatprep.subr.mxu0 0.0
  %1070 = vmatpush2.xpose.msra.mxu0 0.0
  %1071 = vmatprep.subr.mxu0 0.0
  %1072 = vmatpush2.xpose.msra.mxu0 0.0
  %1073 = vmatprep.subr.mxu0 0.0
  %1074 = vmatpush2.xpose.msra.mxu0 0.0
  %1075 = vmatprep.subr.mxu0 0.0
  %1076 = vmatpush2.xpose.msra.mxu0 0.0
  %1077 = vmatprep.subr.mxu0 0.0
  %1078 = vmatpush2.xpose.msra.mxu0 0.0
  %1079 = vmatprep.subr.mxu0 0.0
  %1080 = vmatpush2.xpose.msra.mxu0 0.0
  %1081 = vmatprep.subr.mxu0 0.0
  %1082 = vmatpush2.xpose.msra.mxu0 0.0
  %1083 = vmatprep.mubr.f32.mxu0 0.0
  %1084 = vmatmul.mubr.f32.gmra.mxu0 %v1015
  %v1085 = vpop.f32.mrf.mxu0
  %v1086 = vadd.f32 0.0, %v1085
  %v1087 = vpop.f32.mrf.mxu0
  %1088 = vdwg.mxu0
  %1089 = vrot.lane.b32.xlu0 %v270, 120
  %v1090 = vpop.permute.xlu0 %1089
  %1091 = vrot.lane.b32.xlu0 %v260, 88
  %v1092 = vpop.permute.xlu0 %1091
  %v1093 = vsel %vm275, %v1090, 0
  %v1095 = vsel %vm275, %v1092, 0
  %1097 = vmatprep.subr.mxu0 0.0
  %1098 = vmatpush1.xpose.msra.mxu0 0.0
  %1099 = vmatprep.subr.mxu0 0.0
  %1100 = vmatpush1.xpose.msra.mxu0 0.0
  %1101 = vmatprep.subr.mxu0 0.0
  %1102 = vmatpush1.xpose.msra.mxu0 0.0
  %1103 = vmatprep.subr.mxu0 0.0
  %1104 = vmatpush1.xpose.msra.mxu0 0.0
  %1105 = vmatprep.subr.mxu0 0.0
  %1106 = vmatpush1.xpose.msra.mxu0 0.0
  %1107 = vmatprep.subr.mxu0 0.0
  %1108 = vmatpush1.xpose.msra.mxu0 0.0
  %1109 = vmatprep.subr.mxu0 0.0
  %1110 = vmatpush1.xpose.msra.mxu0 0.0
  %1111 = vmatprep.subr.mxu0 0.0
  %1112 = vmatpush1.xpose.msra.mxu0 0.0
  %1113 = vmatprep.subr.mxu0 0.0
  %1114 = vmatpush1.xpose.msra.mxu0 0.0
  %1115 = vmatprep.subr.mxu0 0.0
  %1116 = vmatpush1.xpose.msra.mxu0 0.0
  %1117 = vmatprep.subr.mxu0 0.0
  %1118 = vmatpush1.xpose.msra.mxu0 0.0
  %1119 = vmatprep.subr.mxu0 0.0
  %1120 = vmatpush1.xpose.msra.mxu0 0.0
  %1121 = vmatprep.subr.mxu0 0.0
  %1122 = vmatpush1.xpose.msra.mxu0 0.0
  %1123 = vmatprep.subr.mxu0 0.0
  %1124 = vmatpush1.xpose.msra.mxu0 0.0
  %1125 = vmatprep.subr.mxu0 0.0
  %1126 = vmatpush1.xpose.msra.mxu0 0.0
  %1127 = vmatprep.subr.mxu0 0.0
  %1128 = vmatpush1.xpose.msra.mxu0 %v1095
  %1129 = vmatprep.subr.mxu0 0.0
  %1130 = vmatpush2.xpose.msra.mxu0 0.0
  %1131 = vmatprep.subr.mxu0 0.0
  %1132 = vmatpush2.xpose.msra.mxu0 0.0
  %1133 = vmatprep.subr.mxu0 0.0
  %1134 = vmatpush2.xpose.msra.mxu0 0.0
  %1135 = vmatprep.subr.mxu0 0.0
  %1136 = vmatpush2.xpose.msra.mxu0 0.0
  %1137 = vmatprep.subr.mxu0 0.0
  %1138 = vmatpush2.xpose.msra.mxu0 0.0
  %1139 = vmatprep.subr.mxu0 0.0
  %1140 = vmatpush2.xpose.msra.mxu0 0.0
  %1141 = vmatprep.subr.mxu0 0.0
  %1142 = vmatpush2.xpose.msra.mxu0 0.0
  %1143 = vmatprep.subr.mxu0 0.0
  %1144 = vmatpush2.xpose.msra.mxu0 0.0
  %1145 = vmatprep.subr.mxu0 0.0
  %1146 = vmatpush2.xpose.msra.mxu0 0.0
  %1147 = vmatprep.subr.mxu0 0.0
  %1148 = vmatpush2.xpose.msra.mxu0 0.0
  %1149 = vmatprep.subr.mxu0 0.0
  %1150 = vmatpush2.xpose.msra.mxu0 0.0
  %1151 = vmatprep.subr.mxu0 0.0
  %1152 = vmatpush2.xpose.msra.mxu0 0.0
  %1153 = vmatprep.subr.mxu0 0.0
  %1154 = vmatpush2.xpose.msra.mxu0 0.0
  %1155 = vmatprep.subr.mxu0 0.0
  %1156 = vmatpush2.xpose.msra.mxu0 0.0
  %1157 = vmatprep.subr.mxu0 0.0
  %1158 = vmatpush2.xpose.msra.mxu0 0.0
  %1159 = vmatprep.subr.mxu0 0.0
  %1160 = vmatpush2.xpose.msra.mxu0 0.0
  %1161 = vmatprep.mubr.f32.mxu0 0.0
  %1162 = vmatmul.mubr.f32.gmra.mxu0 %v1093
  %v1163 = vpop.f32.mrf.mxu0
  %v1164 = vadd.f32 0.0, %v1163
  %v1165 = vpop.f32.mrf.mxu0
  %1166 = vdwg.mxu0
  %1167 = vrot.lane.b32.xlu0 %v271, 120
  %v1168 = vpop.permute.xlu0 %1167
  %1169 = vrot.lane.b32.xlu0 %v265, 88
  %v1170 = vpop.permute.xlu0 %1169
  %v1171 = vsel %vm275, %v1168, 0
  %v1173 = vsel %vm275, %v1170, 0
  %1175 = vmatprep.subr.mxu0 0.0
  %1176 = vmatpush1.xpose.msra.mxu0 0.0
  %1177 = vmatprep.subr.mxu0 0.0
  %1178 = vmatpush1.xpose.msra.mxu0 0.0
  %1179 = vmatprep.subr.mxu0 0.0
  %1180 = vmatpush1.xpose.msra.mxu0 0.0
  %1181 = vmatprep.subr.mxu0 0.0
  %1182 = vmatpush1.xpose.msra.mxu0 0.0
  %1183 = vmatprep.subr.mxu0 0.0
  %1184 = vmatpush1.xpose.msra.mxu0 0.0
  %1185 = vmatprep.subr.mxu0 0.0
  %1186 = vmatpush1.xpose.msra.mxu0 0.0
  %1187 = vmatprep.subr.mxu0 0.0
  %1188 = vmatpush1.xpose.msra.mxu0 0.0
  %1189 = vmatprep.subr.mxu0 0.0
  %1190 = vmatpush1.xpose.msra.mxu0 0.0
  %1191 = vmatprep.subr.mxu0 0.0
  %1192 = vmatpush1.xpose.msra.mxu0 0.0
  %1193 = vmatprep.subr.mxu0 0.0
  %1194 = vmatpush1.xpose.msra.mxu0 0.0
  %1195 = vmatprep.subr.mxu0 0.0
  %1196 = vmatpush1.xpose.msra.mxu0 0.0
  %1197 = vmatprep.subr.mxu0 0.0
  %1198 = vmatpush1.xpose.msra.mxu0 0.0
  %1199 = vmatprep.subr.mxu0 0.0
  %1200 = vmatpush1.xpose.msra.mxu0 0.0
  %1201 = vmatprep.subr.mxu0 0.0
  %1202 = vmatpush1.xpose.msra.mxu0 0.0
  %1203 = vmatprep.subr.mxu0 0.0
  %1204 = vmatpush1.xpose.msra.mxu0 0.0
  %1205 = vmatprep.subr.mxu0 0.0
  %1206 = vmatpush1.xpose.msra.mxu0 %v1173
  %1207 = vmatprep.subr.mxu0 0.0
  %1208 = vmatpush2.xpose.msra.mxu0 0.0
  %1209 = vmatprep.subr.mxu0 0.0
  %1210 = vmatpush2.xpose.msra.mxu0 0.0
  %1211 = vmatprep.subr.mxu0 0.0
  %1212 = vmatpush2.xpose.msra.mxu0 0.0
  %1213 = vmatprep.subr.mxu0 0.0
  %1214 = vmatpush2.xpose.msra.mxu0 0.0
  %1215 = vmatprep.subr.mxu0 0.0
  %1216 = vmatpush2.xpose.msra.mxu0 0.0
  %1217 = vmatprep.subr.mxu0 0.0
  %1218 = vmatpush2.xpose.msra.mxu0 0.0
  %1219 = vmatprep.subr.mxu0 0.0
  %1220 = vmatpush2.xpose.msra.mxu0 0.0
  %1221 = vmatprep.subr.mxu0 0.0
  %1222 = vmatpush2.xpose.msra.mxu0 0.0
  %1223 = vmatprep.subr.mxu0 0.0
  %1224 = vmatpush2.xpose.msra.mxu0 0.0
  %1225 = vmatprep.subr.mxu0 0.0
  %1226 = vmatpush2.xpose.msra.mxu0 0.0
  %1227 = vmatprep.subr.mxu0 0.0
  %1228 = vmatpush2.xpose.msra.mxu0 0.0
  %1229 = vmatprep.subr.mxu0 0.0
  %1230 = vmatpush2.xpose.msra.mxu0 0.0
  %1231 = vmatprep.subr.mxu0 0.0
  %1232 = vmatpush2.xpose.msra.mxu0 0.0
  %1233 = vmatprep.subr.mxu0 0.0
  %1234 = vmatpush2.xpose.msra.mxu0 0.0
  %1235 = vmatprep.subr.mxu0 0.0
  %1236 = vmatpush2.xpose.msra.mxu0 0.0
  %1237 = vmatprep.subr.mxu0 0.0
  %1238 = vmatpush2.xpose.msra.mxu0 0.0
  %1239 = vmatprep.mubr.f32.mxu0 0.0
  %1240 = vmatmul.mubr.f32.gmra.mxu0 %v1171
  %v1241 = vpop.f32.mrf.mxu0
  %v1242 = vadd.f32 0.0, %v1241
  %v1243 = vpop.f32.mrf.mxu0
  %1244 = vdwg.mxu0
  %v1245 = vsel %vm275, %v1008, -inf
  %1246 = vmax.xlane.f32.xlu0 %v1245
  %v1247 = vpop.xlane.xlu0 %1246
  %v1248 = vsel %vm275, %v1086, -inf
  %1249 = vmax.xlane.f32.xlu0 %v1248
  %v1250 = vpop.xlane.xlu0 %1249
  %v1251 = vsel %vm275, %v1164, -inf
  %1252 = vmax.xlane.f32.xlu0 %v1251
  %v1253 = vpop.xlane.xlu0 %1252
  %v1254 = vsel %vm275, %v1242, -inf
  %1255 = vmax.xlane.f32.xlu0 %v1254
  %v1256 = vpop.xlane.xlu0 %1255
  %v1257 = vsub.f32 %v1008, %v1247
  %v1258 = vsub.f32 %v1086, %v1250
  %v1259 = vsub.f32 %v1164, %v1253
  %v1260 = vsub.f32 %v1242, %v1256
  %v1261 = vmul.f32 %v1257, 1.442695
  %v1262 = vpow.pop %v1261
  %v1263 = vmul.f32 %v1258, 1.442695
  %v1264 = vpow.pop %v1263
  %v1265 = vmul.f32 %v1259, 1.442695
  %v1266 = vpow.pop %v1265
  %v1267 = vmul.f32 %v1260, 1.442695
  %v1268 = vpow.pop %v1267
  %v1269 = vsel %vm275, %v1262, 0.0
  %1270 = vadd.xlane.f32.xlu0 %v1269
  %v1271 = vpop.xlane.xlu0 %1270
  %v1272 = vsel %vm275, %v1264, 0.0
  %1273 = vadd.xlane.f32.xlu0 %v1272
  %v1274 = vpop.xlane.xlu0 %1273
  %v1275 = vsel %vm275, %v1266, 0.0
  %1276 = vadd.xlane.f32.xlu0 %v1275
  %v1277 = vpop.xlane.xlu0 %1276
  %v1278 = vsel %vm275, %v1268, 0.0
  %1279 = vadd.xlane.f32.xlu0 %v1278
  %v1280 = vpop.xlane.xlu0 %1279
  %v1281 = vrcp.pop %v1271
  %v1282 = vrcp.pop %v1274
  %v1283 = vrcp.pop %v1277
  %v1284 = vrcp.pop %v1280
  %v1285 = vmul.f32 %v1262, %v1281
  %v1286 = vmul.f32 %v1264, %v1282
  %v1287 = vmul.f32 %v1266, %v1283
  %v1288 = vmul.f32 %v1268, %v1284
  %1289 = vrot.lane.b32.xlu0 %v250, 56
  %v1290 = vpop.permute.xlu0 %1289
  %v1293 = vsel %vm275, %v1285, 0
  %1295 = vmatprep.subr.mxu0 0.0
  %1296 = vmatpush1.msra.mxu0 0.0
  %1297 = vmatprep.subr.mxu0 0.0
  %1298 = vmatpush1.msra.mxu0 0.0
  %1299 = vmatprep.subr.mxu0 0.0
  %1300 = vmatpush1.msra.mxu0 0.0
  %1301 = vmatprep.subr.mxu0 0.0
  %1302 = vmatpush1.msra.mxu0 0.0
  %1303 = vmatprep.subr.mxu0 0.0
  %1304 = vmatpush1.msra.mxu0 0.0
  %1305 = vmatprep.subr.mxu0 0.0
  %1306 = vmatpush1.msra.mxu0 0.0
  %1307 = vmatprep.subr.mxu0 0.0
  %1308 = vmatpush1.msra.mxu0 0.0
  %1309 = vmatprep.subr.mxu0 0.0
  %1310 = vmatpush1.msra.mxu0 0.0
  %1311 = vmatprep.subr.mxu0 0.0
  %1312 = vmatpush1.msra.mxu0 0.0
  %1313 = vmatprep.subr.mxu0 0.0
  %1314 = vmatpush1.msra.mxu0 0.0
  %1315 = vmatprep.subr.mxu0 0.0
  %1316 = vmatpush1.msra.mxu0 0.0
  %1317 = vmatprep.subr.mxu0 0.0
  %1318 = vmatpush1.msra.mxu0 0.0
  %1319 = vmatprep.subr.mxu0 0.0
  %1320 = vmatpush1.msra.mxu0 0.0
  %1321 = vmatprep.subr.mxu0 0.0
  %1322 = vmatpush1.msra.mxu0 0.0
  %1323 = vmatprep.subr.mxu0 0.0
  %1324 = vmatpush1.msra.mxu0 0.0
  %1325 = vmatprep.subr.mxu0 0.0
  %1326 = vmatpush1.msra.mxu0 %v1290
  %1327 = vmatprep.subr.mxu0 0.0
  %1328 = vmatpush2.msra.mxu0 0.0
  %1329 = vmatprep.subr.mxu0 0.0
  %1330 = vmatpush2.msra.mxu0 0.0
  %1331 = vmatprep.subr.mxu0 0.0
  %1332 = vmatpush2.msra.mxu0 0.0
  %1333 = vmatprep.subr.mxu0 0.0
  %1334 = vmatpush2.msra.mxu0 0.0
  %1335 = vmatprep.subr.mxu0 0.0
  %1336 = vmatpush2.msra.mxu0 0.0
  %1337 = vmatprep.subr.mxu0 0.0
  %1338 = vmatpush2.msra.mxu0 0.0
  %1339 = vmatprep.subr.mxu0 0.0
  %1340 = vmatpush2.msra.mxu0 0.0
  %1341 = vmatprep.subr.mxu0 0.0
  %1342 = vmatpush2.msra.mxu0 0.0
  %1343 = vmatprep.subr.mxu0 0.0
  %1344 = vmatpush2.msra.mxu0 0.0
  %1345 = vmatprep.subr.mxu0 0.0
  %1346 = vmatpush2.msra.mxu0 0.0
  %1347 = vmatprep.subr.mxu0 0.0
  %1348 = vmatpush2.msra.mxu0 0.0
  %1349 = vmatprep.subr.mxu0 0.0
  %1350 = vmatpush2.msra.mxu0 0.0
  %1351 = vmatprep.subr.mxu0 0.0
  %1352 = vmatpush2.msra.mxu0 0.0
  %1353 = vmatprep.subr.mxu0 0.0
  %1354 = vmatpush2.msra.mxu0 0.0
  %1355 = vmatprep.subr.mxu0 0.0
  %1356 = vmatpush2.msra.mxu0 0.0
  %1357 = vmatprep.subr.mxu0 0.0
  %1358 = vmatpush2.msra.mxu0 0.0
  %1359 = vmatprep.mubr.f32.mxu0 0.0
  %1360 = vmatmul.mubr.f32.gmra.mxu0 %v1293
  %v1361 = vpop.f32.mrf.mxu0
  %v1362 = vadd.f32 0.0, %v1361
  %v1363 = vpop.f32.mrf.mxu0
  %1364 = vdwg.mxu0
  %1365 = vrot.lane.b32.xlu0 %v255, 56
  %v1366 = vpop.permute.xlu0 %1365
  %v1369 = vsel %vm275, %v1286, 0
  %1371 = vmatprep.subr.mxu0 0.0
  %1372 = vmatpush1.msra.mxu0 0.0
  %1373 = vmatprep.subr.mxu0 0.0
  %1374 = vmatpush1.msra.mxu0 0.0
  %1375 = vmatprep.subr.mxu0 0.0
  %1376 = vmatpush1.msra.mxu0 0.0
  %1377 = vmatprep.subr.mxu0 0.0
  %1378 = vmatpush1.msra.mxu0 0.0
  %1379 = vmatprep.subr.mxu0 0.0
  %1380 = vmatpush1.msra.mxu0 0.0
  %1381 = vmatprep.subr.mxu0 0.0
  %1382 = vmatpush1.msra.mxu0 0.0
  %1383 = vmatprep.subr.mxu0 0.0
  %1384 = vmatpush1.msra.mxu0 0.0
  %1385 = vmatprep.subr.mxu0 0.0
  %1386 = vmatpush1.msra.mxu0 0.0
  %1387 = vmatprep.subr.mxu0 0.0
  %1388 = vmatpush1.msra.mxu0 0.0
  %1389 = vmatprep.subr.mxu0 0.0
  %1390 = vmatpush1.msra.mxu0 0.0
  %1391 = vmatprep.subr.mxu0 0.0
  %1392 = vmatpush1.msra.mxu0 0.0
  %1393 = vmatprep.subr.mxu0 0.0
  %1394 = vmatpush1.msra.mxu0 0.0
  %1395 = vmatprep.subr.mxu0 0.0
  %1396 = vmatpush1.msra.mxu0 0.0
  %1397 = vmatprep.subr.mxu0 0.0
  %1398 = vmatpush1.msra.mxu0 0.0
  %1399 = vmatprep.subr.mxu0 0.0
  %1400 = vmatpush1.msra.mxu0 0.0
  %1401 = vmatprep.subr.mxu0 0.0
  %1402 = vmatpush1.msra.mxu0 %v1366
  %1403 = vmatprep.subr.mxu0 0.0
  %1404 = vmatpush2.msra.mxu0 0.0
  %1405 = vmatprep.subr.mxu0 0.0
  %1406 = vmatpush2.msra.mxu0 0.0
  %1407 = vmatprep.subr.mxu0 0.0
  %1408 = vmatpush2.msra.mxu0 0.0
  %1409 = vmatprep.subr.mxu0 0.0
  %1410 = vmatpush2.msra.mxu0 0.0
  %1411 = vmatprep.subr.mxu0 0.0
  %1412 = vmatpush2.msra.mxu0 0.0
  %1413 = vmatprep.subr.mxu0 0.0
  %1414 = vmatpush2.msra.mxu0 0.0
  %1415 = vmatprep.subr.mxu0 0.0
  %1416 = vmatpush2.msra.mxu0 0.0
  %1417 = vmatprep.subr.mxu0 0.0
  %1418 = vmatpush2.msra.mxu0 0.0
  %1419 = vmatprep.subr.mxu0 0.0
  %1420 = vmatpush2.msra.mxu0 0.0
  %1421 = vmatprep.subr.mxu0 0.0
  %1422 = vmatpush2.msra.mxu0 0.0
  %1423 = vmatprep.subr.mxu0 0.0
  %1424 = vmatpush2.msra.mxu0 0.0
  %1425 = vmatprep.subr.mxu0 0.0
  %1426 = vmatpush2.msra.mxu0 0.0
  %1427 = vmatprep.subr.mxu0 0.0
  %1428 = vmatpush2.msra.mxu0 0.0
  %1429 = vmatprep.subr.mxu0 0.0
  %1430 = vmatpush2.msra.mxu0 0.0
  %1431 = vmatprep.subr.mxu0 0.0
  %1432 = vmatpush2.msra.mxu0 0.0
  %1433 = vmatprep.subr.mxu0 0.0
  %1434 = vmatpush2.msra.mxu0 0.0
  %1435 = vmatprep.mubr.f32.mxu0 0.0
  %1436 = vmatmul.mubr.f32.gmra.mxu0 %v1369
  %v1437 = vpop.f32.mrf.mxu0
  %v1438 = vadd.f32 0.0, %v1437
  %v1439 = vpop.f32.mrf.mxu0
  %1440 = vdwg.mxu0
  %1441 = vrot.lane.b32.xlu0 %v260, 56
  %v1442 = vpop.permute.xlu0 %1441
  %v1445 = vsel %vm275, %v1287, 0
  %1447 = vmatprep.subr.mxu0 0.0
  %1448 = vmatpush1.msra.mxu0 0.0
  %1449 = vmatprep.subr.mxu0 0.0
  %1450 = vmatpush1.msra.mxu0 0.0
  %1451 = vmatprep.subr.mxu0 0.0
  %1452 = vmatpush1.msra.mxu0 0.0
  %1453 = vmatprep.subr.mxu0 0.0
  %1454 = vmatpush1.msra.mxu0 0.0
  %1455 = vmatprep.subr.mxu0 0.0
  %1456 = vmatpush1.msra.mxu0 0.0
  %1457 = vmatprep.subr.mxu0 0.0
  %1458 = vmatpush1.msra.mxu0 0.0
  %1459 = vmatprep.subr.mxu0 0.0
  %1460 = vmatpush1.msra.mxu0 0.0
  %1461 = vmatprep.subr.mxu0 0.0
  %1462 = vmatpush1.msra.mxu0 0.0
  %1463 = vmatprep.subr.mxu0 0.0
  %1464 = vmatpush1.msra.mxu0 0.0
  %1465 = vmatprep.subr.mxu0 0.0
  %1466 = vmatpush1.msra.mxu0 0.0
  %1467 = vmatprep.subr.mxu0 0.0
  %1468 = vmatpush1.msra.mxu0 0.0
  %1469 = vmatprep.subr.mxu0 0.0
  %1470 = vmatpush1.msra.mxu0 0.0
  %1471 = vmatprep.subr.mxu0 0.0
  %1472 = vmatpush1.msra.mxu0 0.0
  %1473 = vmatprep.subr.mxu0 0.0
  %1474 = vmatpush1.msra.mxu0 0.0
  %1475 = vmatprep.subr.mxu0 0.0
  %1476 = vmatpush1.msra.mxu0 0.0
  %1477 = vmatprep.subr.mxu0 0.0
  %1478 = vmatpush1.msra.mxu0 %v1442
  %1479 = vmatprep.subr.mxu0 0.0
  %1480 = vmatpush2.msra.mxu0 0.0
  %1481 = vmatprep.subr.mxu0 0.0
  %1482 = vmatpush2.msra.mxu0 0.0
  %1483 = vmatprep.subr.mxu0 0.0
  %1484 = vmatpush2.msra.mxu0 0.0
  %1485 = vmatprep.subr.mxu0 0.0
  %1486 = vmatpush2.msra.mxu0 0.0
  %1487 = vmatprep.subr.mxu0 0.0
  %1488 = vmatpush2.msra.mxu0 0.0
  %1489 = vmatprep.subr.mxu0 0.0
  %1490 = vmatpush2.msra.mxu0 0.0
  %1491 = vmatprep.subr.mxu0 0.0
  %1492 = vmatpush2.msra.mxu0 0.0
  %1493 = vmatprep.subr.mxu0 0.0
  %1494 = vmatpush2.msra.mxu0 0.0
  %1495 = vmatprep.subr.mxu0 0.0
  %1496 = vmatpush2.msra.mxu0 0.0
  %1497 = vmatprep.subr.mxu0 0.0
  %1498 = vmatpush2.msra.mxu0 0.0
  %1499 = vmatprep.subr.mxu0 0.0
  %1500 = vmatpush2.msra.mxu0 0.0
  %1501 = vmatprep.subr.mxu0 0.0
  %1502 = vmatpush2.msra.mxu0 0.0
  %1503 = vmatprep.subr.mxu0 0.0
  %1504 = vmatpush2.msra.mxu0 0.0
  %1505 = vmatprep.subr.mxu0 0.0
  %1506 = vmatpush2.msra.mxu0 0.0
  %1507 = vmatprep.subr.mxu0 0.0
  %1508 = vmatpush2.msra.mxu0 0.0
  %1509 = vmatprep.subr.mxu0 0.0
  %1510 = vmatpush2.msra.mxu0 0.0
  %1511 = vmatprep.mubr.f32.mxu0 0.0
  %1512 = vmatmul.mubr.f32.gmra.mxu0 %v1445
  %v1513 = vpop.f32.mrf.mxu0
  %v1514 = vadd.f32 0.0, %v1513
  %v1515 = vpop.f32.mrf.mxu0
  %1516 = vdwg.mxu0
  %1517 = vrot.lane.b32.xlu0 %v265, 56
  %v1518 = vpop.permute.xlu0 %1517
  %v1521 = vsel %vm275, %v1288, 0
  %1523 = vmatprep.subr.mxu0 0.0
  %1524 = vmatpush1.msra.mxu0 0.0
  %1525 = vmatprep.subr.mxu0 0.0
  %1526 = vmatpush1.msra.mxu0 0.0
  %1527 = vmatprep.subr.mxu0 0.0
  %1528 = vmatpush1.msra.mxu0 0.0
  %1529 = vmatprep.subr.mxu0 0.0
  %1530 = vmatpush1.msra.mxu0 0.0
  %1531 = vmatprep.subr.mxu0 0.0
  %1532 = vmatpush1.msra.mxu0 0.0
  %1533 = vmatprep.subr.mxu0 0.0
  %1534 = vmatpush1.msra.mxu0 0.0
  %1535 = vmatprep.subr.mxu0 0.0
  %1536 = vmatpush1.msra.mxu0 0.0
  %1537 = vmatprep.subr.mxu0 0.0
  %1538 = vmatpush1.msra.mxu0 0.0
  %1539 = vmatprep.subr.mxu0 0.0
  %1540 = vmatpush1.msra.mxu0 0.0
  %1541 = vmatprep.subr.mxu0 0.0
  %1542 = vmatpush1.msra.mxu0 0.0
  %1543 = vmatprep.subr.mxu0 0.0
  %1544 = vmatpush1.msra.mxu0 0.0
  %1545 = vmatprep.subr.mxu0 0.0
  %1546 = vmatpush1.msra.mxu0 0.0
  %1547 = vmatprep.subr.mxu0 0.0
  %1548 = vmatpush1.msra.mxu0 0.0
  %1549 = vmatprep.subr.mxu0 0.0
  %1550 = vmatpush1.msra.mxu0 0.0
  %1551 = vmatprep.subr.mxu0 0.0
  %1552 = vmatpush1.msra.mxu0 0.0
  %1553 = vmatprep.subr.mxu0 0.0
  %1554 = vmatpush1.msra.mxu0 %v1518
  %1555 = vmatprep.subr.mxu0 0.0
  %1556 = vmatpush2.msra.mxu0 0.0
  %1557 = vmatprep.subr.mxu0 0.0
  %1558 = vmatpush2.msra.mxu0 0.0
  %1559 = vmatprep.subr.mxu0 0.0
  %1560 = vmatpush2.msra.mxu0 0.0
  %1561 = vmatprep.subr.mxu0 0.0
  %1562 = vmatpush2.msra.mxu0 0.0
  %1563 = vmatprep.subr.mxu0 0.0
  %1564 = vmatpush2.msra.mxu0 0.0
  %1565 = vmatprep.subr.mxu0 0.0
  %1566 = vmatpush2.msra.mxu0 0.0
  %1567 = vmatprep.subr.mxu0 0.0
  %1568 = vmatpush2.msra.mxu0 0.0
  %1569 = vmatprep.subr.mxu0 0.0
  %1570 = vmatpush2.msra.mxu0 0.0
  %1571 = vmatprep.subr.mxu0 0.0
  %1572 = vmatpush2.msra.mxu0 0.0
  %1573 = vmatprep.subr.mxu0 0.0
  %1574 = vmatpush2.msra.mxu0 0.0
  %1575 = vmatprep.subr.mxu0 0.0
  %1576 = vmatpush2.msra.mxu0 0.0
  %1577 = vmatprep.subr.mxu0 0.0
  %1578 = vmatpush2.msra.mxu0 0.0
  %1579 = vmatprep.subr.mxu0 0.0
  %1580 = vmatpush2.msra.mxu0 0.0
  %1581 = vmatprep.subr.mxu0 0.0
  %1582 = vmatpush2.msra.mxu0 0.0
  %1583 = vmatprep.subr.mxu0 0.0
  %1584 = vmatpush2.msra.mxu0 0.0
  %1585 = vmatprep.subr.mxu0 0.0
  %1586 = vmatpush2.msra.mxu0 0.0
  %1587 = vmatprep.mubr.f32.mxu0 0.0
  %1588 = vmatmul.mubr.f32.gmra.mxu0 %v1521
  %v1589 = vpop.f32.mrf.mxu0
  %v1590 = vadd.f32 0.0, %v1589
  %v1591 = vpop.f32.mrf.mxu0
  %1592 = vdwg.mxu0
  %1593 = vrot.lane.b32.xlu0 %v268, 112
  %v1594 = vpop.permute.xlu0 %1593
  %1595 = vrot.lane.b32.xlu0 %v250, 80
  %v1596 = vpop.permute.xlu0 %1595
  %v1597 = vsel %vm275, %v1594, 0
  %v1599 = vsel %vm275, %v1596, 0
  %1601 = vmatprep.subr.mxu0 0.0
  %1602 = vmatpush1.xpose.msra.mxu0 0.0
  %1603 = vmatprep.subr.mxu0 0.0
  %1604 = vmatpush1.xpose.msra.mxu0 0.0
  %1605 = vmatprep.subr.mxu0 0.0
  %1606 = vmatpush1.xpose.msra.mxu0 0.0
  %1607 = vmatprep.subr.mxu0 0.0
  %1608 = vmatpush1.xpose.msra.mxu0 0.0
  %1609 = vmatprep.subr.mxu0 0.0
  %1610 = vmatpush1.xpose.msra.mxu0 0.0
  %1611 = vmatprep.subr.mxu0 0.0
  %1612 = vmatpush1.xpose.msra.mxu0 0.0
  %1613 = vmatprep.subr.mxu0 0.0
  %1614 = vmatpush1.xpose.msra.mxu0 0.0
  %1615 = vmatprep.subr.mxu0 0.0
  %1616 = vmatpush1.xpose.msra.mxu0 0.0
  %1617 = vmatprep.subr.mxu0 0.0
  %1618 = vmatpush1.xpose.msra.mxu0 0.0
  %1619 = vmatprep.subr.mxu0 0.0
  %1620 = vmatpush1.xpose.msra.mxu0 0.0
  %1621 = vmatprep.subr.mxu0 0.0
  %1622 = vmatpush1.xpose.msra.mxu0 0.0
  %1623 = vmatprep.subr.mxu0 0.0
  %1624 = vmatpush1.xpose.msra.mxu0 0.0
  %1625 = vmatprep.subr.mxu0 0.0
  %1626 = vmatpush1.xpose.msra.mxu0 0.0
  %1627 = vmatprep.subr.mxu0 0.0
  %1628 = vmatpush1.xpose.msra.mxu0 0.0
  %1629 = vmatprep.subr.mxu0 0.0
  %1630 = vmatpush1.xpose.msra.mxu0 0.0
  %1631 = vmatprep.subr.mxu0 0.0
  %1632 = vmatpush1.xpose.msra.mxu0 %v1599
  %1633 = vmatprep.subr.mxu0 0.0
  %1634 = vmatpush2.xpose.msra.mxu0 0.0
  %1635 = vmatprep.subr.mxu0 0.0
  %1636 = vmatpush2.xpose.msra.mxu0 0.0
  %1637 = vmatprep.subr.mxu0 0.0
  %1638 = vmatpush2.xpose.msra.mxu0 0.0
  %1639 = vmatprep.subr.mxu0 0.0
  %1640 = vmatpush2.xpose.msra.mxu0 0.0
  %1641 = vmatprep.subr.mxu0 0.0
  %1642 = vmatpush2.xpose.msra.mxu0 0.0
  %1643 = vmatprep.subr.mxu0 0.0
  %1644 = vmatpush2.xpose.msra.mxu0 0.0
  %1645 = vmatprep.subr.mxu0 0.0
  %1646 = vmatpush2.xpose.msra.mxu0 0.0
  %1647 = vmatprep.subr.mxu0 0.0
  %1648 = vmatpush2.xpose.msra.mxu0 0.0
  %1649 = vmatprep.subr.mxu0 0.0
  %1650 = vmatpush2.xpose.msra.mxu0 0.0
  %1651 = vmatprep.subr.mxu0 0.0
  %1652 = vmatpush2.xpose.msra.mxu0 0.0
  %1653 = vmatprep.subr.mxu0 0.0
  %1654 = vmatpush2.xpose.msra.mxu0 0.0
  %1655 = vmatprep.subr.mxu0 0.0
  %1656 = vmatpush2.xpose.msra.mxu0 0.0
  %1657 = vmatprep.subr.mxu0 0.0
  %1658 = vmatpush2.xpose.msra.mxu0 0.0
  %1659 = vmatprep.subr.mxu0 0.0
  %1660 = vmatpush2.xpose.msra.mxu0 0.0
  %1661 = vmatprep.subr.mxu0 0.0
  %1662 = vmatpush2.xpose.msra.mxu0 0.0
  %1663 = vmatprep.subr.mxu0 0.0
  %1664 = vmatpush2.xpose.msra.mxu0 0.0
  %1665 = vmatprep.mubr.f32.mxu0 0.0
  %1666 = vmatmul.mubr.f32.gmra.mxu0 %v1597
  %v1667 = vpop.f32.mrf.mxu0
  %v1668 = vadd.f32 0.0, %v1667
  %v1669 = vpop.f32.mrf.mxu0
  %1670 = vdwg.mxu0
  %1671 = vrot.lane.b32.xlu0 %v269, 112
  %v1672 = vpop.permute.xlu0 %1671
  %1673 = vrot.lane.b32.xlu0 %v255, 80
  %v1674 = vpop.permute.xlu0 %1673
  %v1675 = vsel %vm275, %v1672, 0
  %v1677 = vsel %vm275, %v1674, 0
  %1679 = vmatprep.subr.mxu0 0.0
  %1680 = vmatpush1.xpose.msra.mxu0 0.0
  %1681 = vmatprep.subr.mxu0 0.0
  %1682 = vmatpush1.xpose.msra.mxu0 0.0
  %1683 = vmatprep.subr.mxu0 0.0
  %1684 = vmatpush1.xpose.msra.mxu0 0.0
  %1685 = vmatprep.subr.mxu0 0.0
  %1686 = vmatpush1.xpose.msra.mxu0 0.0
  %1687 = vmatprep.subr.mxu0 0.0
  %1688 = vmatpush1.xpose.msra.mxu0 0.0
  %1689 = vmatprep.subr.mxu0 0.0
  %1690 = vmatpush1.xpose.msra.mxu0 0.0
  %1691 = vmatprep.subr.mxu0 0.0
  %1692 = vmatpush1.xpose.msra.mxu0 0.0
  %1693 = vmatprep.subr.mxu0 0.0
  %1694 = vmatpush1.xpose.msra.mxu0 0.0
  %1695 = vmatprep.subr.mxu0 0.0
  %1696 = vmatpush1.xpose.msra.mxu0 0.0
  %1697 = vmatprep.subr.mxu0 0.0
  %1698 = vmatpush1.xpose.msra.mxu0 0.0
  %1699 = vmatprep.subr.mxu0 0.0
  %1700 = vmatpush1.xpose.msra.mxu0 0.0
  %1701 = vmatprep.subr.mxu0 0.0
  %1702 = vmatpush1.xpose.msra.mxu0 0.0
  %1703 = vmatprep.subr.mxu0 0.0
  %1704 = vmatpush1.xpose.msra.mxu0 0.0
  %1705 = vmatprep.subr.mxu0 0.0
  %1706 = vmatpush1.xpose.msra.mxu0 0.0
  %1707 = vmatprep.subr.mxu0 0.0
  %1708 = vmatpush1.xpose.msra.mxu0 0.0
  %1709 = vmatprep.subr.mxu0 0.0
  %1710 = vmatpush1.xpose.msra.mxu0 %v1677
  %1711 = vmatprep.subr.mxu0 0.0
  %1712 = vmatpush2.xpose.msra.mxu0 0.0
  %1713 = vmatprep.subr.mxu0 0.0
  %1714 = vmatpush2.xpose.msra.mxu0 0.0
  %1715 = vmatprep.subr.mxu0 0.0
  %1716 = vmatpush2.xpose.msra.mxu0 0.0
  %1717 = vmatprep.subr.mxu0 0.0
  %1718 = vmatpush2.xpose.msra.mxu0 0.0
  %1719 = vmatprep.subr.mxu0 0.0
  %1720 = vmatpush2.xpose.msra.mxu0 0.0
  %1721 = vmatprep.subr.mxu0 0.0
  %1722 = vmatpush2.xpose.msra.mxu0 0.0
  %1723 = vmatprep.subr.mxu0 0.0
  %1724 = vmatpush2.xpose.msra.mxu0 0.0
  %1725 = vmatprep.subr.mxu0 0.0
  %1726 = vmatpush2.xpose.msra.mxu0 0.0
  %1727 = vmatprep.subr.mxu0 0.0
  %1728 = vmatpush2.xpose.msra.mxu0 0.0
  %1729 = vmatprep.subr.mxu0 0.0
  %1730 = vmatpush2.xpose.msra.mxu0 0.0
  %1731 = vmatprep.subr.mxu0 0.0
  %1732 = vmatpush2.xpose.msra.mxu0 0.0
  %1733 = vmatprep.subr.mxu0 0.0
  %1734 = vmatpush2.xpose.msra.mxu0 0.0
  %1735 = vmatprep.subr.mxu0 0.0
  %1736 = vmatpush2.xpose.msra.mxu0 0.0
  %1737 = vmatprep.subr.mxu0 0.0
  %1738 = vmatpush2.xpose.msra.mxu0 0.0
  %1739 = vmatprep.subr.mxu0 0.0
  %1740 = vmatpush2.xpose.msra.mxu0 0.0
  %1741 = vmatprep.subr.mxu0 0.0
  %1742 = vmatpush2.xpose.msra.mxu0 0.0
  %1743 = vmatprep.mubr.f32.mxu0 0.0
  %1744 = vmatmul.mubr.f32.gmra.mxu0 %v1675
  %v1745 = vpop.f32.mrf.mxu0
  %v1746 = vadd.f32 0.0, %v1745
  %v1747 = vpop.f32.mrf.mxu0
  %1748 = vdwg.mxu0
  %1749 = vrot.lane.b32.xlu0 %v270, 112
  %v1750 = vpop.permute.xlu0 %1749
  %1751 = vrot.lane.b32.xlu0 %v260, 80
  %v1752 = vpop.permute.xlu0 %1751
  %v1753 = vsel %vm275, %v1750, 0
  %v1755 = vsel %vm275, %v1752, 0
  %1757 = vmatprep.subr.mxu0 0.0
  %1758 = vmatpush1.xpose.msra.mxu0 0.0
  %1759 = vmatprep.subr.mxu0 0.0
  %1760 = vmatpush1.xpose.msra.mxu0 0.0
  %1761 = vmatprep.subr.mxu0 0.0
  %1762 = vmatpush1.xpose.msra.mxu0 0.0
  %1763 = vmatprep.subr.mxu0 0.0
  %1764 = vmatpush1.xpose.msra.mxu0 0.0
  %1765 = vmatprep.subr.mxu0 0.0
  %1766 = vmatpush1.xpose.msra.mxu0 0.0
  %1767 = vmatprep.subr.mxu0 0.0
  %1768 = vmatpush1.xpose.msra.mxu0 0.0
  %1769 = vmatprep.subr.mxu0 0.0
  %1770 = vmatpush1.xpose.msra.mxu0 0.0
  %1771 = vmatprep.subr.mxu0 0.0
  %1772 = vmatpush1.xpose.msra.mxu0 0.0
  %1773 = vmatprep.subr.mxu0 0.0
  %1774 = vmatpush1.xpose.msra.mxu0 0.0
  %1775 = vmatprep.subr.mxu0 0.0
  %1776 = vmatpush1.xpose.msra.mxu0 0.0
  %1777 = vmatprep.subr.mxu0 0.0
  %1778 = vmatpush1.xpose.msra.mxu0 0.0
  %1779 = vmatprep.subr.mxu0 0.0
  %1780 = vmatpush1.xpose.msra.mxu0 0.0
  %1781 = vmatprep.subr.mxu0 0.0
  %1782 = vmatpush1.xpose.msra.mxu0 0.0
  %1783 = vmatprep.subr.mxu0 0.0
  %1784 = vmatpush1.xpose.msra.mxu0 0.0
  %1785 = vmatprep.subr.mxu0 0.0
  %1786 = vmatpush1.xpose.msra.mxu0 0.0
  %1787 = vmatprep.subr.mxu0 0.0
  %1788 = vmatpush1.xpose.msra.mxu0 %v1755
  %1789 = vmatprep.subr.mxu0 0.0
  %1790 = vmatpush2.xpose.msra.mxu0 0.0
  %1791 = vmatprep.subr.mxu0 0.0
  %1792 = vmatpush2.xpose.msra.mxu0 0.0
  %1793 = vmatprep.subr.mxu0 0.0
  %1794 = vmatpush2.xpose.msra.mxu0 0.0
  %1795 = vmatprep.subr.mxu0 0.0
  %1796 = vmatpush2.xpose.msra.mxu0 0.0
  %1797 = vmatprep.subr.mxu0 0.0
  %1798 = vmatpush2.xpose.msra.mxu0 0.0
  %1799 = vmatprep.subr.mxu0 0.0
  %1800 = vmatpush2.xpose.msra.mxu0 0.0
  %1801 = vmatprep.subr.mxu0 0.0
  %1802 = vmatpush2.xpose.msra.mxu0 0.0
  %1803 = vmatprep.subr.mxu0 0.0
  %1804 = vmatpush2.xpose.msra.mxu0 0.0
  %1805 = vmatprep.subr.mxu0 0.0
  %1806 = vmatpush2.xpose.msra.mxu0 0.0
  %1807 = vmatprep.subr.mxu0 0.0
  %1808 = vmatpush2.xpose.msra.mxu0 0.0
  %1809 = vmatprep.subr.mxu0 0.0
  %1810 = vmatpush2.xpose.msra.mxu0 0.0
  %1811 = vmatprep.subr.mxu0 0.0
  %1812 = vmatpush2.xpose.msra.mxu0 0.0
  %1813 = vmatprep.subr.mxu0 0.0
  %1814 = vmatpush2.xpose.msra.mxu0 0.0
  %1815 = vmatprep.subr.mxu0 0.0
  %1816 = vmatpush2.xpose.msra.mxu0 0.0
  %1817 = vmatprep.subr.mxu0 0.0
  %1818 = vmatpush2.xpose.msra.mxu0 0.0
  %1819 = vmatprep.subr.mxu0 0.0
  %1820 = vmatpush2.xpose.msra.mxu0 0.0
  %1821 = vmatprep.mubr.f32.mxu0 0.0
  %1822 = vmatmul.mubr.f32.gmra.mxu0 %v1753
  %v1823 = vpop.f32.mrf.mxu0
  %v1824 = vadd.f32 0.0, %v1823
  %v1825 = vpop.f32.mrf.mxu0
  %1826 = vdwg.mxu0
  %1827 = vrot.lane.b32.xlu0 %v271, 112
  %v1828 = vpop.permute.xlu0 %1827
  %1829 = vrot.lane.b32.xlu0 %v265, 80
  %v1830 = vpop.permute.xlu0 %1829
  %v1831 = vsel %vm275, %v1828, 0
  %v1833 = vsel %vm275, %v1830, 0
  %1835 = vmatprep.subr.mxu0 0.0
  %1836 = vmatpush1.xpose.msra.mxu0 0.0
  %1837 = vmatprep.subr.mxu0 0.0
  %1838 = vmatpush1.xpose.msra.mxu0 0.0
  %1839 = vmatprep.subr.mxu0 0.0
  %1840 = vmatpush1.xpose.msra.mxu0 0.0
  %1841 = vmatprep.subr.mxu0 0.0
  %1842 = vmatpush1.xpose.msra.mxu0 0.0
  %1843 = vmatprep.subr.mxu0 0.0
  %1844 = vmatpush1.xpose.msra.mxu0 0.0
  %1845 = vmatprep.subr.mxu0 0.0
  %1846 = vmatpush1.xpose.msra.mxu0 0.0
  %1847 = vmatprep.subr.mxu0 0.0
  %1848 = vmatpush1.xpose.msra.mxu0 0.0
  %1849 = vmatprep.subr.mxu0 0.0
  %1850 = vmatpush1.xpose.msra.mxu0 0.0
  %1851 = vmatprep.subr.mxu0 0.0
  %1852 = vmatpush1.xpose.msra.mxu0 0.0
  %1853 = vmatprep.subr.mxu0 0.0
  %1854 = vmatpush1.xpose.msra.mxu0 0.0
  %1855 = vmatprep.subr.mxu0 0.0
  %1856 = vmatpush1.xpose.msra.mxu0 0.0
  %1857 = vmatprep.subr.mxu0 0.0
  %1858 = vmatpush1.xpose.msra.mxu0 0.0
  %1859 = vmatprep.subr.mxu0 0.0
  %1860 = vmatpush1.xpose.msra.mxu0 0.0
  %1861 = vmatprep.subr.mxu0 0.0
  %1862 = vmatpush1.xpose.msra.mxu0 0.0
  %1863 = vmatprep.subr.mxu0 0.0
  %1864 = vmatpush1.xpose.msra.mxu0 0.0
  %1865 = vmatprep.subr.mxu0 0.0
  %1866 = vmatpush1.xpose.msra.mxu0 %v1833
  %1867 = vmatprep.subr.mxu0 0.0
  %1868 = vmatpush2.xpose.msra.mxu0 0.0
  %1869 = vmatprep.subr.mxu0 0.0
  %1870 = vmatpush2.xpose.msra.mxu0 0.0
  %1871 = vmatprep.subr.mxu0 0.0
  %1872 = vmatpush2.xpose.msra.mxu0 0.0
  %1873 = vmatprep.subr.mxu0 0.0
  %1874 = vmatpush2.xpose.msra.mxu0 0.0
  %1875 = vmatprep.subr.mxu0 0.0
  %1876 = vmatpush2.xpose.msra.mxu0 0.0
  %1877 = vmatprep.subr.mxu0 0.0
  %1878 = vmatpush2.xpose.msra.mxu0 0.0
  %1879 = vmatprep.subr.mxu0 0.0
  %1880 = vmatpush2.xpose.msra.mxu0 0.0
  %1881 = vmatprep.subr.mxu0 0.0
  %1882 = vmatpush2.xpose.msra.mxu0 0.0
  %1883 = vmatprep.subr.mxu0 0.0
  %1884 = vmatpush2.xpose.msra.mxu0 0.0
  %1885 = vmatprep.subr.mxu0 0.0
  %1886 = vmatpush2.xpose.msra.mxu0 0.0
  %1887 = vmatprep.subr.mxu0 0.0
  %1888 = vmatpush2.xpose.msra.mxu0 0.0
  %1889 = vmatprep.subr.mxu0 0.0
  %1890 = vmatpush2.xpose.msra.mxu0 0.0
  %1891 = vmatprep.subr.mxu0 0.0
  %1892 = vmatpush2.xpose.msra.mxu0 0.0
  %1893 = vmatprep.subr.mxu0 0.0
  %1894 = vmatpush2.xpose.msra.mxu0 0.0
  %1895 = vmatprep.subr.mxu0 0.0
  %1896 = vmatpush2.xpose.msra.mxu0 0.0
  %1897 = vmatprep.subr.mxu0 0.0
  %1898 = vmatpush2.xpose.msra.mxu0 0.0
  %1899 = vmatprep.mubr.f32.mxu0 0.0
  %1900 = vmatmul.mubr.f32.gmra.mxu0 %v1831
  %v1901 = vpop.f32.mrf.mxu0
  %v1902 = vadd.f32 0.0, %v1901
  %v1903 = vpop.f32.mrf.mxu0
  %1904 = vdwg.mxu0
  %v1905 = vsel %vm275, %v1668, -inf
  %1906 = vmax.xlane.f32.xlu0 %v1905
  %v1907 = vpop.xlane.xlu0 %1906
  %v1908 = vsel %vm275, %v1746, -inf
  %1909 = vmax.xlane.f32.xlu0 %v1908
  %v1910 = vpop.xlane.xlu0 %1909
  %v1911 = vsel %vm275, %v1824, -inf
  %1912 = vmax.xlane.f32.xlu0 %v1911
  %v1913 = vpop.xlane.xlu0 %1912
  %v1914 = vsel %vm275, %v1902, -inf
  %1915 = vmax.xlane.f32.xlu0 %v1914
  %v1916 = vpop.xlane.xlu0 %1915
  %v1917 = vsub.f32 %v1668, %v1907
  %v1918 = vsub.f32 %v1746, %v1910
  %v1919 = vsub.f32 %v1824, %v1913
  %v1920 = vsub.f32 %v1902, %v1916
  %v1921 = vmul.f32 %v1917, 1.442695
  %v1922 = vpow.pop %v1921
  %v1923 = vmul.f32 %v1918, 1.442695
  %v1924 = vpow.pop %v1923
  %v1925 = vmul.f32 %v1919, 1.442695
  %v1926 = vpow.pop %v1925
  %v1927 = vmul.f32 %v1920, 1.442695
  %v1928 = vpow.pop %v1927
  %v1929 = vsel %vm275, %v1922, 0.0
  %1930 = vadd.xlane.f32.xlu0 %v1929
  %v1931 = vpop.xlane.xlu0 %1930
  %v1932 = vsel %vm275, %v1924, 0.0
  %1933 = vadd.xlane.f32.xlu0 %v1932
  %v1934 = vpop.xlane.xlu0 %1933
  %v1935 = vsel %vm275, %v1926, 0.0
  %1936 = vadd.xlane.f32.xlu0 %v1935
  %v1937 = vpop.xlane.xlu0 %1936
  %v1938 = vsel %vm275, %v1928, 0.0
  %1939 = vadd.xlane.f32.xlu0 %v1938
  %v1940 = vpop.xlane.xlu0 %1939
  %v1941 = vrcp.pop %v1931
  %v1942 = vrcp.pop %v1934
  %v1943 = vrcp.pop %v1937
  %v1944 = vrcp.pop %v1940
  %v1945 = vmul.f32 %v1922, %v1941
  %v1946 = vmul.f32 %v1924, %v1942
  %v1947 = vmul.f32 %v1926, %v1943
  %v1948 = vmul.f32 %v1928, %v1944
  %1949 = vrot.lane.b32.xlu0 %v250, 48
  %v1950 = vpop.permute.xlu0 %1949
  %v1953 = vsel %vm275, %v1945, 0
  %1955 = vmatprep.subr.mxu0 0.0
  %1956 = vmatpush1.msra.mxu0 0.0
  %1957 = vmatprep.subr.mxu0 0.0
  %1958 = vmatpush1.msra.mxu0 0.0
  %1959 = vmatprep.subr.mxu0 0.0
  %1960 = vmatpush1.msra.mxu0 0.0
  %1961 = vmatprep.subr.mxu0 0.0
  %1962 = vmatpush1.msra.mxu0 0.0
  %1963 = vmatprep.subr.mxu0 0.0
  %1964 = vmatpush1.msra.mxu0 0.0
  %1965 = vmatprep.subr.mxu0 0.0
  %1966 = vmatpush1.msra.mxu0 0.0
  %1967 = vmatprep.subr.mxu0 0.0
  %1968 = vmatpush1.msra.mxu0 0.0
  %1969 = vmatprep.subr.mxu0 0.0
  %1970 = vmatpush1.msra.mxu0 0.0
  %1971 = vmatprep.subr.mxu0 0.0
  %1972 = vmatpush1.msra.mxu0 0.0
  %1973 = vmatprep.subr.mxu0 0.0
  %1974 = vmatpush1.msra.mxu0 0.0
  %1975 = vmatprep.subr.mxu0 0.0
  %1976 = vmatpush1.msra.mxu0 0.0
  %1977 = vmatprep.subr.mxu0 0.0
  %1978 = vmatpush1.msra.mxu0 0.0
  %1979 = vmatprep.subr.mxu0 0.0
  %1980 = vmatpush1.msra.mxu0 0.0
  %1981 = vmatprep.subr.mxu0 0.0
  %1982 = vmatpush1.msra.mxu0 0.0
  %1983 = vmatprep.subr.mxu0 0.0
  %1984 = vmatpush1.msra.mxu0 0.0
  %1985 = vmatprep.subr.mxu0 0.0
  %1986 = vmatpush1.msra.mxu0 %v1950
  %1987 = vmatprep.subr.mxu0 0.0
  %1988 = vmatpush2.msra.mxu0 0.0
  %1989 = vmatprep.subr.mxu0 0.0
  %1990 = vmatpush2.msra.mxu0 0.0
  %1991 = vmatprep.subr.mxu0 0.0
  %1992 = vmatpush2.msra.mxu0 0.0
  %1993 = vmatprep.subr.mxu0 0.0
  %1994 = vmatpush2.msra.mxu0 0.0
  %1995 = vmatprep.subr.mxu0 0.0
  %1996 = vmatpush2.msra.mxu0 0.0
  %1997 = vmatprep.subr.mxu0 0.0
  %1998 = vmatpush2.msra.mxu0 0.0
  %1999 = vmatprep.subr.mxu0 0.0
  %2000 = vmatpush2.msra.mxu0 0.0
  %2001 = vmatprep.subr.mxu0 0.0
  %2002 = vmatpush2.msra.mxu0 0.0
  %2003 = vmatprep.subr.mxu0 0.0
  %2004 = vmatpush2.msra.mxu0 0.0
  %2005 = vmatprep.subr.mxu0 0.0
  %2006 = vmatpush2.msra.mxu0 0.0
  %2007 = vmatprep.subr.mxu0 0.0
  %2008 = vmatpush2.msra.mxu0 0.0
  %2009 = vmatprep.subr.mxu0 0.0
  %2010 = vmatpush2.msra.mxu0 0.0
  %2011 = vmatprep.subr.mxu0 0.0
  %2012 = vmatpush2.msra.mxu0 0.0
  %2013 = vmatprep.subr.mxu0 0.0
  %2014 = vmatpush2.msra.mxu0 0.0
  %2015 = vmatprep.subr.mxu0 0.0
  %2016 = vmatpush2.msra.mxu0 0.0
  %2017 = vmatprep.subr.mxu0 0.0
  %2018 = vmatpush2.msra.mxu0 0.0
  %2019 = vmatprep.mubr.f32.mxu0 0.0
  %2020 = vmatmul.mubr.f32.gmra.mxu0 %v1953
  %v2021 = vpop.f32.mrf.mxu0
  %v2022 = vadd.f32 0.0, %v2021
  %v2023 = vpop.f32.mrf.mxu0
  %2024 = vdwg.mxu0
  %2025 = vrot.lane.b32.xlu0 %v255, 48
  %v2026 = vpop.permute.xlu0 %2025
  %v2029 = vsel %vm275, %v1946, 0
  %2031 = vmatprep.subr.mxu0 0.0
  %2032 = vmatpush1.msra.mxu0 0.0
  %2033 = vmatprep.subr.mxu0 0.0
  %2034 = vmatpush1.msra.mxu0 0.0
  %2035 = vmatprep.subr.mxu0 0.0
  %2036 = vmatpush1.msra.mxu0 0.0
  %2037 = vmatprep.subr.mxu0 0.0
  %2038 = vmatpush1.msra.mxu0 0.0
  %2039 = vmatprep.subr.mxu0 0.0
  %2040 = vmatpush1.msra.mxu0 0.0
  %2041 = vmatprep.subr.mxu0 0.0
  %2042 = vmatpush1.msra.mxu0 0.0
  %2043 = vmatprep.subr.mxu0 0.0
  %2044 = vmatpush1.msra.mxu0 0.0
  %2045 = vmatprep.subr.mxu0 0.0
  %2046 = vmatpush1.msra.mxu0 0.0
  %2047 = vmatprep.subr.mxu0 0.0
  %2048 = vmatpush1.msra.mxu0 0.0
  %2049 = vmatprep.subr.mxu0 0.0
  %2050 = vmatpush1.msra.mxu0 0.0
  %2051 = vmatprep.subr.mxu0 0.0
  %2052 = vmatpush1.msra.mxu0 0.0
  %2053 = vmatprep.subr.mxu0 0.0
  %2054 = vmatpush1.msra.mxu0 0.0
  %2055 = vmatprep.subr.mxu0 0.0
  %2056 = vmatpush1.msra.mxu0 0.0
  %2057 = vmatprep.subr.mxu0 0.0
  %2058 = vmatpush1.msra.mxu0 0.0
  %2059 = vmatprep.subr.mxu0 0.0
  %2060 = vmatpush1.msra.mxu0 0.0
  %2061 = vmatprep.subr.mxu0 0.0
  %2062 = vmatpush1.msra.mxu0 %v2026
  %2063 = vmatprep.subr.mxu0 0.0
  %2064 = vmatpush2.msra.mxu0 0.0
  %2065 = vmatprep.subr.mxu0 0.0
  %2066 = vmatpush2.msra.mxu0 0.0
  %2067 = vmatprep.subr.mxu0 0.0
  %2068 = vmatpush2.msra.mxu0 0.0
  %2069 = vmatprep.subr.mxu0 0.0
  %2070 = vmatpush2.msra.mxu0 0.0
  %2071 = vmatprep.subr.mxu0 0.0
  %2072 = vmatpush2.msra.mxu0 0.0
  %2073 = vmatprep.subr.mxu0 0.0
  %2074 = vmatpush2.msra.mxu0 0.0
  %2075 = vmatprep.subr.mxu0 0.0
  %2076 = vmatpush2.msra.mxu0 0.0
  %2077 = vmatprep.subr.mxu0 0.0
  %2078 = vmatpush2.msra.mxu0 0.0
  %2079 = vmatprep.subr.mxu0 0.0
  %2080 = vmatpush2.msra.mxu0 0.0
  %2081 = vmatprep.subr.mxu0 0.0
  %2082 = vmatpush2.msra.mxu0 0.0
  %2083 = vmatprep.subr.mxu0 0.0
  %2084 = vmatpush2.msra.mxu0 0.0
  %2085 = vmatprep.subr.mxu0 0.0
  %2086 = vmatpush2.msra.mxu0 0.0
  %2087 = vmatprep.subr.mxu0 0.0
  %2088 = vmatpush2.msra.mxu0 0.0
  %2089 = vmatprep.subr.mxu0 0.0
  %2090 = vmatpush2.msra.mxu0 0.0
  %2091 = vmatprep.subr.mxu0 0.0
  %2092 = vmatpush2.msra.mxu0 0.0
  %2093 = vmatprep.subr.mxu0 0.0
  %2094 = vmatpush2.msra.mxu0 0.0
  %2095 = vmatprep.mubr.f32.mxu0 0.0
  %2096 = vmatmul.mubr.f32.gmra.mxu0 %v2029
  %v2097 = vpop.f32.mrf.mxu0
  %v2098 = vadd.f32 0.0, %v2097
  %v2099 = vpop.f32.mrf.mxu0
  %2100 = vdwg.mxu0
  %2101 = vrot.lane.b32.xlu0 %v260, 48
  %v2102 = vpop.permute.xlu0 %2101
  %v2105 = vsel %vm275, %v1947, 0
  %2107 = vmatprep.subr.mxu0 0.0
  %2108 = vmatpush1.msra.mxu0 0.0
  %2109 = vmatprep.subr.mxu0 0.0
  %2110 = vmatpush1.msra.mxu0 0.0
  %2111 = vmatprep.subr.mxu0 0.0
  %2112 = vmatpush1.msra.mxu0 0.0
  %2113 = vmatprep.subr.mxu0 0.0
  %2114 = vmatpush1.msra.mxu0 0.0
  %2115 = vmatprep.subr.mxu0 0.0
  %2116 = vmatpush1.msra.mxu0 0.0
  %2117 = vmatprep.subr.mxu0 0.0
  %2118 = vmatpush1.msra.mxu0 0.0
  %2119 = vmatprep.subr.mxu0 0.0
  %2120 = vmatpush1.msra.mxu0 0.0
  %2121 = vmatprep.subr.mxu0 0.0
  %2122 = vmatpush1.msra.mxu0 0.0
  %2123 = vmatprep.subr.mxu0 0.0
  %2124 = vmatpush1.msra.mxu0 0.0
  %2125 = vmatprep.subr.mxu0 0.0
  %2126 = vmatpush1.msra.mxu0 0.0
  %2127 = vmatprep.subr.mxu0 0.0
  %2128 = vmatpush1.msra.mxu0 0.0
  %2129 = vmatprep.subr.mxu0 0.0
  %2130 = vmatpush1.msra.mxu0 0.0
  %2131 = vmatprep.subr.mxu0 0.0
  %2132 = vmatpush1.msra.mxu0 0.0
  %2133 = vmatprep.subr.mxu0 0.0
  %2134 = vmatpush1.msra.mxu0 0.0
  %2135 = vmatprep.subr.mxu0 0.0
  %2136 = vmatpush1.msra.mxu0 0.0
  %2137 = vmatprep.subr.mxu0 0.0
  %2138 = vmatpush1.msra.mxu0 %v2102
  %2139 = vmatprep.subr.mxu0 0.0
  %2140 = vmatpush2.msra.mxu0 0.0
  %2141 = vmatprep.subr.mxu0 0.0
  %2142 = vmatpush2.msra.mxu0 0.0
  %2143 = vmatprep.subr.mxu0 0.0
  %2144 = vmatpush2.msra.mxu0 0.0
  %2145 = vmatprep.subr.mxu0 0.0
  %2146 = vmatpush2.msra.mxu0 0.0
  %2147 = vmatprep.subr.mxu0 0.0
  %2148 = vmatpush2.msra.mxu0 0.0
  %2149 = vmatprep.subr.mxu0 0.0
  %2150 = vmatpush2.msra.mxu0 0.0
  %2151 = vmatprep.subr.mxu0 0.0
  %2152 = vmatpush2.msra.mxu0 0.0
  %2153 = vmatprep.subr.mxu0 0.0
  %2154 = vmatpush2.msra.mxu0 0.0
  %2155 = vmatprep.subr.mxu0 0.0
  %2156 = vmatpush2.msra.mxu0 0.0
  %2157 = vmatprep.subr.mxu0 0.0
  %2158 = vmatpush2.msra.mxu0 0.0
  %2159 = vmatprep.subr.mxu0 0.0
  %2160 = vmatpush2.msra.mxu0 0.0
  %2161 = vmatprep.subr.mxu0 0.0
  %2162 = vmatpush2.msra.mxu0 0.0
  %2163 = vmatprep.subr.mxu0 0.0
  %2164 = vmatpush2.msra.mxu0 0.0
  %2165 = vmatprep.subr.mxu0 0.0
  %2166 = vmatpush2.msra.mxu0 0.0
  %2167 = vmatprep.subr.mxu0 0.0
  %2168 = vmatpush2.msra.mxu0 0.0
  %2169 = vmatprep.subr.mxu0 0.0
  %2170 = vmatpush2.msra.mxu0 0.0
  %2171 = vmatprep.mubr.f32.mxu0 0.0
  %2172 = vmatmul.mubr.f32.gmra.mxu0 %v2105
  %v2173 = vpop.f32.mrf.mxu0
  %v2174 = vadd.f32 0.0, %v2173
  %v2175 = vpop.f32.mrf.mxu0
  %2176 = vdwg.mxu0
  %2177 = vrot.lane.b32.xlu0 %v265, 48
  %v2178 = vpop.permute.xlu0 %2177
  %v2181 = vsel %vm275, %v1948, 0
  %2183 = vmatprep.subr.mxu0 0.0
  %2184 = vmatpush1.msra.mxu0 0.0
  %2185 = vmatprep.subr.mxu0 0.0
  %2186 = vmatpush1.msra.mxu0 0.0
  %2187 = vmatprep.subr.mxu0 0.0
  %2188 = vmatpush1.msra.mxu0 0.0
  %2189 = vmatprep.subr.mxu0 0.0
  %2190 = vmatpush1.msra.mxu0 0.0
  %2191 = vmatprep.subr.mxu0 0.0
  %2192 = vmatpush1.msra.mxu0 0.0
  %2193 = vmatprep.subr.mxu0 0.0
  %2194 = vmatpush1.msra.mxu0 0.0
  %2195 = vmatprep.subr.mxu0 0.0
  %2196 = vmatpush1.msra.mxu0 0.0
  %2197 = vmatprep.subr.mxu0 0.0
  %2198 = vmatpush1.msra.mxu0 0.0
  %2199 = vmatprep.subr.mxu0 0.0
  %2200 = vmatpush1.msra.mxu0 0.0
  %2201 = vmatprep.subr.mxu0 0.0
  %2202 = vmatpush1.msra.mxu0 0.0
  %2203 = vmatprep.subr.mxu0 0.0
  %2204 = vmatpush1.msra.mxu0 0.0
  %2205 = vmatprep.subr.mxu0 0.0
  %2206 = vmatpush1.msra.mxu0 0.0
  %2207 = vmatprep.subr.mxu0 0.0
  %2208 = vmatpush1.msra.mxu0 0.0
  %2209 = vmatprep.subr.mxu0 0.0
  %2210 = vmatpush1.msra.mxu0 0.0
  %2211 = vmatprep.subr.mxu0 0.0
  %2212 = vmatpush1.msra.mxu0 0.0
  %2213 = vmatprep.subr.mxu0 0.0
  %2214 = vmatpush1.msra.mxu0 %v2178
  %2215 = vmatprep.subr.mxu0 0.0
  %2216 = vmatpush2.msra.mxu0 0.0
  %2217 = vmatprep.subr.mxu0 0.0
  %2218 = vmatpush2.msra.mxu0 0.0
  %2219 = vmatprep.subr.mxu0 0.0
  %2220 = vmatpush2.msra.mxu0 0.0
  %2221 = vmatprep.subr.mxu0 0.0
  %2222 = vmatpush2.msra.mxu0 0.0
  %2223 = vmatprep.subr.mxu0 0.0
  %2224 = vmatpush2.msra.mxu0 0.0
  %2225 = vmatprep.subr.mxu0 0.0
  %2226 = vmatpush2.msra.mxu0 0.0
  %2227 = vmatprep.subr.mxu0 0.0
  %2228 = vmatpush2.msra.mxu0 0.0
  %2229 = vmatprep.subr.mxu0 0.0
  %2230 = vmatpush2.msra.mxu0 0.0
  %2231 = vmatprep.subr.mxu0 0.0
  %2232 = vmatpush2.msra.mxu0 0.0
  %2233 = vmatprep.subr.mxu0 0.0
  %2234 = vmatpush2.msra.mxu0 0.0
  %2235 = vmatprep.subr.mxu0 0.0
  %2236 = vmatpush2.msra.mxu0 0.0
  %2237 = vmatprep.subr.mxu0 0.0
  %2238 = vmatpush2.msra.mxu0 0.0
  %2239 = vmatprep.subr.mxu0 0.0
  %2240 = vmatpush2.msra.mxu0 0.0
  %2241 = vmatprep.subr.mxu0 0.0
  %2242 = vmatpush2.msra.mxu0 0.0
  %2243 = vmatprep.subr.mxu0 0.0
  %2244 = vmatpush2.msra.mxu0 0.0
  %2245 = vmatprep.subr.mxu0 0.0
  %2246 = vmatpush2.msra.mxu0 0.0
  %2247 = vmatprep.mubr.f32.mxu0 0.0
  %2248 = vmatmul.mubr.f32.gmra.mxu0 %v2181
  %v2249 = vpop.f32.mrf.mxu0
  %v2250 = vadd.f32 0.0, %v2249
  %v2251 = vpop.f32.mrf.mxu0
  %2252 = vdwg.mxu0
  %2253 = vrot.lane.b32.xlu0 %v268, 104
  %v2254 = vpop.permute.xlu0 %2253
  %2255 = vrot.lane.b32.xlu0 %v250, 72
  %v2256 = vpop.permute.xlu0 %2255
  %v2257 = vsel %vm275, %v2254, 0
  %v2259 = vsel %vm275, %v2256, 0
  %2261 = vmatprep.subr.mxu0 0.0
  %2262 = vmatpush1.xpose.msra.mxu0 0.0
  %2263 = vmatprep.subr.mxu0 0.0
  %2264 = vmatpush1.xpose.msra.mxu0 0.0
  %2265 = vmatprep.subr.mxu0 0.0
  %2266 = vmatpush1.xpose.msra.mxu0 0.0
  %2267 = vmatprep.subr.mxu0 0.0
  %2268 = vmatpush1.xpose.msra.mxu0 0.0
  %2269 = vmatprep.subr.mxu0 0.0
  %2270 = vmatpush1.xpose.msra.mxu0 0.0
  %2271 = vmatprep.subr.mxu0 0.0
  %2272 = vmatpush1.xpose.msra.mxu0 0.0
  %2273 = vmatprep.subr.mxu0 0.0
  %2274 = vmatpush1.xpose.msra.mxu0 0.0
  %2275 = vmatprep.subr.mxu0 0.0
  %2276 = vmatpush1.xpose.msra.mxu0 0.0
  %2277 = vmatprep.subr.mxu0 0.0
  %2278 = vmatpush1.xpose.msra.mxu0 0.0
  %2279 = vmatprep.subr.mxu0 0.0
  %2280 = vmatpush1.xpose.msra.mxu0 0.0
  %2281 = vmatprep.subr.mxu0 0.0
  %2282 = vmatpush1.xpose.msra.mxu0 0.0
  %2283 = vmatprep.subr.mxu0 0.0
  %2284 = vmatpush1.xpose.msra.mxu0 0.0
  %2285 = vmatprep.subr.mxu0 0.0
  %2286 = vmatpush1.xpose.msra.mxu0 0.0
  %2287 = vmatprep.subr.mxu0 0.0
  %2288 = vmatpush1.xpose.msra.mxu0 0.0
  %2289 = vmatprep.subr.mxu0 0.0
  %2290 = vmatpush1.xpose.msra.mxu0 0.0
  %2291 = vmatprep.subr.mxu0 0.0
  %2292 = vmatpush1.xpose.msra.mxu0 %v2259
  %2293 = vmatprep.subr.mxu0 0.0
  %2294 = vmatpush2.xpose.msra.mxu0 0.0
  %2295 = vmatprep.subr.mxu0 0.0
  %2296 = vmatpush2.xpose.msra.mxu0 0.0
  %2297 = vmatprep.subr.mxu0 0.0
  %2298 = vmatpush2.xpose.msra.mxu0 0.0
  %2299 = vmatprep.subr.mxu0 0.0
  %2300 = vmatpush2.xpose.msra.mxu0 0.0
  %2301 = vmatprep.subr.mxu0 0.0
  %2302 = vmatpush2.xpose.msra.mxu0 0.0
  %2303 = vmatprep.subr.mxu0 0.0
  %2304 = vmatpush2.xpose.msra.mxu0 0.0
  %2305 = vmatprep.subr.mxu0 0.0
  %2306 = vmatpush2.xpose.msra.mxu0 0.0
  %2307 = vmatprep.subr.mxu0 0.0
  %2308 = vmatpush2.xpose.msra.mxu0 0.0
  %2309 = vmatprep.subr.mxu0 0.0
  %2310 = vmatpush2.xpose.msra.mxu0 0.0
  %2311 = vmatprep.subr.mxu0 0.0
  %2312 = vmatpush2.xpose.msra.mxu0 0.0
  %2313 = vmatprep.subr.mxu0 0.0
  %2314 = vmatpush2.xpose.msra.mxu0 0.0
  %2315 = vmatprep.subr.mxu0 0.0
  %2316 = vmatpush2.xpose.msra.mxu0 0.0
  %2317 = vmatprep.subr.mxu0 0.0
  %2318 = vmatpush2.xpose.msra.mxu0 0.0
  %2319 = vmatprep.subr.mxu0 0.0
  %2320 = vmatpush2.xpose.msra.mxu0 0.0
  %2321 = vmatprep.subr.mxu0 0.0
  %2322 = vmatpush2.xpose.msra.mxu0 0.0
  %2323 = vmatprep.subr.mxu0 0.0
  %2324 = vmatpush2.xpose.msra.mxu0 0.0
  %2325 = vmatprep.mubr.f32.mxu0 0.0
  %2326 = vmatmul.mubr.f32.gmra.mxu0 %v2257
  %v2327 = vpop.f32.mrf.mxu0
  %v2328 = vadd.f32 0.0, %v2327
  %v2329 = vpop.f32.mrf.mxu0
  %2330 = vdwg.mxu0
  %2331 = vrot.lane.b32.xlu0 %v269, 104
  %v2332 = vpop.permute.xlu0 %2331
  %2333 = vrot.lane.b32.xlu0 %v255, 72
  %v2334 = vpop.permute.xlu0 %2333
  %v2335 = vsel %vm275, %v2332, 0
  %v2337 = vsel %vm275, %v2334, 0
  %2339 = vmatprep.subr.mxu0 0.0
  %2340 = vmatpush1.xpose.msra.mxu0 0.0
  %2341 = vmatprep.subr.mxu0 0.0
  %2342 = vmatpush1.xpose.msra.mxu0 0.0
  %2343 = vmatprep.subr.mxu0 0.0
  %2344 = vmatpush1.xpose.msra.mxu0 0.0
  %2345 = vmatprep.subr.mxu0 0.0
  %2346 = vmatpush1.xpose.msra.mxu0 0.0
  %2347 = vmatprep.subr.mxu0 0.0
  %2348 = vmatpush1.xpose.msra.mxu0 0.0
  %2349 = vmatprep.subr.mxu0 0.0
  %2350 = vmatpush1.xpose.msra.mxu0 0.0
  %2351 = vmatprep.subr.mxu0 0.0
  %2352 = vmatpush1.xpose.msra.mxu0 0.0
  %2353 = vmatprep.subr.mxu0 0.0
  %2354 = vmatpush1.xpose.msra.mxu0 0.0
  %2355 = vmatprep.subr.mxu0 0.0
  %2356 = vmatpush1.xpose.msra.mxu0 0.0
  %2357 = vmatprep.subr.mxu0 0.0
  %2358 = vmatpush1.xpose.msra.mxu0 0.0
  %2359 = vmatprep.subr.mxu0 0.0
  %2360 = vmatpush1.xpose.msra.mxu0 0.0
  %2361 = vmatprep.subr.mxu0 0.0
  %2362 = vmatpush1.xpose.msra.mxu0 0.0
  %2363 = vmatprep.subr.mxu0 0.0
  %2364 = vmatpush1.xpose.msra.mxu0 0.0
  %2365 = vmatprep.subr.mxu0 0.0
  %2366 = vmatpush1.xpose.msra.mxu0 0.0
  %2367 = vmatprep.subr.mxu0 0.0
  %2368 = vmatpush1.xpose.msra.mxu0 0.0
  %2369 = vmatprep.subr.mxu0 0.0
  %2370 = vmatpush1.xpose.msra.mxu0 %v2337
  %2371 = vmatprep.subr.mxu0 0.0
  %2372 = vmatpush2.xpose.msra.mxu0 0.0
  %2373 = vmatprep.subr.mxu0 0.0
  %2374 = vmatpush2.xpose.msra.mxu0 0.0
  %2375 = vmatprep.subr.mxu0 0.0
  %2376 = vmatpush2.xpose.msra.mxu0 0.0
  %2377 = vmatprep.subr.mxu0 0.0
  %2378 = vmatpush2.xpose.msra.mxu0 0.0
  %2379 = vmatprep.subr.mxu0 0.0
  %2380 = vmatpush2.xpose.msra.mxu0 0.0
  %2381 = vmatprep.subr.mxu0 0.0
  %2382 = vmatpush2.xpose.msra.mxu0 0.0
  %2383 = vmatprep.subr.mxu0 0.0
  %2384 = vmatpush2.xpose.msra.mxu0 0.0
  %2385 = vmatprep.subr.mxu0 0.0
  %2386 = vmatpush2.xpose.msra.mxu0 0.0
  %2387 = vmatprep.subr.mxu0 0.0
  %2388 = vmatpush2.xpose.msra.mxu0 0.0
  %2389 = vmatprep.subr.mxu0 0.0
  %2390 = vmatpush2.xpose.msra.mxu0 0.0
  %2391 = vmatprep.subr.mxu0 0.0
  %2392 = vmatpush2.xpose.msra.mxu0 0.0
  %2393 = vmatprep.subr.mxu0 0.0
  %2394 = vmatpush2.xpose.msra.mxu0 0.0
  %2395 = vmatprep.subr.mxu0 0.0
  %2396 = vmatpush2.xpose.msra.mxu0 0.0
  %2397 = vmatprep.subr.mxu0 0.0
  %2398 = vmatpush2.xpose.msra.mxu0 0.0
  %2399 = vmatprep.subr.mxu0 0.0
  %2400 = vmatpush2.xpose.msra.mxu0 0.0
  %2401 = vmatprep.subr.mxu0 0.0
  %2402 = vmatpush2.xpose.msra.mxu0 0.0
  %2403 = vmatprep.mubr.f32.mxu0 0.0
  %2404 = vmatmul.mubr.f32.gmra.mxu0 %v2335
  %v2405 = vpop.f32.mrf.mxu0
  %v2406 = vadd.f32 0.0, %v2405
  %v2407 = vpop.f32.mrf.mxu0
  %2408 = vdwg.mxu0
  %2409 = vrot.lane.b32.xlu0 %v270, 104
  %v2410 = vpop.permute.xlu0 %2409
  %2411 = vrot.lane.b32.xlu0 %v260, 72
  %v2412 = vpop.permute.xlu0 %2411
  %v2413 = vsel %vm275, %v2410, 0
  %v2415 = vsel %vm275, %v2412, 0
  %2417 = vmatprep.subr.mxu0 0.0
  %2418 = vmatpush1.xpose.msra.mxu0 0.0
  %2419 = vmatprep.subr.mxu0 0.0
  %2420 = vmatpush1.xpose.msra.mxu0 0.0
  %2421 = vmatprep.subr.mxu0 0.0
  %2422 = vmatpush1.xpose.msra.mxu0 0.0
  %2423 = vmatprep.subr.mxu0 0.0
  %2424 = vmatpush1.xpose.msra.mxu0 0.0
  %2425 = vmatprep.subr.mxu0 0.0
  %2426 = vmatpush1.xpose.msra.mxu0 0.0
  %2427 = vmatprep.subr.mxu0 0.0
  %2428 = vmatpush1.xpose.msra.mxu0 0.0
  %2429 = vmatprep.subr.mxu0 0.0
  %2430 = vmatpush1.xpose.msra.mxu0 0.0
  %2431 = vmatprep.subr.mxu0 0.0
  %2432 = vmatpush1.xpose.msra.mxu0 0.0
  %2433 = vmatprep.subr.mxu0 0.0
  %2434 = vmatpush1.xpose.msra.mxu0 0.0
  %2435 = vmatprep.subr.mxu0 0.0
  %2436 = vmatpush1.xpose.msra.mxu0 0.0
  %2437 = vmatprep.subr.mxu0 0.0
  %2438 = vmatpush1.xpose.msra.mxu0 0.0
  %2439 = vmatprep.subr.mxu0 0.0
  %2440 = vmatpush1.xpose.msra.mxu0 0.0
  %2441 = vmatprep.subr.mxu0 0.0
  %2442 = vmatpush1.xpose.msra.mxu0 0.0
  %2443 = vmatprep.subr.mxu0 0.0
  %2444 = vmatpush1.xpose.msra.mxu0 0.0
  %2445 = vmatprep.subr.mxu0 0.0
  %2446 = vmatpush1.xpose.msra.mxu0 0.0
  %2447 = vmatprep.subr.mxu0 0.0
  %2448 = vmatpush1.xpose.msra.mxu0 %v2415
  %2449 = vmatprep.subr.mxu0 0.0
  %2450 = vmatpush2.xpose.msra.mxu0 0.0
  %2451 = vmatprep.subr.mxu0 0.0
  %2452 = vmatpush2.xpose.msra.mxu0 0.0
  %2453 = vmatprep.subr.mxu0 0.0
  %2454 = vmatpush2.xpose.msra.mxu0 0.0
  %2455 = vmatprep.subr.mxu0 0.0
  %2456 = vmatpush2.xpose.msra.mxu0 0.0
  %2457 = vmatprep.subr.mxu0 0.0
  %2458 = vmatpush2.xpose.msra.mxu0 0.0
  %2459 = vmatprep.subr.mxu0 0.0
  %2460 = vmatpush2.xpose.msra.mxu0 0.0
  %2461 = vmatprep.subr.mxu0 0.0
  %2462 = vmatpush2.xpose.msra.mxu0 0.0
  %2463 = vmatprep.subr.mxu0 0.0
  %2464 = vmatpush2.xpose.msra.mxu0 0.0
  %2465 = vmatprep.subr.mxu0 0.0
  %2466 = vmatpush2.xpose.msra.mxu0 0.0
  %2467 = vmatprep.subr.mxu0 0.0
  %2468 = vmatpush2.xpose.msra.mxu0 0.0
  %2469 = vmatprep.subr.mxu0 0.0
  %2470 = vmatpush2.xpose.msra.mxu0 0.0
  %2471 = vmatprep.subr.mxu0 0.0
  %2472 = vmatpush2.xpose.msra.mxu0 0.0
  %2473 = vmatprep.subr.mxu0 0.0
  %2474 = vmatpush2.xpose.msra.mxu0 0.0
  %2475 = vmatprep.subr.mxu0 0.0
  %2476 = vmatpush2.xpose.msra.mxu0 0.0
  %2477 = vmatprep.subr.mxu0 0.0
  %2478 = vmatpush2.xpose.msra.mxu0 0.0
  %2479 = vmatprep.subr.mxu0 0.0
  %2480 = vmatpush2.xpose.msra.mxu0 0.0
  %2481 = vmatprep.mubr.f32.mxu0 0.0
  %2482 = vmatmul.mubr.f32.gmra.mxu0 %v2413
  %v2483 = vpop.f32.mrf.mxu0
  %v2484 = vadd.f32 0.0, %v2483
  %v2485 = vpop.f32.mrf.mxu0
  %2486 = vdwg.mxu0
  %2487 = vrot.lane.b32.xlu0 %v271, 104
  %v2488 = vpop.permute.xlu0 %2487
  %2489 = vrot.lane.b32.xlu0 %v265, 72
  %v2490 = vpop.permute.xlu0 %2489
  %v2491 = vsel %vm275, %v2488, 0
  %v2493 = vsel %vm275, %v2490, 0
  %2495 = vmatprep.subr.mxu0 0.0
  %2496 = vmatpush1.xpose.msra.mxu0 0.0
  %2497 = vmatprep.subr.mxu0 0.0
  %2498 = vmatpush1.xpose.msra.mxu0 0.0
  %2499 = vmatprep.subr.mxu0 0.0
  %2500 = vmatpush1.xpose.msra.mxu0 0.0
  %2501 = vmatprep.subr.mxu0 0.0
  %2502 = vmatpush1.xpose.msra.mxu0 0.0
  %2503 = vmatprep.subr.mxu0 0.0
  %2504 = vmatpush1.xpose.msra.mxu0 0.0
  %2505 = vmatprep.subr.mxu0 0.0
  %2506 = vmatpush1.xpose.msra.mxu0 0.0
  %2507 = vmatprep.subr.mxu0 0.0
  %2508 = vmatpush1.xpose.msra.mxu0 0.0
  %2509 = vmatprep.subr.mxu0 0.0
  %2510 = vmatpush1.xpose.msra.mxu0 0.0
  %2511 = vmatprep.subr.mxu0 0.0
  %2512 = vmatpush1.xpose.msra.mxu0 0.0
  %2513 = vmatprep.subr.mxu0 0.0
  %2514 = vmatpush1.xpose.msra.mxu0 0.0
  %2515 = vmatprep.subr.mxu0 0.0
  %2516 = vmatpush1.xpose.msra.mxu0 0.0
  %2517 = vmatprep.subr.mxu0 0.0
  %2518 = vmatpush1.xpose.msra.mxu0 0.0
  %2519 = vmatprep.subr.mxu0 0.0
  %2520 = vmatpush1.xpose.msra.mxu0 0.0
  %2521 = vmatprep.subr.mxu0 0.0
  %2522 = vmatpush1.xpose.msra.mxu0 0.0
  %2523 = vmatprep.subr.mxu0 0.0
  %2524 = vmatpush1.xpose.msra.mxu0 0.0
  %2525 = vmatprep.subr.mxu0 0.0
  %2526 = vmatpush1.xpose.msra.mxu0 %v2493
  %2527 = vmatprep.subr.mxu0 0.0
  %2528 = vmatpush2.xpose.msra.mxu0 0.0
  %2529 = vmatprep.subr.mxu0 0.0
  %2530 = vmatpush2.xpose.msra.mxu0 0.0
  %2531 = vmatprep.subr.mxu0 0.0
  %2532 = vmatpush2.xpose.msra.mxu0 0.0
  %2533 = vmatprep.subr.mxu0 0.0
  %2534 = vmatpush2.xpose.msra.mxu0 0.0
  %2535 = vmatprep.subr.mxu0 0.0
  %2536 = vmatpush2.xpose.msra.mxu0 0.0
  %2537 = vmatprep.subr.mxu0 0.0
  %2538 = vmatpush2.xpose.msra.mxu0 0.0
  %2539 = vmatprep.subr.mxu0 0.0
  %2540 = vmatpush2.xpose.msra.mxu0 0.0
  %2541 = vmatprep.subr.mxu0 0.0
  %2542 = vmatpush2.xpose.msra.mxu0 0.0
  %2543 = vmatprep.subr.mxu0 0.0
  %2544 = vmatpush2.xpose.msra.mxu0 0.0
  %2545 = vmatprep.subr.mxu0 0.0
  %2546 = vmatpush2.xpose.msra.mxu0 0.0
  %2547 = vmatprep.subr.mxu0 0.0
  %2548 = vmatpush2.xpose.msra.mxu0 0.0
  %2549 = vmatprep.subr.mxu0 0.0
  %2550 = vmatpush2.xpose.msra.mxu0 0.0
  %2551 = vmatprep.subr.mxu0 0.0
  %2552 = vmatpush2.xpose.msra.mxu0 0.0
  %2553 = vmatprep.subr.mxu0 0.0
  %2554 = vmatpush2.xpose.msra.mxu0 0.0
  %2555 = vmatprep.subr.mxu0 0.0
  %2556 = vmatpush2.xpose.msra.mxu0 0.0
  %2557 = vmatprep.subr.mxu0 0.0
  %2558 = vmatpush2.xpose.msra.mxu0 0.0
  %2559 = vmatprep.mubr.f32.mxu0 0.0
  %2560 = vmatmul.mubr.f32.gmra.mxu0 %v2491
  %v2561 = vpop.f32.mrf.mxu0
  %v2562 = vadd.f32 0.0, %v2561
  %v2563 = vpop.f32.mrf.mxu0
  %2564 = vdwg.mxu0
  %v2565 = vsel %vm275, %v2328, -inf
  %2566 = vmax.xlane.f32.xlu0 %v2565
  %v2567 = vpop.xlane.xlu0 %2566
  %v2568 = vsel %vm275, %v2406, -inf
  %2569 = vmax.xlane.f32.xlu0 %v2568
  %v2570 = vpop.xlane.xlu0 %2569
  %v2571 = vsel %vm275, %v2484, -inf
  %2572 = vmax.xlane.f32.xlu0 %v2571
  %v2573 = vpop.xlane.xlu0 %2572
  %v2574 = vsel %vm275, %v2562, -inf
  %2575 = vmax.xlane.f32.xlu0 %v2574
  %v2576 = vpop.xlane.xlu0 %2575
  %v2577 = vsub.f32 %v2328, %v2567
  %v2578 = vsub.f32 %v2406, %v2570
  %v2579 = vsub.f32 %v2484, %v2573
  %v2580 = vsub.f32 %v2562, %v2576
  %v2581 = vmul.f32 %v2577, 1.442695
  %v2582 = vpow.pop %v2581
  %v2583 = vmul.f32 %v2578, 1.442695
  %v2584 = vpow.pop %v2583
  %v2585 = vmul.f32 %v2579, 1.442695
  %v2586 = vpow.pop %v2585
  %v2587 = vmul.f32 %v2580, 1.442695
  %v2588 = vpow.pop %v2587
  %v2589 = vsel %vm275, %v2582, 0.0
  %2590 = vadd.xlane.f32.xlu0 %v2589
  %v2591 = vpop.xlane.xlu0 %2590
  %v2592 = vsel %vm275, %v2584, 0.0
  %2593 = vadd.xlane.f32.xlu0 %v2592
  %v2594 = vpop.xlane.xlu0 %2593
  %v2595 = vsel %vm275, %v2586, 0.0
  %2596 = vadd.xlane.f32.xlu0 %v2595
  %v2597 = vpop.xlane.xlu0 %2596
  %v2598 = vsel %vm275, %v2588, 0.0
  %2599 = vadd.xlane.f32.xlu0 %v2598
  %v2600 = vpop.xlane.xlu0 %2599
  %v2601 = vrcp.pop %v2591
  %v2602 = vrcp.pop %v2594
  %v2603 = vrcp.pop %v2597
  %v2604 = vrcp.pop %v2600
  %v2605 = vmul.f32 %v2582, %v2601
  %v2606 = vmul.f32 %v2584, %v2602
  %v2607 = vmul.f32 %v2586, %v2603
  %v2608 = vmul.f32 %v2588, %v2604
  %2609 = vrot.lane.b32.xlu0 %v250, 40
  %v2610 = vpop.permute.xlu0 %2609
  %v2613 = vsel %vm275, %v2605, 0
  %2615 = vmatprep.subr.mxu0 0.0
  %2616 = vmatpush1.msra.mxu0 0.0
  %2617 = vmatprep.subr.mxu0 0.0
  %2618 = vmatpush1.msra.mxu0 0.0
  %2619 = vmatprep.subr.mxu0 0.0
  %2620 = vmatpush1.msra.mxu0 0.0
  %2621 = vmatprep.subr.mxu0 0.0
  %2622 = vmatpush1.msra.mxu0 0.0
  %2623 = vmatprep.subr.mxu0 0.0
  %2624 = vmatpush1.msra.mxu0 0.0
  %2625 = vmatprep.subr.mxu0 0.0
  %2626 = vmatpush1.msra.mxu0 0.0
  %2627 = vmatprep.subr.mxu0 0.0
  %2628 = vmatpush1.msra.mxu0 0.0
  %2629 = vmatprep.subr.mxu0 0.0
  %2630 = vmatpush1.msra.mxu0 0.0
  %2631 = vmatprep.subr.mxu0 0.0
  %2632 = vmatpush1.msra.mxu0 0.0
  %2633 = vmatprep.subr.mxu0 0.0
  %2634 = vmatpush1.msra.mxu0 0.0
  %2635 = vmatprep.subr.mxu0 0.0
  %2636 = vmatpush1.msra.mxu0 0.0
  %2637 = vmatprep.subr.mxu0 0.0
  %2638 = vmatpush1.msra.mxu0 0.0
  %2639 = vmatprep.subr.mxu0 0.0
  %2640 = vmatpush1.msra.mxu0 0.0
  %2641 = vmatprep.subr.mxu0 0.0
  %2642 = vmatpush1.msra.mxu0 0.0
  %2643 = vmatprep.subr.mxu0 0.0
  %2644 = vmatpush1.msra.mxu0 0.0
  %2645 = vmatprep.subr.mxu0 0.0
  %2646 = vmatpush1.msra.mxu0 %v2610
  %2647 = vmatprep.subr.mxu0 0.0
  %2648 = vmatpush2.msra.mxu0 0.0
  %2649 = vmatprep.subr.mxu0 0.0
  %2650 = vmatpush2.msra.mxu0 0.0
  %2651 = vmatprep.subr.mxu0 0.0
  %2652 = vmatpush2.msra.mxu0 0.0
  %2653 = vmatprep.subr.mxu0 0.0
  %2654 = vmatpush2.msra.mxu0 0.0
  %2655 = vmatprep.subr.mxu0 0.0
  %2656 = vmatpush2.msra.mxu0 0.0
  %2657 = vmatprep.subr.mxu0 0.0
  %2658 = vmatpush2.msra.mxu0 0.0
  %2659 = vmatprep.subr.mxu0 0.0
  %2660 = vmatpush2.msra.mxu0 0.0
  %2661 = vmatprep.subr.mxu0 0.0
  %2662 = vmatpush2.msra.mxu0 0.0
  %2663 = vmatprep.subr.mxu0 0.0
  %2664 = vmatpush2.msra.mxu0 0.0
  %2665 = vmatprep.subr.mxu0 0.0
  %2666 = vmatpush2.msra.mxu0 0.0
  %2667 = vmatprep.subr.mxu0 0.0
  %2668 = vmatpush2.msra.mxu0 0.0
  %2669 = vmatprep.subr.mxu0 0.0
  %2670 = vmatpush2.msra.mxu0 0.0
  %2671 = vmatprep.subr.mxu0 0.0
  %2672 = vmatpush2.msra.mxu0 0.0
  %2673 = vmatprep.subr.mxu0 0.0
  %2674 = vmatpush2.msra.mxu0 0.0
  %2675 = vmatprep.subr.mxu0 0.0
  %2676 = vmatpush2.msra.mxu0 0.0
  %2677 = vmatprep.subr.mxu0 0.0
  %2678 = vmatpush2.msra.mxu0 0.0
  %2679 = vmatprep.mubr.f32.mxu0 0.0
  %2680 = vmatmul.mubr.f32.gmra.mxu0 %v2613
  %v2681 = vpop.f32.mrf.mxu0
  %v2682 = vadd.f32 0.0, %v2681
  %v2683 = vpop.f32.mrf.mxu0
  %2684 = vdwg.mxu0
  %2685 = vrot.lane.b32.xlu0 %v255, 40
  %v2686 = vpop.permute.xlu0 %2685
  %v2689 = vsel %vm275, %v2606, 0
  %2691 = vmatprep.subr.mxu0 0.0
  %2692 = vmatpush1.msra.mxu0 0.0
  %2693 = vmatprep.subr.mxu0 0.0
  %2694 = vmatpush1.msra.mxu0 0.0
  %2695 = vmatprep.subr.mxu0 0.0
  %2696 = vmatpush1.msra.mxu0 0.0
  %2697 = vmatprep.subr.mxu0 0.0
  %2698 = vmatpush1.msra.mxu0 0.0
  %2699 = vmatprep.subr.mxu0 0.0
  %2700 = vmatpush1.msra.mxu0 0.0
  %2701 = vmatprep.subr.mxu0 0.0
  %2702 = vmatpush1.msra.mxu0 0.0
  %2703 = vmatprep.subr.mxu0 0.0
  %2704 = vmatpush1.msra.mxu0 0.0
  %2705 = vmatprep.subr.mxu0 0.0
  %2706 = vmatpush1.msra.mxu0 0.0
  %2707 = vmatprep.subr.mxu0 0.0
  %2708 = vmatpush1.msra.mxu0 0.0
  %2709 = vmatprep.subr.mxu0 0.0
  %2710 = vmatpush1.msra.mxu0 0.0
  %2711 = vmatprep.subr.mxu0 0.0
  %2712 = vmatpush1.msra.mxu0 0.0
  %2713 = vmatprep.subr.mxu0 0.0
  %2714 = vmatpush1.msra.mxu0 0.0
  %2715 = vmatprep.subr.mxu0 0.0
  %2716 = vmatpush1.msra.mxu0 0.0
  %2717 = vmatprep.subr.mxu0 0.0
  %2718 = vmatpush1.msra.mxu0 0.0
  %2719 = vmatprep.subr.mxu0 0.0
  %2720 = vmatpush1.msra.mxu0 0.0
  %2721 = vmatprep.subr.mxu0 0.0
  %2722 = vmatpush1.msra.mxu0 %v2686
  %2723 = vmatprep.subr.mxu0 0.0
  %2724 = vmatpush2.msra.mxu0 0.0
  %2725 = vmatprep.subr.mxu0 0.0
  %2726 = vmatpush2.msra.mxu0 0.0
  %2727 = vmatprep.subr.mxu0 0.0
  %2728 = vmatpush2.msra.mxu0 0.0
  %2729 = vmatprep.subr.mxu0 0.0
  %2730 = vmatpush2.msra.mxu0 0.0
  %2731 = vmatprep.subr.mxu0 0.0
  %2732 = vmatpush2.msra.mxu0 0.0
  %2733 = vmatprep.subr.mxu0 0.0
  %2734 = vmatpush2.msra.mxu0 0.0
  %2735 = vmatprep.subr.mxu0 0.0
  %2736 = vmatpush2.msra.mxu0 0.0
  %2737 = vmatprep.subr.mxu0 0.0
  %2738 = vmatpush2.msra.mxu0 0.0
  %2739 = vmatprep.subr.mxu0 0.0
  %2740 = vmatpush2.msra.mxu0 0.0
  %2741 = vmatprep.subr.mxu0 0.0
  %2742 = vmatpush2.msra.mxu0 0.0
  %2743 = vmatprep.subr.mxu0 0.0
  %2744 = vmatpush2.msra.mxu0 0.0
  %2745 = vmatprep.subr.mxu0 0.0
  %2746 = vmatpush2.msra.mxu0 0.0
  %2747 = vmatprep.subr.mxu0 0.0
  %2748 = vmatpush2.msra.mxu0 0.0
  %2749 = vmatprep.subr.mxu0 0.0
  %2750 = vmatpush2.msra.mxu0 0.0
  %2751 = vmatprep.subr.mxu0 0.0
  %2752 = vmatpush2.msra.mxu0 0.0
  %2753 = vmatprep.subr.mxu0 0.0
  %2754 = vmatpush2.msra.mxu0 0.0
  %2755 = vmatprep.mubr.f32.mxu0 0.0
  %2756 = vmatmul.mubr.f32.gmra.mxu0 %v2689
  %v2757 = vpop.f32.mrf.mxu0
  %v2758 = vadd.f32 0.0, %v2757
  %v2759 = vpop.f32.mrf.mxu0
  %2760 = vdwg.mxu0
  %2761 = vrot.lane.b32.xlu0 %v260, 40
  %v2762 = vpop.permute.xlu0 %2761
  %v2765 = vsel %vm275, %v2607, 0
  %2767 = vmatprep.subr.mxu0 0.0
  %2768 = vmatpush1.msra.mxu0 0.0
  %2769 = vmatprep.subr.mxu0 0.0
  %2770 = vmatpush1.msra.mxu0 0.0
  %2771 = vmatprep.subr.mxu0 0.0
  %2772 = vmatpush1.msra.mxu0 0.0
  %2773 = vmatprep.subr.mxu0 0.0
  %2774 = vmatpush1.msra.mxu0 0.0
  %2775 = vmatprep.subr.mxu0 0.0
  %2776 = vmatpush1.msra.mxu0 0.0
  %2777 = vmatprep.subr.mxu0 0.0
  %2778 = vmatpush1.msra.mxu0 0.0
  %2779 = vmatprep.subr.mxu0 0.0
  %2780 = vmatpush1.msra.mxu0 0.0
  %2781 = vmatprep.subr.mxu0 0.0
  %2782 = vmatpush1.msra.mxu0 0.0
  %2783 = vmatprep.subr.mxu0 0.0
  %2784 = vmatpush1.msra.mxu0 0.0
  %2785 = vmatprep.subr.mxu0 0.0
  %2786 = vmatpush1.msra.mxu0 0.0
  %2787 = vmatprep.subr.mxu0 0.0
  %2788 = vmatpush1.msra.mxu0 0.0
  %2789 = vmatprep.subr.mxu0 0.0
  %2790 = vmatpush1.msra.mxu0 0.0
  %2791 = vmatprep.subr.mxu0 0.0
  %2792 = vmatpush1.msra.mxu0 0.0
  %2793 = vmatprep.subr.mxu0 0.0
  %2794 = vmatpush1.msra.mxu0 0.0
  %2795 = vmatprep.subr.mxu0 0.0
  %2796 = vmatpush1.msra.mxu0 0.0
  %2797 = vmatprep.subr.mxu0 0.0
  %2798 = vmatpush1.msra.mxu0 %v2762
  %2799 = vmatprep.subr.mxu0 0.0
  %2800 = vmatpush2.msra.mxu0 0.0
  %2801 = vmatprep.subr.mxu0 0.0
  %2802 = vmatpush2.msra.mxu0 0.0
  %2803 = vmatprep.subr.mxu0 0.0
  %2804 = vmatpush2.msra.mxu0 0.0
  %2805 = vmatprep.subr.mxu0 0.0
  %2806 = vmatpush2.msra.mxu0 0.0
  %2807 = vmatprep.subr.mxu0 0.0
  %2808 = vmatpush2.msra.mxu0 0.0
  %2809 = vmatprep.subr.mxu0 0.0
  %2810 = vmatpush2.msra.mxu0 0.0
  %2811 = vmatprep.subr.mxu0 0.0
  %2812 = vmatpush2.msra.mxu0 0.0
  %2813 = vmatprep.subr.mxu0 0.0
  %2814 = vmatpush2.msra.mxu0 0.0
  %2815 = vmatprep.subr.mxu0 0.0
  %2816 = vmatpush2.msra.mxu0 0.0
  %2817 = vmatprep.subr.mxu0 0.0
  %2818 = vmatpush2.msra.mxu0 0.0
  %2819 = vmatprep.subr.mxu0 0.0
  %2820 = vmatpush2.msra.mxu0 0.0
  %2821 = vmatprep.subr.mxu0 0.0
  %2822 = vmatpush2.msra.mxu0 0.0
  %2823 = vmatprep.subr.mxu0 0.0
  %2824 = vmatpush2.msra.mxu0 0.0
  %2825 = vmatprep.subr.mxu0 0.0
  %2826 = vmatpush2.msra.mxu0 0.0
  %2827 = vmatprep.subr.mxu0 0.0
  %2828 = vmatpush2.msra.mxu0 0.0
  %2829 = vmatprep.subr.mxu0 0.0
  %2830 = vmatpush2.msra.mxu0 0.0
  %2831 = vmatprep.mubr.f32.mxu0 0.0
  %2832 = vmatmul.mubr.f32.gmra.mxu0 %v2765
  %v2833 = vpop.f32.mrf.mxu0
  %v2834 = vadd.f32 0.0, %v2833
  %v2835 = vpop.f32.mrf.mxu0
  %2836 = vdwg.mxu0
  %2837 = vrot.lane.b32.xlu0 %v265, 40
  %v2838 = vpop.permute.xlu0 %2837
  %v2841 = vsel %vm275, %v2608, 0
  %2843 = vmatprep.subr.mxu0 0.0
  %2844 = vmatpush1.msra.mxu0 0.0
  %2845 = vmatprep.subr.mxu0 0.0
  %2846 = vmatpush1.msra.mxu0 0.0
  %2847 = vmatprep.subr.mxu0 0.0
  %2848 = vmatpush1.msra.mxu0 0.0
  %2849 = vmatprep.subr.mxu0 0.0
  %2850 = vmatpush1.msra.mxu0 0.0
  %2851 = vmatprep.subr.mxu0 0.0
  %2852 = vmatpush1.msra.mxu0 0.0
  %2853 = vmatprep.subr.mxu0 0.0
  %2854 = vmatpush1.msra.mxu0 0.0
  %2855 = vmatprep.subr.mxu0 0.0
  %2856 = vmatpush1.msra.mxu0 0.0
  %2857 = vmatprep.subr.mxu0 0.0
  %2858 = vmatpush1.msra.mxu0 0.0
  %2859 = vmatprep.subr.mxu0 0.0
  %2860 = vmatpush1.msra.mxu0 0.0
  %2861 = vmatprep.subr.mxu0 0.0
  %2862 = vmatpush1.msra.mxu0 0.0
  %2863 = vmatprep.subr.mxu0 0.0
  %2864 = vmatpush1.msra.mxu0 0.0
  %2865 = vmatprep.subr.mxu0 0.0
  %2866 = vmatpush1.msra.mxu0 0.0
  %2867 = vmatprep.subr.mxu0 0.0
  %2868 = vmatpush1.msra.mxu0 0.0
  %2869 = vmatprep.subr.mxu0 0.0
  %2870 = vmatpush1.msra.mxu0 0.0
  %2871 = vmatprep.subr.mxu0 0.0
  %2872 = vmatpush1.msra.mxu0 0.0
  %2873 = vmatprep.subr.mxu0 0.0
  %2874 = vmatpush1.msra.mxu0 %v2838
  %2875 = vmatprep.subr.mxu0 0.0
  %2876 = vmatpush2.msra.mxu0 0.0
  %2877 = vmatprep.subr.mxu0 0.0
  %2878 = vmatpush2.msra.mxu0 0.0
  %2879 = vmatprep.subr.mxu0 0.0
  %2880 = vmatpush2.msra.mxu0 0.0
  %2881 = vmatprep.subr.mxu0 0.0
  %2882 = vmatpush2.msra.mxu0 0.0
  %2883 = vmatprep.subr.mxu0 0.0
  %2884 = vmatpush2.msra.mxu0 0.0
  %2885 = vmatprep.subr.mxu0 0.0
  %2886 = vmatpush2.msra.mxu0 0.0
  %2887 = vmatprep.subr.mxu0 0.0
  %2888 = vmatpush2.msra.mxu0 0.0
  %2889 = vmatprep.subr.mxu0 0.0
  %2890 = vmatpush2.msra.mxu0 0.0
  %2891 = vmatprep.subr.mxu0 0.0
  %2892 = vmatpush2.msra.mxu0 0.0
  %2893 = vmatprep.subr.mxu0 0.0
  %2894 = vmatpush2.msra.mxu0 0.0
  %2895 = vmatprep.subr.mxu0 0.0
  %2896 = vmatpush2.msra.mxu0 0.0
  %2897 = vmatprep.subr.mxu0 0.0
  %2898 = vmatpush2.msra.mxu0 0.0
  %2899 = vmatprep.subr.mxu0 0.0
  %2900 = vmatpush2.msra.mxu0 0.0
  %2901 = vmatprep.subr.mxu0 0.0
  %2902 = vmatpush2.msra.mxu0 0.0
  %2903 = vmatprep.subr.mxu0 0.0
  %2904 = vmatpush2.msra.mxu0 0.0
  %2905 = vmatprep.subr.mxu0 0.0
  %2906 = vmatpush2.msra.mxu0 0.0
  %2907 = vmatprep.mubr.f32.mxu0 0.0
  %2908 = vmatmul.mubr.f32.gmra.mxu0 %v2841
  %v2909 = vpop.f32.mrf.mxu0
  %v2910 = vadd.f32 0.0, %v2909
  %v2911 = vpop.f32.mrf.mxu0
  %2912 = vdwg.mxu0
  %2917 = vrot.lane.b32.xlu0 %v1362, 8
  %v2918 = vpop.permute.xlu0 %2917
  %2919 = vrot.lane.b32.xlu0 %v1438, 8
  %v2920 = vpop.permute.xlu0 %2919
  %2921 = vrot.lane.b32.xlu0 %v1514, 8
  %v2922 = vpop.permute.xlu0 %2921
  %2923 = vrot.lane.b32.xlu0 %v1590, 8
  %v2924 = vpop.permute.xlu0 %2923
  %2933 = vrot.lane.b32.xlu0 %v2022, 16
  %v2934 = vpop.permute.xlu0 %2933
  %2935 = vrot.lane.b32.xlu0 %v2098, 16
  %v2936 = vpop.permute.xlu0 %2935
  %2937 = vrot.lane.b32.xlu0 %v2174, 16
  %v2938 = vpop.permute.xlu0 %2937
  %2939 = vrot.lane.b32.xlu0 %v2250, 16
  %v2940 = vpop.permute.xlu0 %2939
  %2949 = vrot.lane.b32.xlu0 %v2682, 24
  %v2950 = vpop.permute.xlu0 %2949
  %2951 = vrot.lane.b32.xlu0 %v2758, 24
  %v2952 = vpop.permute.xlu0 %2951
  %2953 = vrot.lane.b32.xlu0 %v2834, 24
  %v2954 = vpop.permute.xlu0 %2953
  %2955 = vrot.lane.b32.xlu0 %v2910, 24
  %v2956 = vpop.permute.xlu0 %2955
  %v2961 = vsel %vm275, %v702, %v2918
  %v2962 = vsel %vm275, %v778, %v2920
  %v2963 = vsel %vm275, %v854, %v2922
  %v2964 = vsel %vm275, %v930, %v2924
  %vm2965 = vcmask 130048
  %v2966 = vsel %vm2965, %v2961, %v2934
  %v2967 = vsel %vm2965, %v2962, %v2936
  %v2968 = vsel %vm2965, %v2963, %v2938
  %v2969 = vsel %vm2965, %v2964, %v2940
  %vm2970 = vcmask 195584
  %v2971 = vsel %vm2970, %v2966, %v2950
  %v2972 = vsel %vm2970, %v2967, %v2952
  %v2973 = vsel %vm2970, %v2968, %v2954
  %v2974 = vsel %vm2970, %v2969, %v2956
  %v2975 = vld [vmem:[%s5] sm:$0xff]
  %v2976 = vld [vmem:[%s5 + $0x8] sm:$0xff]
  %v2977 = vld [vmem:[%s5 + $0x10] sm:$0xff]
  %v2978 = vld [vmem:[%s5 + $0x18] sm:$0xff]
  %v2979 = vld [vmem:[%s6] sm:$0x1]
  %v2981 = vlaneseq
  %v2982 = vshrl.u32 %v2981, 7
  %v2983 = vsub.s32 0, %v2982
  %v2984 = vrot.slane %v2979, %v2983
  %v2987 = vsel %vm62, %v2971, 0
  %v2990 = vsel %vm62, %v2972, 0
  %v2993 = vsel %vm62, %v2973, 0
  %v2996 = vsel %vm62, %v2974, 0
  %2998 = vmatprep.subr.mxu0 0.0
  %2999 = vmatpush1.msra.mxu0 0.0
  %3000 = vmatprep.subr.mxu0 0.0
  %3001 = vmatpush1.msra.mxu0 0.0
  %3002 = vmatprep.subr.mxu0 0.0
  %3003 = vmatpush1.msra.mxu0 0.0
  %3004 = vmatprep.subr.mxu0 0.0
  %3005 = vmatpush1.msra.mxu0 0.0
  %3006 = vmatprep.subr.mxu0 0.0
  %3007 = vmatpush1.msra.mxu0 0.0
  %3008 = vmatprep.subr.mxu0 0.0
  %3009 = vmatpush1.msra.mxu0 0.0
  %3010 = vmatprep.subr.mxu0 0.0
  %3011 = vmatpush1.msra.mxu0 0.0
  %3012 = vmatprep.subr.mxu0 0.0
  %3013 = vmatpush1.msra.mxu0 0.0
  %3014 = vmatprep.subr.mxu0 0.0
  %3015 = vmatpush1.msra.mxu0 0.0
  %3016 = vmatprep.subr.mxu0 0.0
  %3017 = vmatpush1.msra.mxu0 0.0
  %3018 = vmatprep.subr.mxu0 0.0
  %3019 = vmatpush1.msra.mxu0 0.0
  %3020 = vmatprep.subr.mxu0 0.0
  %3021 = vmatpush1.msra.mxu0 0.0
  %3022 = vmatprep.subr.mxu0 0.0
  %3023 = vmatpush1.msra.mxu0 %v2978
  %3024 = vmatprep.subr.mxu0 0.0
  %3025 = vmatpush1.msra.mxu0 %v2977
  %3026 = vmatprep.subr.mxu0 0.0
  %3027 = vmatpush1.msra.mxu0 %v2976
  %3028 = vmatprep.subr.mxu0 0.0
  %3029 = vmatpush1.msra.mxu0 %v2975
  %3030 = vmatprep.subr.mxu0 0.0
  %3031 = vmatpush2.msra.mxu0 0.0
  %3032 = vmatprep.subr.mxu0 0.0
  %3033 = vmatpush2.msra.mxu0 0.0
  %3034 = vmatprep.subr.mxu0 0.0
  %3035 = vmatpush2.msra.mxu0 0.0
  %3036 = vmatprep.subr.mxu0 0.0
  %3037 = vmatpush2.msra.mxu0 0.0
  %3038 = vmatprep.subr.mxu0 0.0
  %3039 = vmatpush2.msra.mxu0 0.0
  %3040 = vmatprep.subr.mxu0 0.0
  %3041 = vmatpush2.msra.mxu0 0.0
  %3042 = vmatprep.subr.mxu0 0.0
  %3043 = vmatpush2.msra.mxu0 0.0
  %3044 = vmatprep.subr.mxu0 0.0
  %3045 = vmatpush2.msra.mxu0 0.0
  %3046 = vmatprep.subr.mxu0 0.0
  %3047 = vmatpush2.msra.mxu0 0.0
  %3048 = vmatprep.subr.mxu0 0.0
  %3049 = vmatpush2.msra.mxu0 0.0
  %3050 = vmatprep.subr.mxu0 0.0
  %3051 = vmatpush2.msra.mxu0 0.0
  %3052 = vmatprep.subr.mxu0 0.0
  %3053 = vmatpush2.msra.mxu0 0.0
  %3054 = vmatprep.subr.mxu0 0.0
  %3055 = vmatpush2.msra.mxu0 0.0
  %3056 = vmatprep.subr.mxu0 0.0
  %3057 = vmatpush2.msra.mxu0 0.0
  %3058 = vmatprep.subr.mxu0 0.0
  %3059 = vmatpush2.msra.mxu0 0.0
  %3060 = vmatprep.subr.mxu0 0.0
  %3061 = vmatpush2.msra.mxu0 0.0
  %3062 = vmatprep.mubr.f32.mxu0 0.0
  %3063 = vmatmul.mubr.f32.gmra.mxu0 %v2987
  %v3064 = vpop.f32.mrf.mxu0
  %v3065 = vadd.f32 %v2984, %v3064
  %v3066 = vpop.f32.mrf.mxu0
  %3067 = vmatprep.mubr.f32.mxu0 0.0
  %3068 = vmatmul.mubr.f32.gmra.mxu0 %v2990
  %v3069 = vpop.f32.mrf.mxu0
  %v3070 = vadd.f32 %v2984, %v3069
  %v3071 = vpop.f32.mrf.mxu0
  %3072 = vmatprep.mubr.f32.mxu0 0.0
  %3073 = vmatmul.mubr.f32.gmra.mxu0 %v2993
  %v3074 = vpop.f32.mrf.mxu0
  %v3075 = vadd.f32 %v2984, %v3074
  %v3076 = vpop.f32.mrf.mxu0
  %3077 = vmatprep.mubr.f32.mxu0 0.0
  %3078 = vmatmul.mubr.f32.gmra.mxu0 %v2996
  %v3079 = vpop.f32.mrf.mxu0
  %v3080 = vadd.f32 %v2984, %v3079
  %v3081 = vpop.f32.mrf.mxu0
  %3082 = vdwg.mxu0
  %v3083 = vld [vmem:[%s7] sm:$0xf]
  %v3084 = vadd.f32 %v142, %v3065
  %v3085 = vadd.f32 %v147, %v3070
  %v3086 = vadd.f32 %v152, %v3075
  %v3087 = vadd.f32 %v157, %v3080
  %v3088 = vsel %vm62, %v3084, 0.0
  %3089 = vadd.xlane.f32.xlu0 %v3088
  %v3090 = vpop.xlane.xlu0 %3089
  %v3091 = vsel %vm62, %v3085, 0.0
  %3092 = vadd.xlane.f32.xlu0 %v3091
  %v3093 = vpop.xlane.xlu0 %3092
  %v3094 = vsel %vm62, %v3086, 0.0
  %3095 = vadd.xlane.f32.xlu0 %v3094
  %v3096 = vpop.xlane.xlu0 %3095
  %v3097 = vsel %vm62, %v3087, 0.0
  %3098 = vadd.xlane.f32.xlu0 %v3097
  %v3099 = vpop.xlane.xlu0 %3098
  %v3100 = vrcp.pop 32.0
  %v3101 = vmul.f32 %v3090, %v3100
  %v3102 = vmul.f32 %v3093, %v3100
  %v3103 = vmul.f32 %v3096, %v3100
  %v3104 = vmul.f32 %v3099, %v3100
  %v3105 = vsub.f32 %v3084, %v3101
  %v3106 = vsub.f32 %v3085, %v3102
  %v3107 = vsub.f32 %v3086, %v3103
  %v3108 = vsub.f32 %v3087, %v3104
  %v3109 = vmul.f32 %v3105, %v3105
  %v3110 = vmul.f32 %v3106, %v3106
  %v3111 = vmul.f32 %v3107, %v3107
  %v3112 = vmul.f32 %v3108, %v3108
  %v3113 = vsel %vm62, %v3109, 0.0
  %3114 = vadd.xlane.f32.xlu0 %v3113
  %v3115 = vpop.xlane.xlu0 %3114
  %v3116 = vsel %vm62, %v3110, 0.0
  %3117 = vadd.xlane.f32.xlu0 %v3116
  %v3118 = vpop.xlane.xlu0 %3117
  %v3119 = vsel %vm62, %v3111, 0.0
  %3120 = vadd.xlane.f32.xlu0 %v3119
  %v3121 = vpop.xlane.xlu0 %3120
  %v3122 = vsel %vm62, %v3112, 0.0
  %3123 = vadd.xlane.f32.xlu0 %v3122
  %v3124 = vpop.xlane.xlu0 %3123
  %v3125 = vmul.f32 %v3115, %v3100
  %v3126 = vmul.f32 %v3118, %v3100
  %v3127 = vmul.f32 %v3121, %v3100
  %v3128 = vmul.f32 %v3124, %v3100
  %v3129 = vadd.f32 %v3125, 1e-05
  %v3130 = vadd.f32 %v3126, 1e-05
  %v3131 = vadd.f32 %v3127, 1e-05
  %v3132 = vadd.f32 %v3128, 1e-05
  %v3133 = vrsqrt.pop %v3129
  %v3134 = vrsqrt.pop %v3130
  %v3135 = vrsqrt.pop %v3131
  %v3136 = vrsqrt.pop %v3132
  %v3137 = vmul.f32 %v3105, %v3133
  %v3138 = vmul.f32 %v3106, %v3134
  %v3139 = vmul.f32 %v3107, %v3135
  %v3140 = vmul.f32 %v3108, %v3136
  %v3141 = vlaneseq
  %v3142 = vshrl.u32 %v3141, 7
  %v3143 = vsub.s32 0, %v3142
  %v3144 = vrot.slane %v3083, %v3143
  %v3145 = vmul.f32 %v3137, %v3144
  %v3146 = vmul.f32 %v3138, %v3144
  %v3147 = vmul.f32 %v3139, %v3144
  %v3148 = vmul.f32 %v3140, %v3144
  %v3149 = vlaneseq
  %v3150 = vshrl.u32 %v3149, 7
  %v3151 = vsub.s32 1, %v3150
  %v3152 = vrot.slane %v3083, %v3151
  %v3153 = vadd.f32 %v3145, %v3152
  %v3154 = vadd.f32 %v3146, %v3152
  %v3155 = vadd.f32 %v3147, %v3152
  %v3156 = vadd.f32 %v3148, %v3152
  %v3157 = vld [vmem:[%s8] sm:$0xff]
  %v3158 = vld [vmem:[%s8 + $0x8] sm:$0xff]
  %v3159 = vld [vmem:[%s8 + $0x10] sm:$0xff]
  %v3160 = vld [vmem:[%s8 + $0x18] sm:$0xff]
  %v3161 = vld [vmem:[%s9] sm:$0x1]
  %v3163 = vlaneseq
  %v3164 = vshrl.u32 %v3163, 7
  %v3165 = vsub.s32 0, %v3164
  %v3166 = vrot.slane %v3161, %v3165
  %v3169 = vsel %vm62, %v3153, 0
  %v3172 = vsel %vm62, %v3154, 0
  %v3175 = vsel %vm62, %v3155, 0
  %v3178 = vsel %vm62, %v3156, 0
  %3180 = vmatprep.subr.mxu0 0.0
  %3181 = vmatpush1.msra.mxu0 0.0
  %3182 = vmatprep.subr.mxu0 0.0
  %3183 = vmatpush1.msra.mxu0 0.0
  %3184 = vmatprep.subr.mxu0 0.0
  %3185 = vmatpush1.msra.mxu0 0.0
  %3186 = vmatprep.subr.mxu0 0.0
  %3187 = vmatpush1.msra.mxu0 0.0
  %3188 = vmatprep.subr.mxu0 0.0
  %3189 = vmatpush1.msra.mxu0 0.0
  %3190 = vmatprep.subr.mxu0 0.0
  %3191 = vmatpush1.msra.mxu0 0.0
  %3192 = vmatprep.subr.mxu0 0.0
  %3193 = vmatpush1.msra.mxu0 0.0
  %3194 = vmatprep.subr.mxu0 0.0
  %3195 = vmatpush1.msra.mxu0 0.0
  %3196 = vmatprep.subr.mxu0 0.0
  %3197 = vmatpush1.msra.mxu0 0.0
  %3198 = vmatprep.subr.mxu0 0.0
  %3199 = vmatpush1.msra.mxu0 0.0
  %3200 = vmatprep.subr.mxu0 0.0
  %3201 = vmatpush1.msra.mxu0 0.0
  %3202 = vmatprep.subr.mxu0 0.0
  %3203 = vmatpush1.msra.mxu0 0.0
  %3204 = vmatprep.subr.mxu0 0.0
  %3205 = vmatpush1.msra.mxu0 %v3160
  %3206 = vmatprep.subr.mxu0 0.0
  %3207 = vmatpush1.msra.mxu0 %v3159
  %3208 = vmatprep.subr.mxu0 0.0
  %3209 = vmatpush1.msra.mxu0 %v3158
  %3210 = vmatprep.subr.mxu0 0.0
  %3211 = vmatpush1.msra.mxu0 %v3157
  %3212 = vmatprep.subr.mxu0 0.0
  %3213 = vmatpush2.msra.mxu0 0.0
  %3214 = vmatprep.subr.mxu0 0.0
  %3215 = vmatpush2.msra.mxu0 0.0
  %3216 = vmatprep.subr.mxu0 0.0
  %3217 = vmatpush2.msra.mxu0 0.0
  %3218 = vmatprep.subr.mxu0 0.0
  %3219 = vmatpush2.msra.mxu0 0.0
  %3220 = vmatprep.subr.mxu0 0.0
  %3221 = vmatpush2.msra.mxu0 0.0
  %3222 = vmatprep.subr.mxu0 0.0
  %3223 = vmatpush2.msra.mxu0 0.0
  %3224 = vmatprep.subr.mxu0 0.0
  %3225 = vmatpush2.msra.mxu0 0.0
  %3226 = vmatprep.subr.mxu0 0.0
  %3227 = vmatpush2.msra.mxu0 0.0
  %3228 = vmatprep.subr.mxu0 0.0
  %3229 = vmatpush2.msra.mxu0 0.0
  %3230 = vmatprep.subr.mxu0 0.0
  %3231 = vmatpush2.msra.mxu0 0.0
  %3232 = vmatprep.subr.mxu0 0.0
  %3233 = vmatpush2.msra.mxu0 0.0
  %3234 = vmatprep.subr.mxu0 0.0
  %3235 = vmatpush2.msra.mxu0 0.0
  %3236 = vmatprep.subr.mxu0 0.0
  %3237 = vmatpush2.msra.mxu0 0.0
  %3238 = vmatprep.subr.mxu0 0.0
  %3239 = vmatpush2.msra.mxu0 0.0
  %3240 = vmatprep.subr.mxu0 0.0
  %3241 = vmatpush2.msra.mxu0 0.0
  %3242 = vmatprep.subr.mxu0 0.0
  %3243 = vmatpush2.msra.mxu0 0.0
  %3244 = vmatprep.mubr.f32.mxu0 0.0
  %3245 = vmatmul.mubr.f32.gmra.mxu0 %v3169
  %v3246 = vpop.f32.mrf.mxu0
  %v3247 = vadd.f32 %v3166, %v3246
  %v3248 = vpop.f32.mrf.mxu0
  %3249 = vmatprep.mubr.f32.mxu0 0.0
  %3250 = vmatmul.mubr.f32.gmra.mxu0 %v3172
  %v3251 = vpop.f32.mrf.mxu0
  %v3252 = vadd.f32 %v3166, %v3251
  %v3253 = vpop.f32.mrf.mxu0
  %3254 = vmatprep.mubr.f32.mxu0 0.0
  %3255 = vmatmul.mubr.f32.gmra.mxu0 %v3175
  %v3256 = vpop.f32.mrf.mxu0
  %v3257 = vadd.f32 %v3166, %v3256
  %v3258 = vpop.f32.mrf.mxu0
  %3259 = vmatprep.mubr.f32.mxu0 0.0
  %3260 = vmatmul.mubr.f32.gmra.mxu0 %v3178
  %v3261 = vpop.f32.mrf.mxu0
  %v3262 = vadd.f32 %v3166, %v3261
  %v3263 = vpop.f32.mrf.mxu0
  %3264 = vdwg.mxu0
  %v3265 = vmax.f32 %v3247, 0.0
  %v3266 = vmax.f32 %v3252, 0.0
  %v3267 = vmax.f32 %v3257, 0.0
  %v3268 = vmax.f32 %v3262, 0.0
  %v3269 = vld [vmem:[%s10] sm:$0xff]
  %v3270 = vld [vmem:[%s10 + $0x8] sm:$0xff]
  %v3271 = vld [vmem:[%s10 + $0x10] sm:$0xff]
  %v3272 = vld [vmem:[%s10 + $0x18] sm:$0xff]
  %v3273 = vld [vmem:[%s10 + $0x20] sm:$0xff]
  %v3274 = vld [vmem:[%s10 + $0x28] sm:$0xff]
  %v3275 = vld [vmem:[%s10 + $0x30] sm:$0xff]
  %v3276 = vld [vmem:[%s10 + $0x38] sm:$0xff]
  %v3277 = vld [vmem:[%s10 + $0x40] sm:$0xff]
  %v3278 = vld [vmem:[%s10 + $0x48] sm:$0xff]
  %v3279 = vld [vmem:[%s10 + $0x50] sm:$0xff]
  %v3280 = vld [vmem:[%s10 + $0x58] sm:$0xff]
  %v3281 = vld [vmem:[%s10 + $0x60] sm:$0xff]
  %v3282 = vld [vmem:[%s10 + $0x68] sm:$0xff]
  %v3283 = vld [vmem:[%s10 + $0x70] sm:$0xff]
  %v3284 = vld [vmem:[%s10 + $0x78] sm:$0xff]
  %v3285 = vld [vmem:[%s11] sm:$0x1]
  %v3287 = vlaneseq
  %v3288 = vshrl.u32 %v3287, 7
  %v3289 = vsub.s32 0, %v3288
  %v3290 = vrot.slane %v3285, %v3289
  %3292 = vmatprep.subr.mxu0 0.0
  %3293 = vmatpush1.msra.mxu0 %v3284
  %3294 = vmatprep.subr.mxu0 0.0
  %3295 = vmatpush1.msra.mxu0 %v3283
  %3296 = vmatprep.subr.mxu0 0.0
  %3297 = vmatpush1.msra.mxu0 %v3282
  %3298 = vmatprep.subr.mxu0 0.0
  %3299 = vmatpush1.msra.mxu0 %v3281
  %3300 = vmatprep.subr.mxu0 0.0
  %3301 = vmatpush1.msra.mxu0 %v3280
  %3302 = vmatprep.subr.mxu0 0.0
  %3303 = vmatpush1.msra.mxu0 %v3279
  %3304 = vmatprep.subr.mxu0 0.0
  %3305 = vmatpush1.msra.mxu0 %v3278
  %3306 = vmatprep.subr.mxu0 0.0
  %3307 = vmatpush1.msra.mxu0 %v3277
  %3308 = vmatprep.subr.mxu0 0.0
  %3309 = vmatpush1.msra.mxu0 %v3276
  %3310 = vmatprep.subr.mxu0 0.0
  %3311 = vmatpush1.msra.mxu0 %v3275
  %3312 = vmatprep.subr.mxu0 0.0
  %3313 = vmatpush1.msra.mxu0 %v3274
  %3314 = vmatprep.subr.mxu0 0.0
  %3315 = vmatpush1.msra.mxu0 %v3273
  %3316 = vmatprep.subr.mxu0 0.0
  %3317 = vmatpush1.msra.mxu0 %v3272
  %3318 = vmatprep.subr.mxu0 0.0
  %3319 = vmatpush1.msra.mxu0 %v3271
  %3320 = vmatprep.subr.mxu0 0.0
  %3321 = vmatpush1.msra.mxu0 %v3270
  %3322 = vmatprep.subr.mxu0 0.0
  %3323 = vmatpush1.msra.mxu0 %v3269
  %3324 = vmatprep.subr.mxu0 0.0
  %3325 = vmatpush2.msra.mxu0 0.0
  %3326 = vmatprep.subr.mxu0 0.0
  %3327 = vmatpush2.msra.mxu0 0.0
  %3328 = vmatprep.subr.mxu0 0.0
  %3329 = vmatpush2.msra.mxu0 0.0
  %3330 = vmatprep.subr.mxu0 0.0
  %3331 = vmatpush2.msra.mxu0 0.0
  %3332 = vmatprep.subr.mxu0 0.0
  %3333 = vmatpush2.msra.mxu0 0.0
  %3334 = vmatprep.subr.mxu0 0.0
  %3335 = vmatpush2.msra.mxu0 0.0
  %3336 = vmatprep.subr.mxu0 0.0
  %3337 = vmatpush2.msra.mxu0 0.0
  %3338 = vmatprep.subr.mxu0 0.0
  %3339 = vmatpush2.msra.mxu0 0.0
  %3340 = vmatprep.subr.mxu0 0.0
  %3341 = vmatpush2.msra.mxu0 0.0
  %3342 = vmatprep.subr.mxu0 0.0
  %3343 = vmatpush2.msra.mxu0 0.0
  %3344 = vmatprep.subr.mxu0 0.0
  %3345 = vmatpush2.msra.mxu0 0.0
  %3346 = vmatprep.subr.mxu0 0.0
  %3347 = vmatpush2.msra.mxu0 0.0
  %3348 = vmatprep.subr.mxu0 0.0
  %3349 = vmatpush2.msra.mxu0 0.0
  %3350 = vmatprep.subr.mxu0 0.0
  %3351 = vmatpush2.msra.mxu0 0.0
  %3352 = vmatprep.subr.mxu0 0.0
  %3353 = vmatpush2.msra.mxu0 0.0
  %3354 = vmatprep.subr.mxu0 0.0
  %3355 = vmatpush2.msra.mxu0 0.0
  %3356 = vmatprep.mubr.f32.mxu0 0.0
  %3357 = vmatmul.mubr.f32.gmra.mxu0 %v3265
  %v3358 = vpop.f32.mrf.mxu0
  %v3359 = vadd.f32 %v3290, %v3358
  %v3360 = vpop.f32.mrf.mxu0
  %3361 = vmatprep.mubr.f32.mxu0 0.0
  %3362 = vmatmul.mubr.f32.gmra.mxu0 %v3266
  %v3363 = vpop.f32.mrf.mxu0
  %v3364 = vadd.f32 %v3290, %v3363
  %v3365 = vpop.f32.mrf.mxu0
  %3366 = vmatprep.mubr.f32.mxu0 0.0
  %3367 = vmatmul.mubr.f32.gmra.mxu0 %v3267
  %v3368 = vpop.f32.mrf.mxu0
  %v3369 = vadd.f32 %v3290, %v3368
  %v3370 = vpop.f32.mrf.mxu0
  %3371 = vmatprep.mubr.f32.mxu0 0.0
  %3372 = vmatmul.mubr.f32.gmra.mxu0 %v3268
  %v3373 = vpop.f32.mrf.mxu0
  %v3374 = vadd.f32 %v3290, %v3373
  %v3375 = vpop.f32.mrf.mxu0
  %3376 = vdwg.mxu0
  %v3377 = vadd.f32 %v3153, %v3359
  %v3378 = vadd.f32 %v3154, %v3364
  %v3379 = vadd.f32 %v3155, %v3369
  %v3380 = vadd.f32 %v3156, %v3374
  %v3381 = vsel %vm62, %v3377, 0.0
  %3382 = vadd.xlane.f32.xlu0 %v3381
  %v3383 = vpop.xlane.xlu0 %3382
  %v3384 = vsel %vm62, %v3378, 0.0
  %3385 = vadd.xlane.f32.xlu0 %v3384
  %v3386 = vpop.xlane.xlu0 %3385
  %v3387 = vsel %vm62, %v3379, 0.0
  %3388 = vadd.xlane.f32.xlu0 %v3387
  %v3389 = vpop.xlane.xlu0 %3388
  %v3390 = vsel %vm62, %v3380, 0.0
  %3391 = vadd.xlane.f32.xlu0 %v3390
  %v3392 = vpop.xlane.xlu0 %3391
  %v3393 = vmul.f32 %v3383, %v3100
  %v3394 = vmul.f32 %v3386, %v3100
  %v3395 = vmul.f32 %v3389, %v3100
  %v3396 = vmul.f32 %v3392, %v3100
  %v3397 = vsub.f32 %v3377, %v3393
  %v3398 = vsub.f32 %v3378, %v3394
  %v3399 = vsub.f32 %v3379, %v3395
  %v3400 = vsub.f32 %v3380, %v3396
  %v3401 = vmul.f32 %v3397, %v3397
  %v3402 = vmul.f32 %v3398, %v3398
  %v3403 = vmul.f32 %v3399, %v3399
  %v3404 = vmul.f32 %v3400, %v3400
  %v3405 = vsel %vm62, %v3401, 0.0
  %3406 = vadd.xlane.f32.xlu0 %v3405
  %v3407 = vpop.xlane.xlu0 %3406
  %v3408 = vsel %vm62, %v3402, 0.0
  %3409 = vadd.xlane.f32.xlu0 %v3408
  %v3410 = vpop.xlane.xlu0 %3409
  %v3411 = vsel %vm62, %v3403, 0.0
  %3412 = vadd.xlane.f32.xlu0 %v3411
  %v3413 = vpop.xlane.xlu0 %3412
  %v3414 = vsel %vm62, %v3404, 0.0
  %3415 = vadd.xlane.f32.xlu0 %v3414
  %v3416 = vpop.xlane.xlu0 %3415
  %v3417 = vmul.f32 %v3407, %v3100
  %v3418 = vmul.f32 %v3410, %v3100
  %v3419 = vmul.f32 %v3413, %v3100
  %v3420 = vmul.f32 %v3416, %v3100
  %v3421 = vadd.f32 %v3417, 1e-05
  %v3422 = vadd.f32 %v3418, 1e-05
  %v3423 = vadd.f32 %v3419, 1e-05
  %v3424 = vadd.f32 %v3420, 1e-05
  %v3425 = vrsqrt.pop %v3421
  %v3426 = vrsqrt.pop %v3422
  %v3427 = vrsqrt.pop %v3423
  %v3428 = vrsqrt.pop %v3424
  %v3429 = vmul.f32 %v3397, %v3425
  %v3430 = vmul.f32 %v3398, %v3426
  %v3431 = vmul.f32 %v3399, %v3427
  %v3432 = vmul.f32 %v3400, %v3428
  %v3433 = vlaneseq
  %v3434 = vshrl.u32 %v3433, 7
  %v3435 = vsub.s32 2, %v3434
  %v3436 = vrot.slane %v3083, %v3435
  %v3437 = vmul.f32 %v3429, %v3436
  %v3438 = vmul.f32 %v3430, %v3436
  %v3439 = vmul.f32 %v3431, %v3436
  %v3440 = vmul.f32 %v3432, %v3436
  %v3441 = vlaneseq
  %v3442 = vshrl.u32 %v3441, 7
  %v3443 = vsub.s32 3, %v3442
  %v3444 = vrot.slane %v3083, %v3443
  %v3445 = vadd.f32 %v3437, %v3444
  %v3446 = vadd.f32 %v3438, %v3444
  %v3447 = vadd.f32 %v3439, %v3444
  %v3448 = vadd.f32 %v3440, %v3444
  %v3449 = vadd.f32 %v3445, %v3446
  %v3450 = vadd.f32 %v3449, %v3447
  %v3451 = vadd.f32 %v3450, %v3448
  %v3452 = vmul.f32 %v3451, 0.25
  %v3453 = vld [vmem:[%s12] sm:$0xff]
  %v3454 = vld [vmem:[%s12 + $0x8] sm:$0xff]
  %v3455 = vld [vmem:[%s12 + $0x10] sm:$0xff]
  %v3456 = vld [vmem:[%s12 + $0x18] sm:$0xff]
  %v3457 = vld [vmem:[%s13] sm:$0x1]
  %v3459 = vlaneseq
  %v3460 = vshrl.u32 %v3459, 7
  %v3461 = vsub.s32 0, %v3460
  %v3462 = vrot.slane %v3457, %v3461
  %v3465 = vsel %vm62, %v3452, 0
  %3467 = vmatprep.subr.mxu0 0.0
  %3468 = vmatpush1.msra.mxu0 0.0
  %3469 = vmatprep.subr.mxu0 0.0
  %3470 = vmatpush1.msra.mxu0 0.0
  %3471 = vmatprep.subr.mxu0 0.0
  %3472 = vmatpush1.msra.mxu0 0.0
  %3473 = vmatprep.subr.mxu0 0.0
  %3474 = vmatpush1.msra.mxu0 0.0
  %3475 = vmatprep.subr.mxu0 0.0
  %3476 = vmatpush1.msra.mxu0 0.0
  %3477 = vmatprep.subr.mxu0 0.0
  %3478 = vmatpush1.msra.mxu0 0.0
  %3479 = vmatprep.subr.mxu0 0.0
  %3480 = vmatpush1.msra.mxu0 0.0
  %3481 = vmatprep.subr.mxu0 0.0
  %3482 = vmatpush1.msra.mxu0 0.0
  %3483 = vmatprep.subr.mxu0 0.0
  %3484 = vmatpush1.msra.mxu0 0.0
  %3485 = vmatprep.subr.mxu0 0.0
  %3486 = vmatpush1.msra.mxu0 0.0
  %3487 = vmatprep.subr.mxu0 0.0
  %3488 = vmatpush1.msra.mxu0 0.0
  %3489 = vmatprep.subr.mxu0 0.0
  %3490 = vmatpush1.msra.mxu0 0.0
  %3491 = vmatprep.subr.mxu0 0.0
  %3492 = vmatpush1.msra.mxu0 %v3456
  %3493 = vmatprep.subr.mxu0 0.0
  %3494 = vmatpush1.msra.mxu0 %v3455
  %3495 = vmatprep.subr.mxu0 0.0
  %3496 = vmatpush1.msra.mxu0 %v3454
  %3497 = vmatprep.subr.mxu0 0.0
  %3498 = vmatpush1.msra.mxu0 %v3453
  %3499 = vmatprep.subr.mxu0 0.0
  %3500 = vmatpush2.msra.mxu0 0.0
  %3501 = vmatprep.subr.mxu0 0.0
  %3502 = vmatpush2.msra.mxu0 0.0
  %3503 = vmatprep.subr.mxu0 0.0
  %3504 = vmatpush2.msra.mxu0 0.0
  %3505 = vmatprep.subr.mxu0 0.0
  %3506 = vmatpush2.msra.mxu0 0.0
  %3507 = vmatprep.subr.mxu0 0.0
  %3508 = vmatpush2.msra.mxu0 0.0
  %3509 = vmatprep.subr.mxu0 0.0
  %3510 = vmatpush2.msra.mxu0 0.0
  %3511 = vmatprep.subr.mxu0 0.0
  %3512 = vmatpush2.msra.mxu0 0.0
  %3513 = vmatprep.subr.mxu0 0.0
  %3514 = vmatpush2.msra.mxu0 0.0
  %3515 = vmatprep.subr.mxu0 0.0
  %3516 = vmatpush2.msra.mxu0 0.0
  %3517 = vmatprep.subr.mxu0 0.0
  %3518 = vmatpush2.msra.mxu0 0.0
  %3519 = vmatprep.subr.mxu0 0.0
  %3520 = vmatpush2.msra.mxu0 0.0
  %3521 = vmatprep.subr.mxu0 0.0
  %3522 = vmatpush2.msra.mxu0 0.0
  %3523 = vmatprep.subr.mxu0 0.0
  %3524 = vmatpush2.msra.mxu0 0.0
  %3525 = vmatprep.subr.mxu0 0.0
  %3526 = vmatpush2.msra.mxu0 0.0
  %3527 = vmatprep.subr.mxu0 0.0
  %3528 = vmatpush2.msra.mxu0 0.0
  %3529 = vmatprep.subr.mxu0 0.0
  %3530 = vmatpush2.msra.mxu0 0.0
  %3531 = vmatprep.mubr.f32.mxu0 0.0
  %3532 = vmatmul.mubr.f32.gmra.mxu0 %v3465
  %v3533 = vpop.f32.mrf.mxu0
  %v3534 = vadd.f32 %v3462, %v3533
  %v3535 = vpop.f32.mrf.mxu0
  %3536 = vdwg.mxu0
  %vm3537 = vcmask 15360
  %3538 = vst.msk [vmem:[%s14] sm:$0xff] %vm3537, %v3534
  // Predicated region
  $region58: #{tpu_custom_call.1} parent=0 // pred_check
    _
  $region59: #{tpu_custom_call.1} parent=0 // pred_check_branch
    %3540 = sbr.rel (0) target = $region61
  $region60: #{tpu_custom_call.1} parent=0 // pred_region
    _
  $region61: #{tpu_custom_call.1} parent=0 // pred_fallthru
    _
  // Predicated region
  $region62: #{tpu_custom_call.1} parent=0 // pred_check
    _
  $region63: #{tpu_custom_call.1} parent=0 // pred_check_branch
    %3542 = sbr.rel (0) target = $region65
  $region64: #{tpu_custom_call.1} parent=0 // pred_region
    _
  $region65: #{tpu_custom_call.1} parent=0 // pred_fallthru
    _

</llo_original>
